<compile_context>
chip_gen: v6e
topology: v6e:2x2x1
jax: 0.10.0
libtpu: 0.0.40
codegen_flags: <defaults>
</compile_context>

<pallas_src>
import functools

import jax
import jax.numpy as jnp
from jax.experimental import pallas as pl
from jax.experimental.pallas import tpu as pltpu


def _round_up(x, m):
    return (x + m - 1) // m * m


# ------------------------- fused window-attention kernel ---------------------


def _fused_window_attention_kernel(scale_ref, x_ref, wqkv_ref, wproj_ref,
                                   bproj_ref, o_ref, *, num_heads, head_dim,
                                   seq_len):
    G, Npad, Cp = x_ref.shape
    scale = scale_ref[0]

    # qkv projection: (G*Npad, Cp) @ (Cp, 3*Cp) on the MXU, f32 accumulation.
    x2 = x_ref[...].reshape(G * Npad, Cp)                      # bf16
    qkv = jnp.dot(x2, wqkv_ref[...], preferred_element_type=jnp.float32)
    qkv = qkv.reshape(G, Npad, 3 * Cp)                         # f32

    masked = Npad != seq_len
    if masked:
        key_mask = (jax.lax.broadcasted_iota(jnp.int32, (1, 1, Npad), 2)
                    < seq_len)

    acc = None
    for h in range(num_heads):
        lo = h * head_dim
        hi = lo + head_dim
        # scale folded into q (tq*hd mults, not tq*tk).
        q = (qkv[:, :, lo:hi] * scale).astype(jnp.bfloat16)            # (G,Np,hd)
        k = qkv[:, :, Cp + lo:Cp + hi].astype(jnp.bfloat16)
        v = qkv[:, :, 2 * Cp + lo:2 * Cp + hi].astype(jnp.bfloat16)

        s = jnp.einsum("gqd,gkd->gqk", q, k,
                       preferred_element_type=jnp.float32)             # (G,Np,Np)
        if masked:
            s = jnp.where(key_mask, s, jnp.float32(-1e30))
        m = s.max(axis=-1, keepdims=True)
        p = jnp.exp(s - m)
        l = p.sum(axis=-1, keepdims=True)
        p = (p * pl.reciprocal(l, approx=True)).astype(jnp.bfloat16)
        o_h = jnp.einsum("gqk,gkd->gqd", p, v,
                         preferred_element_type=jnp.float32)           # (G,Np,hd)

        # Output projection folded into the head loop: this head's hd rows of
        # w_proj.  Avoids concatenating sub-128-lane head pieces entirely.
        contrib = jnp.dot(
            o_h.reshape(G * Npad, head_dim).astype(jnp.bfloat16),
            wproj_ref[lo:hi, :],
            preferred_element_type=jnp.float32)                        # (G*Np,Cp)
        acc = contrib if acc is None else acc + contrib

    out = acc + bproj_ref[...]                         # (G*Npad,Cp) + (1,Cp)
    o_ref[...] = out.reshape(G, Npad, Cp).astype(o_ref.dtype)


# --------------------------- weight packing (once) ----------------------------


def prepare_weights(w_qkv, w_proj, b_proj):
    """Pack/pad module weights once, OUTSIDE the per-call jit.

    w_qkv: (C, 3C) with [q | k | v] column segments (== qkv.weight.T).
    w_proj: (C, C) (== proj.weight.T).  b_proj: (C,).
    Returns lane-padded bf16 weights (Cp, 3Cp), (Cp, Cp) and f32 bias (1, Cp).
    """
    C = w_qkv.shape[0]
    Cp = _round_up(C, 128)
    w_qkv_p = jnp.zeros((Cp, 3 * Cp), jnp.float32)
    for seg in range(3):
        w_qkv_p = w_qkv_p.at[:C, seg * Cp:seg * Cp + C].set(
            w_qkv[:, seg * C:(seg + 1) * C])
    w_proj_p = jnp.zeros((Cp, Cp), jnp.float32).at[:C, :C].set(w_proj)
    b_proj_p = jnp.zeros((1, Cp), jnp.float32).at[0, :C].set(b_proj)
    return (w_qkv_p.astype(jnp.bfloat16), w_proj_p.astype(jnp.bfloat16),
            b_proj_p)


# ------------------------------ module forward --------------------------------


@functools.partial(jax.jit, static_argnames=("num_heads",))
def window_attention(x, scale, w_qkv_p, w_proj_p, b_proj_p, num_heads):
    """WindowAttention.forward (eval).  x:(B,N,C) f32, scale:(1,) f32 traced."""
    B, N, C = x.shape
    Cp = w_qkv_p.shape[0]
    head_dim = C // num_heads

    Npad = _round_up(N, 16)                     # bf16 sublane-tile aligned
    # Windows per grid step: enough rows for a decent MXU tile, but keep the
    # grid >= 2 steps whenever B >= 2 so both v7x TensorCores have work.
    G = max(1, min(B, 256 // Npad))
    if B >= 2:
        G = min(G, (B + 1) // 2)
    Bp = pl.cdiv(B, G) * G

    xb = x.astype(jnp.bfloat16)                 # bf16 input: half the HBM read
    if (Bp, Npad, Cp) != (B, N, C):
        xb = jnp.pad(xb, ((0, Bp - B), (0, Npad - N), (0, Cp - C)))
    scale = jnp.asarray(scale, jnp.float32).reshape(1)

    kernel = functools.partial(_fused_window_attention_kernel,
                               num_heads=num_heads, head_dim=head_dim,
                               seq_len=N)
    out = pl.pallas_call(
        kernel,
        out_shape=jax.ShapeDtypeStruct((Bp, Npad, Cp), jnp.float32),
        grid_spec=pltpu.PrefetchScalarGridSpec(
            num_scalar_prefetch=0,
            grid=(Bp // G,),
            in_specs=[
                pl.BlockSpec(memory_space=pltpu.MemorySpace.SMEM),   # scale
                pl.BlockSpec((G, Npad, Cp), lambda i: (i, 0, 0)),    # x tiles
                pl.BlockSpec((Cp, 3 * Cp), lambda i: (0, 0)),        # w_qkv (resident)
                pl.BlockSpec((Cp, Cp), lambda i: (0, 0)),            # w_proj (resident)
                pl.BlockSpec((1, Cp), lambda i: (0, 0)),             # b_proj (resident)
            ],
            out_specs=pl.BlockSpec((G, Npad, Cp), lambda i: (i, 0, 0))),
        compiler_params=pltpu.CompilerParams(
            dimension_semantics=("parallel",)),
    )(scale, xb, w_qkv_p, w_proj_p, b_proj_p)

    # TODO(synk): attn_drop / proj_drop run in inference mode (identity).
    if (Bp, Npad, Cp) != (B, N, C):
        out = out[:B, :N, :C]
    return out


# ------------------------------ pure-JAX reference ----------------------------


def window_attention_ref(x, w_qkv, w_proj, b_proj, num_heads, scale):
    B, N, C = x.shape
    hd = C // num_heads
    qkv = (x.reshape(B * N, C) @ w_qkv).reshape(B, N, 3, num_heads, hd)
    qkv = jnp.transpose(qkv, (2, 0, 3, 1, 4))
    q, k, v = qkv[0], qkv[1], qkv[2]
    attn = jnp.einsum("bhqd,bhkd->bhqk", q, k) * scale
    attn = jax.nn.softmax(attn, axis=-1)
    out = jnp.einsum("bhqk,bhkd->bhqd", attn, v)
    out = jnp.transpose(out, (0, 2, 1, 3)).reshape(B, N, C)
    return out @ w_proj + b_proj


# ----------------------------------- main -------------------------------------


if __name__ == "__main__":
    key = jax.random.PRNGKey(0)

    def run(dim, num_heads, window_size, num_windows, kidx):
        k1, k2, k3, k4 = jax.random.split(jax.random.fold_in(key, kidx), 4)
        N = window_size * window_size
        x = jax.random.normal(k1, (num_windows, N, dim), jnp.float32)
        w_qkv = jax.random.normal(k2, (dim, 3 * dim), jnp.float32) * dim ** -0.5
        w_proj = jax.random.normal(k3, (dim, dim), jnp.float32) * dim ** -0.5
        b_proj = jax.random.normal(k4, (dim,), jnp.float32) * 0.02
        scale = jnp.full((1,), (dim // num_heads) ** -0.5, jnp.float32)

        w_qkv_p, w_proj_p, b_proj_p = prepare_weights(w_qkv, w_proj, b_proj)
        out = window_attention(x, scale, w_qkv_p, w_proj_p, b_proj_p,
                               num_heads=num_heads)
        out = jax.block_until_ready(out)
        assert out.shape == (num_windows, N, dim), out.shape
        assert bool(jnp.all(jnp.isfinite(out)))

        ref = window_attention_ref(x, w_qkv, w_proj, b_proj, num_heads,
                                   float(scale[0]))
        # bf16 MXU operands + approx-EUP reciprocal: inference-grade accuracy
        # vs the f32 PyTorch reference (~1e-2 max abs error at these scales).
        err = float(jnp.max(jnp.abs(out - ref)))
        assert err < 0.25, f"max abs error {err}"

    # aligned case: dim multiple of 128, window tokens fill full sublane tiles
    run(dim=128, num_heads=4, window_size=8, num_windows=4, kidx=0)
    # ragged case: dim < 128 (lane padding) and N = 49 (in-kernel key mask)
    run(dim=96, num_heads=3, window_size=7, num_windows=2, kidx=1)
    print("KERNEL_OK")
</pallas_src>

<mosaic_0001>
module attributes {stable_mosaic.version = 11 : i64} {
  func.func @_fused_window_attention_kernel(%arg0: i32, %arg1: memref<1xf32, #tpu.memory_space<smem>>, %arg2: memref<2x64x128xbf16, #tpu.memory_space<vmem>>, %arg3: memref<128x384xbf16, #tpu.memory_space<vmem>>, %arg4: memref<128x128xbf16, #tpu.memory_space<vmem>>, %arg5: memref<1x128xf32, #tpu.memory_space<vmem>>, %arg6: memref<2x64x128xf32, #tpu.memory_space<vmem>>) attributes {dimension_semantics = [#tpu.dimension_semantics<parallel>], iteration_bounds = array<i64: 2>, scalar_prefetch = 0 : i64, scratch_operands = 0 : i64, tpu.core_type = #tpu.core_type<tc>, window_params = [{transform_indices = @transform_0, window_bounds = array<i64: 1>}, {transform_indices = @transform_1, window_bounds = array<i64: 2, 64, 128>}, {pipeline_mode = #tpu.pipeline_mode<synchronous>, transform_indices = @transform_2, window_bounds = array<i64: 128, 384>}, {pipeline_mode = #tpu.pipeline_mode<synchronous>, transform_indices = @transform_3, window_bounds = array<i64: 128, 128>}, {pipeline_mode = #tpu.pipeline_mode<synchronous>, transform_indices = @transform_4, window_bounds = array<i64: 1, 128>}, {transform_indices = @transform_5, window_bounds = array<i64: 2, 64, 128>}]} {
    %c0 = arith.constant 0 : index
    %0 = memref.load %arg1[%c0] : memref<1xf32, #tpu.memory_space<smem>>
    %c0_0 = arith.constant 0 : index
    %c0_1 = arith.constant 0 : index
    %c0_2 = arith.constant 0 : index
    %1 = vector.load %arg2[%c0_0, %c0_1, %c0_2] : memref<2x64x128xbf16, #tpu.memory_space<vmem>>, vector<2x64x128xbf16>
    %2 = vector.shape_cast %1 : vector<2x64x128xbf16> to vector<128x128xbf16>
    %c0_3 = arith.constant 0 : index
    %c0_4 = arith.constant 0 : index
    %3 = vector.load %arg3[%c0_3, %c0_4] : memref<128x384xbf16, #tpu.memory_space<vmem>>, vector<128x384xbf16>
    %cst = arith.constant dense<0.000000e+00> : vector<128x384xf32>
    %4 = tpu.matmul %2, %3, %cst {dimension_numbers = #tpu.dot_dimension_numbers<[1], [0], [0], [1], [0, 0, 1, 1], [], []>} : vector<128x128xbf16>, vector<128x384xbf16>, vector<128x384xf32> -> vector<128x384xf32>
    %5 = vector.shape_cast %4 : vector<128x384xf32> to vector<2x64x384xf32>
    %6 = vector.extract_strided_slice %5 {offsets = [0, 0, 0], sizes = [2, 64, 32], strides = [1, 1, 1]} : vector<2x64x384xf32> to vector<2x64x32xf32>
    %7 = vector.broadcast %0 : f32 to vector<2x64x32xf32>
    %8 = arith.mulf %6, %7 : vector<2x64x32xf32>
    %9 = arith.truncf %8 : vector<2x64x32xf32> to vector<2x64x32xbf16>
    %10 = vector.extract_strided_slice %5 {offsets = [0, 0, 128], sizes = [2, 64, 32], strides = [1, 1, 1]} : vector<2x64x384xf32> to vector<2x64x32xf32>
    %11 = arith.truncf %10 : vector<2x64x32xf32> to vector<2x64x32xbf16>
    %12 = vector.extract_strided_slice %5 {offsets = [0, 0, 256], sizes = [2, 64, 32], strides = [1, 1, 1]} : vector<2x64x384xf32> to vector<2x64x32xf32>
    %13 = arith.truncf %12 : vector<2x64x32xf32> to vector<2x64x32xbf16>
    "tpu.trace_start"() <{level = 10 : i32, message = "gqd,gkd->gqk"}> : () -> ()
    %cst_5 = arith.constant dense<0.000000e+00> : vector<2x64x64xf32>
    %14 = tpu.matmul %9, %11, %cst_5 {dimension_numbers = #tpu.dot_dimension_numbers<[2], [2], [1], [1], [0, 0, 0, 1, 1, 1], [0], [0]>} : vector<2x64x32xbf16>, vector<2x64x32xbf16>, vector<2x64x64xf32> -> vector<2x64x64xf32>
    "tpu.trace_stop"() : () -> ()
    %cst_6 = arith.constant dense<0xFF800000> : vector<2x64xf32>
    %15 = vector.multi_reduction <maximumf>, %14, %cst_6 [2] : vector<2x64x64xf32> to vector<2x64xf32>
    %16 = vector.shape_cast %15 : vector<2x64xf32> to vector<2x64x1xf32>
    %17 = vector.broadcast %16 : vector<2x64x1xf32> to vector<2x64x64xf32>
    %18 = arith.subf %14, %17 : vector<2x64x64xf32>
    %19 = math.exp %18 : vector<2x64x64xf32>
    %cst_7 = arith.constant dense<0.000000e+00> : vector<2x64xf32>
    %20 = vector.multi_reduction <add>, %19, %cst_7 [2] : vector<2x64x64xf32> to vector<2x64xf32>
    %21 = vector.shape_cast %20 : vector<2x64xf32> to vector<2x64x1xf32>
    %22 = tpu.reciprocal %21 {approx = true} : vector<2x64x1xf32> -> vector<2x64x1xf32>
    %23 = vector.broadcast %22 : vector<2x64x1xf32> to vector<2x64x64xf32>
    %24 = arith.mulf %19, %23 : vector<2x64x64xf32>
    %25 = arith.truncf %24 : vector<2x64x64xf32> to vector<2x64x64xbf16>
    "tpu.trace_start"() <{level = 10 : i32, message = "gqk,gkd->gqd"}> : () -> ()
    %cst_8 = arith.constant dense<0.000000e+00> : vector<2x64x32xf32>
    %26 = tpu.matmul %25, %13, %cst_8 {dimension_numbers = #tpu.dot_dimension_numbers<[2], [1], [1], [2], [0, 0, 0, 1, 1, 2], [0], [0]>} : vector<2x64x64xbf16>, vector<2x64x32xbf16>, vector<2x64x32xf32> -> vector<2x64x32xf32>
    "tpu.trace_stop"() : () -> ()
    %27 = vector.shape_cast %26 : vector<2x64x32xf32> to vector<128x32xf32>
    %28 = arith.truncf %27 : vector<128x32xf32> to vector<128x32xbf16>
    %c0_9 = arith.constant 0 : index
    %c0_10 = arith.constant 0 : index
    %29 = vector.load %arg4[%c0_9, %c0_10] : memref<128x128xbf16, #tpu.memory_space<vmem>>, vector<32x128xbf16>
    %cst_11 = arith.constant dense<0.000000e+00> : vector<128x128xf32>
    %30 = tpu.matmul %28, %29, %cst_11 {dimension_numbers = #tpu.dot_dimension_numbers<[1], [0], [0], [1], [0, 0, 1, 1], [], []>} : vector<128x32xbf16>, vector<32x128xbf16>, vector<128x128xf32> -> vector<128x128xf32>
    %31 = vector.extract_strided_slice %5 {offsets = [0, 0, 32], sizes = [2, 64, 32], strides = [1, 1, 1]} : vector<2x64x384xf32> to vector<2x64x32xf32>
    %32 = vector.broadcast %0 : f32 to vector<2x64x32xf32>
    %33 = arith.mulf %31, %32 : vector<2x64x32xf32>
    %34 = arith.truncf %33 : vector<2x64x32xf32> to vector<2x64x32xbf16>
    %35 = vector.extract_strided_slice %5 {offsets = [0, 0, 160], sizes = [2, 64, 32], strides = [1, 1, 1]} : vector<2x64x384xf32> to vector<2x64x32xf32>
    %36 = arith.truncf %35 : vector<2x64x32xf32> to vector<2x64x32xbf16>
    %37 = vector.extract_strided_slice %5 {offsets = [0, 0, 288], sizes = [2, 64, 32], strides = [1, 1, 1]} : vector<2x64x384xf32> to vector<2x64x32xf32>
    %38 = arith.truncf %37 : vector<2x64x32xf32> to vector<2x64x32xbf16>
    "tpu.trace_start"() <{level = 10 : i32, message = "gqd,gkd->gqk"}> : () -> ()
    %cst_12 = arith.constant dense<0.000000e+00> : vector<2x64x64xf32>
    %39 = tpu.matmul %34, %36, %cst_12 {dimension_numbers = #tpu.dot_dimension_numbers<[2], [2], [1], [1], [0, 0, 0, 1, 1, 1], [0], [0]>} : vector<2x64x32xbf16>, vector<2x64x32xbf16>, vector<2x64x64xf32> -> vector<2x64x64xf32>
    "tpu.trace_stop"() : () -> ()
    %cst_13 = arith.constant dense<0xFF800000> : vector<2x64xf32>
    %40 = vector.multi_reduction <maximumf>, %39, %cst_13 [2] : vector<2x64x64xf32> to vector<2x64xf32>
    %41 = vector.shape_cast %40 : vector<2x64xf32> to vector<2x64x1xf32>
    %42 = vector.broadcast %41 : vector<2x64x1xf32> to vector<2x64x64xf32>
    %43 = arith.subf %39, %42 : vector<2x64x64xf32>
    %44 = math.exp %43 : vector<2x64x64xf32>
    %cst_14 = arith.constant dense<0.000000e+00> : vector<2x64xf32>
    %45 = vector.multi_reduction <add>, %44, %cst_14 [2] : vector<2x64x64xf32> to vector<2x64xf32>
    %46 = vector.shape_cast %45 : vector<2x64xf32> to vector<2x64x1xf32>
    %47 = tpu.reciprocal %46 {approx = true} : vector<2x64x1xf32> -> vector<2x64x1xf32>
    %48 = vector.broadcast %47 : vector<2x64x1xf32> to vector<2x64x64xf32>
    %49 = arith.mulf %44, %48 : vector<2x64x64xf32>
    %50 = arith.truncf %49 : vector<2x64x64xf32> to vector<2x64x64xbf16>
    "tpu.trace_start"() <{level = 10 : i32, message = "gqk,gkd->gqd"}> : () -> ()
    %cst_15 = arith.constant dense<0.000000e+00> : vector<2x64x32xf32>
    %51 = tpu.matmul %50, %38, %cst_15 {dimension_numbers = #tpu.dot_dimension_numbers<[2], [1], [1], [2], [0, 0, 0, 1, 1, 2], [0], [0]>} : vector<2x64x64xbf16>, vector<2x64x32xbf16>, vector<2x64x32xf32> -> vector<2x64x32xf32>
    "tpu.trace_stop"() : () -> ()
    %52 = vector.shape_cast %51 : vector<2x64x32xf32> to vector<128x32xf32>
    %53 = arith.truncf %52 : vector<128x32xf32> to vector<128x32xbf16>
    %c32 = arith.constant 32 : index
    %c0_16 = arith.constant 0 : index
    %54 = vector.load %arg4[%c32, %c0_16] : memref<128x128xbf16, #tpu.memory_space<vmem>>, vector<32x128xbf16>
    %cst_17 = arith.constant dense<0.000000e+00> : vector<128x128xf32>
    %55 = tpu.matmul %53, %54, %cst_17 {dimension_numbers = #tpu.dot_dimension_numbers<[1], [0], [0], [1], [0, 0, 1, 1], [], []>} : vector<128x32xbf16>, vector<32x128xbf16>, vector<128x128xf32> -> vector<128x128xf32>
    %56 = arith.addf %30, %55 : vector<128x128xf32>
    %57 = vector.extract_strided_slice %5 {offsets = [0, 0, 64], sizes = [2, 64, 32], strides = [1, 1, 1]} : vector<2x64x384xf32> to vector<2x64x32xf32>
    %58 = vector.broadcast %0 : f32 to vector<2x64x32xf32>
    %59 = arith.mulf %57, %58 : vector<2x64x32xf32>
    %60 = arith.truncf %59 : vector<2x64x32xf32> to vector<2x64x32xbf16>
    %61 = vector.extract_strided_slice %5 {offsets = [0, 0, 192], sizes = [2, 64, 32], strides = [1, 1, 1]} : vector<2x64x384xf32> to vector<2x64x32xf32>
    %62 = arith.truncf %61 : vector<2x64x32xf32> to vector<2x64x32xbf16>
    %63 = vector.extract_strided_slice %5 {offsets = [0, 0, 320], sizes = [2, 64, 32], strides = [1, 1, 1]} : vector<2x64x384xf32> to vector<2x64x32xf32>
    %64 = arith.truncf %63 : vector<2x64x32xf32> to vector<2x64x32xbf16>
    "tpu.trace_start"() <{level = 10 : i32, message = "gqd,gkd->gqk"}> : () -> ()
    %cst_18 = arith.constant dense<0.000000e+00> : vector<2x64x64xf32>
    %65 = tpu.matmul %60, %62, %cst_18 {dimension_numbers = #tpu.dot_dimension_numbers<[2], [2], [1], [1], [0, 0, 0, 1, 1, 1], [0], [0]>} : vector<2x64x32xbf16>, vector<2x64x32xbf16>, vector<2x64x64xf32> -> vector<2x64x64xf32>
    "tpu.trace_stop"() : () -> ()
    %cst_19 = arith.constant dense<0xFF800000> : vector<2x64xf32>
    %66 = vector.multi_reduction <maximumf>, %65, %cst_19 [2] : vector<2x64x64xf32> to vector<2x64xf32>
    %67 = vector.shape_cast %66 : vector<2x64xf32> to vector<2x64x1xf32>
    %68 = vector.broadcast %67 : vector<2x64x1xf32> to vector<2x64x64xf32>
    %69 = arith.subf %65, %68 : vector<2x64x64xf32>
    %70 = math.exp %69 : vector<2x64x64xf32>
    %cst_20 = arith.constant dense<0.000000e+00> : vector<2x64xf32>
    %71 = vector.multi_reduction <add>, %70, %cst_20 [2] : vector<2x64x64xf32> to vector<2x64xf32>
    %72 = vector.shape_cast %71 : vector<2x64xf32> to vector<2x64x1xf32>
    %73 = tpu.reciprocal %72 {approx = true} : vector<2x64x1xf32> -> vector<2x64x1xf32>
    %74 = vector.broadcast %73 : vector<2x64x1xf32> to vector<2x64x64xf32>
    %75 = arith.mulf %70, %74 : vector<2x64x64xf32>
    %76 = arith.truncf %75 : vector<2x64x64xf32> to vector<2x64x64xbf16>
    "tpu.trace_start"() <{level = 10 : i32, message = "gqk,gkd->gqd"}> : () -> ()
    %cst_21 = arith.constant dense<0.000000e+00> : vector<2x64x32xf32>
    %77 = tpu.matmul %76, %64, %cst_21 {dimension_numbers = #tpu.dot_dimension_numbers<[2], [1], [1], [2], [0, 0, 0, 1, 1, 2], [0], [0]>} : vector<2x64x64xbf16>, vector<2x64x32xbf16>, vector<2x64x32xf32> -> vector<2x64x32xf32>
    "tpu.trace_stop"() : () -> ()
    %78 = vector.shape_cast %77 : vector<2x64x32xf32> to vector<128x32xf32>
    %79 = arith.truncf %78 : vector<128x32xf32> to vector<128x32xbf16>
    %c64 = arith.constant 64 : index
    %c0_22 = arith.constant 0 : index
    %80 = vector.load %arg4[%c64, %c0_22] : memref<128x128xbf16, #tpu.memory_space<vmem>>, vector<32x128xbf16>
    %cst_23 = arith.constant dense<0.000000e+00> : vector<128x128xf32>
    %81 = tpu.matmul %79, %80, %cst_23 {dimension_numbers = #tpu.dot_dimension_numbers<[1], [0], [0], [1], [0, 0, 1, 1], [], []>} : vector<128x32xbf16>, vector<32x128xbf16>, vector<128x128xf32> -> vector<128x128xf32>
    %82 = arith.addf %56, %81 : vector<128x128xf32>
    %83 = vector.extract_strided_slice %5 {offsets = [0, 0, 96], sizes = [2, 64, 32], strides = [1, 1, 1]} : vector<2x64x384xf32> to vector<2x64x32xf32>
    %84 = vector.broadcast %0 : f32 to vector<2x64x32xf32>
    %85 = arith.mulf %83, %84 : vector<2x64x32xf32>
    %86 = arith.truncf %85 : vector<2x64x32xf32> to vector<2x64x32xbf16>
    %87 = vector.extract_strided_slice %5 {offsets = [0, 0, 224], sizes = [2, 64, 32], strides = [1, 1, 1]} : vector<2x64x384xf32> to vector<2x64x32xf32>
    %88 = arith.truncf %87 : vector<2x64x32xf32> to vector<2x64x32xbf16>
    %89 = vector.extract_strided_slice %5 {offsets = [0, 0, 352], sizes = [2, 64, 32], strides = [1, 1, 1]} : vector<2x64x384xf32> to vector<2x64x32xf32>
    %90 = arith.truncf %89 : vector<2x64x32xf32> to vector<2x64x32xbf16>
    "tpu.trace_start"() <{level = 10 : i32, message = "gqd,gkd->gqk"}> : () -> ()
    %cst_24 = arith.constant dense<0.000000e+00> : vector<2x64x64xf32>
    %91 = tpu.matmul %86, %88, %cst_24 {dimension_numbers = #tpu.dot_dimension_numbers<[2], [2], [1], [1], [0, 0, 0, 1, 1, 1], [0], [0]>} : vector<2x64x32xbf16>, vector<2x64x32xbf16>, vector<2x64x64xf32> -> vector<2x64x64xf32>
    "tpu.trace_stop"() : () -> ()
    %cst_25 = arith.constant dense<0xFF800000> : vector<2x64xf32>
    %92 = vector.multi_reduction <maximumf>, %91, %cst_25 [2] : vector<2x64x64xf32> to vector<2x64xf32>
    %93 = vector.shape_cast %92 : vector<2x64xf32> to vector<2x64x1xf32>
    %94 = vector.broadcast %93 : vector<2x64x1xf32> to vector<2x64x64xf32>
    %95 = arith.subf %91, %94 : vector<2x64x64xf32>
    %96 = math.exp %95 : vector<2x64x64xf32>
    %cst_26 = arith.constant dense<0.000000e+00> : vector<2x64xf32>
    %97 = vector.multi_reduction <add>, %96, %cst_26 [2] : vector<2x64x64xf32> to vector<2x64xf32>
    %98 = vector.shape_cast %97 : vector<2x64xf32> to vector<2x64x1xf32>
    %99 = tpu.reciprocal %98 {approx = true} : vector<2x64x1xf32> -> vector<2x64x1xf32>
    %100 = vector.broadcast %99 : vector<2x64x1xf32> to vector<2x64x64xf32>
    %101 = arith.mulf %96, %100 : vector<2x64x64xf32>
    %102 = arith.truncf %101 : vector<2x64x64xf32> to vector<2x64x64xbf16>
    "tpu.trace_start"() <{level = 10 : i32, message = "gqk,gkd->gqd"}> : () -> ()
    %cst_27 = arith.constant dense<0.000000e+00> : vector<2x64x32xf32>
    %103 = tpu.matmul %102, %90, %cst_27 {dimension_numbers = #tpu.dot_dimension_numbers<[2], [1], [1], [2], [0, 0, 0, 1, 1, 2], [0], [0]>} : vector<2x64x64xbf16>, vector<2x64x32xbf16>, vector<2x64x32xf32> -> vector<2x64x32xf32>
    "tpu.trace_stop"() : () -> ()
    %104 = vector.shape_cast %103 : vector<2x64x32xf32> to vector<128x32xf32>
    %105 = arith.truncf %104 : vector<128x32xf32> to vector<128x32xbf16>
    %c96 = arith.constant 96 : index
    %c0_28 = arith.constant 0 : index
    %106 = vector.load %arg4[%c96, %c0_28] : memref<128x128xbf16, #tpu.memory_space<vmem>>, vector<32x128xbf16>
    %cst_29 = arith.constant dense<0.000000e+00> : vector<128x128xf32>
    %107 = tpu.matmul %105, %106, %cst_29 {dimension_numbers = #tpu.dot_dimension_numbers<[1], [0], [0], [1], [0, 0, 1, 1], [], []>} : vector<128x32xbf16>, vector<32x128xbf16>, vector<128x128xf32> -> vector<128x128xf32>
    %108 = arith.addf %82, %107 : vector<128x128xf32>
    %c0_30 = arith.constant 0 : index
    %c0_31 = arith.constant 0 : index
    %109 = vector.load %arg5[%c0_30, %c0_31] : memref<1x128xf32, #tpu.memory_space<vmem>>, vector<1x128xf32>
    %110 = vector.broadcast %109 : vector<1x128xf32> to vector<128x128xf32>
    %111 = arith.addf %108, %110 : vector<128x128xf32>
    %112 = vector.shape_cast %111 : vector<128x128xf32> to vector<2x64x128xf32>
    %c0_32 = arith.constant 0 : index
    %c0_33 = arith.constant 0 : index
    %c0_34 = arith.constant 0 : index
    %113 = vector.load %arg6[%c0_32, %c0_33, %c0_34] : memref<2x64x128xf32, #tpu.memory_space<vmem>>, vector<2x64x128xf32>
    tpu.vector_store %arg6[%c0_32, %c0_33, %c0_34], %112 {strides = array<i32>} : memref<2x64x128xf32, #tpu.memory_space<vmem>>, vector<2x64x128xf32>,
    return
  }
  func.func @transform_0(%arg0: i32) -> i32 {
    %c0_i32 = arith.constant 0 : i32
    %c0_i32_0 = arith.constant 0 : i32
    return %c0_i32 : i32
  }
  func.func @transform_1(%arg0: i32) -> (i32, i32, i32) {
    %c0_i32 = arith.constant 0 : i32
    %c0_i32_0 = arith.constant 0 : i32
    %c0_i32_1 = arith.constant 0 : i32
    return %arg0, %c0_i32, %c0_i32_0 : i32, i32, i32
  }
  func.func @transform_2(%arg0: i32) -> (i32, i32) {
    %c0_i32 = arith.constant 0 : i32
    %c0_i32_0 = arith.constant 0 : i32
    %c0_i32_1 = arith.constant 0 : i32
    return %c0_i32, %c0_i32_0 : i32, i32
  }
  func.func @transform_3(%arg0: i32) -> (i32, i32) {
    %c0_i32 = arith.constant 0 : i32
    %c0_i32_0 = arith.constant 0 : i32
    %c0_i32_1 = arith.constant 0 : i32
    return %c0_i32, %c0_i32_0 : i32, i32
  }
  func.func @transform_4(%arg0: i32) -> (i32, i32) {
    %c0_i32 = arith.constant 0 : i32
    %c0_i32_0 = arith.constant 0 : i32
    %c0_i32_1 = arith.constant 0 : i32
    return %c0_i32, %c0_i32_0 : i32, i32
  }
  func.func @transform_5(%arg0: i32) -> (i32, i32, i32) {
    %c0_i32 = arith.constant 0 : i32
    %c0_i32_0 = arith.constant 0 : i32
    %c0_i32_1 = arith.constant 0 : i32
    return %arg0, %c0_i32, %c0_i32_0 : i32, i32, i32
  }
}

</mosaic_0001>

<llo_original>
// kernel: window_attention.1
$region0: #{window_attention.1}
  #allocation0 [shape = 'u32[]', space=smem, size = 0x4, offset = 0x4, fixed_abs, tag = 'smem constant byte address 0x4 - core index']
  #allocation1 [shape = 'u32[144,128]{1,0:T(1,128)}', space=vmem, size = 0x12000, scoped, tag = 'internal scratch']
  #allocation2 [shape = 'f32[1]{0:T(128)S(6)}', space=smem, size = 0x200, scoped, tag = 'scoped memory for window_attention.1']
  %s0 = inlined_call_operand.<no memory space> [shape: f32[1], index: 0, kind: input, shape index: {}]
  %s1 = inlined_call_operand.vmem [shape: bf16[4,64,128], index: 1, kind: input, shape index: {}]
  %s2 = inlined_call_operand.vmem [shape: bf16[128,384], index: 2, kind: input, shape index: {}]
  %s3 = inlined_call_operand.vmem [shape: bf16[128,128], index: 3, kind: input, shape index: {}]
  %s4 = inlined_call_operand.vmem [shape: f32[1,128], index: 4, kind: input, shape index: {}]
  %s5 = inlined_call_operand.hbm [shape: f32[4,64,128], index: 5, kind: output, shape index: {}]
  %s6 = sld [smem:[#allocation0]]
  $region53: #{window_attention.1} parent=0
    _
  %s8 = ssub.s32 1, %s6
  %s9 = scalar_select 0, %s8, %s6
  %10 = sst [smem:[#allocation2]] %s0
  $region1: #{window_attention.1} parent=0
    #allocation3 [shape = 'u8[131072]{0}', space=vmem, size = 0x20000, scoped, tag = 'output window, operand 0']
    #allocation4 [shape = 's32[2]{0}', space=sflag, size = 0x8, scoped, tag = 'scoped memory for window_attention.1']
    %11 = vsyncpa [#allocation4], 0
    %s12 = scalar_lea.sflag [#allocation4], 1
    %13 = vsyncpa %s12, 0
    loop: start=0, step=1, limit=4
    $region2: #{window_attention.1} parent=1 // loop_pre_header
      _
    $region3: #{window_attention.1} parent=1 // loop_header
      %s15 = sphi 0, %s19
      %p16 = scmp.ge.s32.totalorder %s15, 4
      %s23 = sphi 0, %s23
      %s25 = sphi 0, %s23
      %s26 = sphi 0, %s25
      %s40 = sphi 0, %s26
      %s46 = sphi 0, %s48
      %s49 = sphi 0, %s46
      %s50 = sphi 0, %s49
      %s66 = sphi 0, %s50
      %s70 = sphi 0, %s70
      %s72 = sphi 0, %s70
      %s73 = sphi 0, %s72
      %s87 = sphi 0, %s73
      %s91 = sphi 0, %s91
      %s93 = sphi 0, %s91
      %s94 = sphi 0, %s93
      %s108 = sphi 0, %s94
      %s112 = sphi 0, %s112
      %s114 = sphi 0, %s112
      %s115 = sphi 0, %s114
      %s129 = sphi 0, %s115
      %s135 = sphi 0, %s137
      %s138 = sphi 0, %s135
      %s139 = sphi 0, %s138
      %s155 = sphi 0, %s139
    $region4: #{window_attention.1} parent=1 // loop_header_branch
      %18 = sbr.rel (%p16) target = $region8
    $region5: #{window_attention.1} parent=1 // loop_body
      %s20 = ssub.s32 %s15, 1
      %s21 = ssub.s32 %s15, 2
      %s22 = sadd.s32 %s15, 1
      %s24 = sadd.s32 %s23, 1
      %p27 = scmp.eq.s32.totalorder %s15, 1
      %p28 = scmp.ne.s32.totalorder %s23, %s25
      %p29 = scmp.eq.s32.totalorder %s15, 0
      %p30 = por %p28, %p29
      %p31 = scmp.ne.s32.totalorder %s23, %s25
      %p32 = scmp.eq.s32.totalorder %s20, 1
      %p33 = por %p31, %p32
      %p34 = scmp.ne.s32.totalorder %s25, %s26
      %p35 = scmp.eq.s32.totalorder %s20, 0
      %p36 = por %p34, %p35
      %p37 = scmp.ne.s32.totalorder %s25, %s26
      %p38 = scmp.eq.s32.totalorder %s21, 1
      %p39 = por %p37, %p38
      %p41 = scmp.ne.s32.totalorder %s26, %s40
      %p42 = scmp.eq.s32.totalorder %s21, 0
      %p43 = por %p41, %p42
      %s44 = ssub.s32 %s15, %s22
      %p45 = scmp.eq.s32.totalorder %s44, 0
      %s47 = sadd.s32 %s46, 1
      %s48 = scalar_select %p45, %s46, %s47
      %p51 = pneg %p45
      %p52 = scmp.eq.s32.totalorder %s15, 1
      %p53 = por %p51, %p52
      %p54 = scmp.ne.s32.totalorder %s46, %s49
      %p55 = scmp.eq.s32.totalorder %s15, 0
      %p56 = por %p54, %p55
      %p57 = scmp.ne.s32.totalorder %s46, %s49
      %p58 = scmp.eq.s32.totalorder %s20, 1
      %p59 = por %p57, %p58
      %p60 = scmp.ne.s32.totalorder %s49, %s50
      %p61 = scmp.eq.s32.totalorder %s20, 0
      %p62 = por %p60, %p61
      %p63 = scmp.ne.s32.totalorder %s49, %s50
      %p64 = scmp.eq.s32.totalorder %s21, 1
      %p65 = por %p63, %p64
      %p67 = scmp.ne.s32.totalorder %s50, %s66
      %p68 = scmp.eq.s32.totalorder %s21, 0
      %p69 = por %p67, %p68
      %s71 = sadd.s32 %s70, 1
      %p74 = scmp.eq.s32.totalorder %s15, 1
      %p75 = scmp.ne.s32.totalorder %s70, %s72
      %p76 = scmp.eq.s32.totalorder %s15, 0
      %p77 = por %p75, %p76
      %p78 = scmp.ne.s32.totalorder %s70, %s72
      %p79 = scmp.eq.s32.totalorder %s20, 1
      %p80 = por %p78, %p79
      %p81 = scmp.ne.s32.totalorder %s72, %s73
      %p82 = scmp.eq.s32.totalorder %s20, 0
      %p83 = por %p81, %p82
      %p84 = scmp.ne.s32.totalorder %s72, %s73
      %p85 = scmp.eq.s32.totalorder %s21, 1
      %p86 = por %p84, %p85
      %p88 = scmp.ne.s32.totalorder %s73, %s87
      %p89 = scmp.eq.s32.totalorder %s21, 0
      %p90 = por %p88, %p89
      %s92 = sadd.s32 %s91, 1
      %p95 = scmp.eq.s32.totalorder %s15, 1
      %p96 = scmp.ne.s32.totalorder %s91, %s93
      %p97 = scmp.eq.s32.totalorder %s15, 0
      %p98 = por %p96, %p97
      %p99 = scmp.ne.s32.totalorder %s91, %s93
      %p100 = scmp.eq.s32.totalorder %s20, 1
      %p101 = por %p99, %p100
      %p102 = scmp.ne.s32.totalorder %s93, %s94
      %p103 = scmp.eq.s32.totalorder %s20, 0
      %p104 = por %p102, %p103
      %p105 = scmp.ne.s32.totalorder %s93, %s94
      %p106 = scmp.eq.s32.totalorder %s21, 1
      %p107 = por %p105, %p106
      %p109 = scmp.ne.s32.totalorder %s94, %s108
      %p110 = scmp.eq.s32.totalorder %s21, 0
      %p111 = por %p109, %p110
      %s113 = sadd.s32 %s112, 1
      %p116 = scmp.eq.s32.totalorder %s15, 1
      %p117 = scmp.ne.s32.totalorder %s112, %s114
      %p118 = scmp.eq.s32.totalorder %s15, 0
      %p119 = por %p117, %p118
      %p120 = scmp.ne.s32.totalorder %s112, %s114
      %p121 = scmp.eq.s32.totalorder %s20, 1
      %p122 = por %p120, %p121
      %p123 = scmp.ne.s32.totalorder %s114, %s115
      %p124 = scmp.eq.s32.totalorder %s20, 0
      %p125 = por %p123, %p124
      %p126 = scmp.ne.s32.totalorder %s114, %s115
      %p127 = scmp.eq.s32.totalorder %s21, 1
      %p128 = por %p126, %p127
      %p130 = scmp.ne.s32.totalorder %s115, %s129
      %p131 = scmp.eq.s32.totalorder %s21, 0
      %p132 = por %p130, %p131
      %s133 = ssub.s32 %s15, %s22
      %p134 = scmp.eq.s32.totalorder %s133, 0
      %s136 = sadd.s32 %s135, 1
      %s137 = scalar_select %p134, %s135, %s136
      %p140 = pneg %p134
      %p141 = scmp.eq.s32.totalorder %s15, 1
      %p142 = por %p140, %p141
      %p143 = scmp.ne.s32.totalorder %s135, %s138
      %p144 = scmp.eq.s32.totalorder %s15, 0
      %p145 = por %p143, %p144
      %p146 = scmp.ne.s32.totalorder %s135, %s138
      %p147 = scmp.eq.s32.totalorder %s20, 1
      %p148 = por %p146, %p147
      %p149 = scmp.ne.s32.totalorder %s138, %s139
      %p150 = scmp.eq.s32.totalorder %s20, 0
      %p151 = por %p149, %p150
      %p152 = scmp.ne.s32.totalorder %s138, %s139
      %p153 = scmp.eq.s32.totalorder %s21, 1
      %p154 = por %p152, %p153
      %p156 = scmp.ne.s32.totalorder %s139, %s155
      %p157 = scmp.eq.s32.totalorder %s21, 0
      %p158 = por %p156, %p157
      %p159 = scmp.le.s32.totalorder 1, %s15
      %p160 = scmp.lt.s32.totalorder %s15, 3
      %p161 = pnand %p159, %p160
      %p162 = pneg %p161
      // Predicated region
      $region9: #{window_attention.1} parent=5 // pred_check
        _
      $region10: #{window_attention.1} parent=5 // pred_check_branch
        %164 = sbr.rel (%p161) target = $region12
      $region11: #{window_attention.1} parent=5 // pred_region
        %s165 = ssub.s32 %s15, 1
        // Predicated region
        $region13: #{window_attention.1} parent=11 // pred_check
          %p166 = pneg %p36
        $region14: #{window_attention.1} parent=11 // pred_check_branch
          %168 = sbr.rel (%p166) target = $region16
        $region15: #{window_attention.1} parent=11 // pred_region
          _
        $region16: #{window_attention.1} parent=11 // pred_fallthru
          _
        // Predicated region
        $region17: #{window_attention.1} parent=11 // pred_check
          %p169 = pneg %p83
        $region18: #{window_attention.1} parent=11 // pred_check_branch
          %171 = sbr.rel (%p169) target = $region20
        $region19: #{window_attention.1} parent=11 // pred_region
          _
        $region20: #{window_attention.1} parent=11 // pred_fallthru
          _
        // Predicated region
        $region21: #{window_attention.1} parent=11 // pred_check
          %p172 = pneg %p104
        $region22: #{window_attention.1} parent=11 // pred_check_branch
          %174 = sbr.rel (%p172) target = $region24
        $region23: #{window_attention.1} parent=11 // pred_region
          _
        $region24: #{window_attention.1} parent=11 // pred_fallthru
          _
        // Predicated region
        $region25: #{window_attention.1} parent=11 // pred_check
          %p175 = pneg %p125
        $region26: #{window_attention.1} parent=11 // pred_check_branch
          %177 = sbr.rel (%p175) target = $region28
        $region27: #{window_attention.1} parent=11 // pred_region
          _
        $region28: #{window_attention.1} parent=11 // pred_fallthru
          _
      $region12: #{window_attention.1} parent=5 // pred_fallthru
        _
      %p178 = scmp.lt.s32.totalorder %s15, 2
      // Predicated region
      $region29: #{window_attention.1} parent=5 // pred_check
        %p179 = pneg %p178
      $region30: #{window_attention.1} parent=5 // pred_check_branch
        %181 = sbr.rel (%p179) target = $region32
      $region31: #{window_attention.1} parent=5 // pred_region
        // Predicated region
        $region33: #{window_attention.1} parent=31 // pred_check
          %p182 = pneg %p56
        $region34: #{window_attention.1} parent=31 // pred_check_branch
          %184 = sbr.rel (%p182) target = $region36
        $region35: #{window_attention.1} parent=31 // pred_region
          %s185 = smul.u32 2, %s15
          %p186 = scmp.lt.s32.totalorder %s185, 3
          %s187 = scalar_select %p186, %s185, 3
          %s188 = smul.addr %s187, 8
          %s189 = smul.addr %s188, 4
          %s190 = scalar_lea.vmem %s1, %s189
          %s191 = smul.u32 2, %s15
        $region36: #{window_attention.1} parent=31 // pred_fallthru
          _
      $region32: #{window_attention.1} parent=5 // pred_fallthru
        _
      %p192 = scmp.le.s32.totalorder 1, %s15
      %p193 = scmp.lt.s32.totalorder %s15, 3
      %p194 = pnand %p192, %p193
      %p195 = pneg %p194
      // Predicated region
      $region37: #{window_attention.1} parent=5 // pred_check
        _
      $region38: #{window_attention.1} parent=5 // pred_check_branch
        %197 = sbr.rel (%p194) target = $region40
      $region39: #{window_attention.1} parent=5 // pred_region
        %s198 = ssub.s32 %s15, 1
        %p199 = pneg %p36
        %p200 = pneg %p33
        %s201 = smul.u32 2, %s20
        %p202 = scmp.lt.s32.totalorder %s201, 3
        %s203 = scalar_select %p202, %s201, 3
        %s204 = smul.addr %s203, 8
        %s205 = smul.addr %s204, 4
        %s206 = scalar_lea.vmem %s1, %s205
        %p207 = pneg %p62
        %p208 = pneg %p59
        %p209 = pneg %p83
        %p210 = pneg %p80
        %p211 = pneg %p104
        %p212 = pneg %p101
        %p213 = pneg %p125
        %p214 = pneg %p122
        %p215 = pneg %p151
        %p216 = pneg %p148
        %s217 = sand.u32 %s138, 1
        %s218 = scalar_lea.sflag [#allocation4], %s217
        %s219 = sand.u32 %s138, 1
        %s220 = smul.addr %s219, 128
        %s221 = scalar_lea.vmem [#allocation3], %s220
        %s222 = smul.u32 2, %s20
        %p223 = scmp.lt.s32.totalorder %s222, 3
        %s224 = scalar_select %p223, %s222, 3
        %s225 = smul.addr %s224, 8
        %s226 = smul.addr %s225, 4
        %s227 = scalar_lea.vmem %s1, %s226
        %s228 = smul.u32 2, %s20
        %s229 = smul.u32 2, %s20
        %s231 = sld [smem:[#allocation2]]
        %v232 = vld [vmem:[%s227] sm:$0xf]
        %v233 = vld [vmem:[%s227 + $0x4] sm:$0xf]
        %v234 = vld [vmem:[%s227 + $0x8] sm:$0xf]
        %v235 = vld [vmem:[%s227 + $0xc] sm:$0xf]
        %v236 = vld [vmem:[%s227 + $0x10] sm:$0xf]
        %v237 = vld [vmem:[%s227 + $0x14] sm:$0xf]
        %v238 = vld [vmem:[%s227 + $0x18] sm:$0xf]
        %v239 = vld [vmem:[%s227 + $0x1c] sm:$0xf]
        %v240 = vld [vmem:[%s227 + $0x20] sm:$0xf]
        %v241 = vld [vmem:[%s227 + $0x24] sm:$0xf]
        %v242 = vld [vmem:[%s227 + $0x28] sm:$0xf]
        %v243 = vld [vmem:[%s227 + $0x2c] sm:$0xf]
        %v244 = vld [vmem:[%s227 + $0x30] sm:$0xf]
        %v245 = vld [vmem:[%s227 + $0x34] sm:$0xf]
        %v246 = vld [vmem:[%s227 + $0x38] sm:$0xf]
        %v247 = vld [vmem:[%s227 + $0x3c] sm:$0xf]
        %v248 = vld [vmem:[%s2] sm:$0xff]
        %v249 = vld [vmem:[%s2 + $0x8] sm:$0xf]
        %v250 = vld [vmem:[%s2 + $0xc] sm:$0xff]
        %v251 = vld [vmem:[%s2 + $0x14] sm:$0xf]
        %v252 = vld [vmem:[%s2 + $0x18] sm:$0xff]
        %v253 = vld [vmem:[%s2 + $0x20] sm:$0xf]
        %v254 = vld [vmem:[%s2 + $0x24] sm:$0xff]
        %v255 = vld [vmem:[%s2 + $0x2c] sm:$0xf]
        %v256 = vld [vmem:[%s2 + $0x30] sm:$0xff]
        %v257 = vld [vmem:[%s2 + $0x38] sm:$0xf]
        %v258 = vld [vmem:[%s2 + $0x3c] sm:$0xff]
        %v259 = vld [vmem:[%s2 + $0x44] sm:$0xf]
        %v260 = vld [vmem:[%s2 + $0x48] sm:$0xff]
        %v261 = vld [vmem:[%s2 + $0x50] sm:$0xf]
        %v262 = vld [vmem:[%s2 + $0x54] sm:$0xff]
        %v263 = vld [vmem:[%s2 + $0x5c] sm:$0xf]
        %v264 = vld [vmem:[%s2 + $0x60] sm:$0xff]
        %v265 = vld [vmem:[%s2 + $0x68] sm:$0xf]
        %v266 = vld [vmem:[%s2 + $0x6c] sm:$0xff]
        %v267 = vld [vmem:[%s2 + $0x74] sm:$0xf]
        %v268 = vld [vmem:[%s2 + $0x78] sm:$0xff]
        %v269 = vld [vmem:[%s2 + $0x80] sm:$0xf]
        %v270 = vld [vmem:[%s2 + $0x84] sm:$0xff]
        %v271 = vld [vmem:[%s2 + $0x8c] sm:$0xf]
        %v272 = vld [vmem:[%s2 + $0x90] sm:$0xff]
        %v273 = vld [vmem:[%s2 + $0x98] sm:$0xf]
        %v274 = vld [vmem:[%s2 + $0x9c] sm:$0xff]
        %v275 = vld [vmem:[%s2 + $0xa4] sm:$0xf]
        %v276 = vld [vmem:[%s2 + $0xa8] sm:$0xff]
        %v277 = vld [vmem:[%s2 + $0xb0] sm:$0xf]
        %v278 = vld [vmem:[%s2 + $0xb4] sm:$0xff]
        %v279 = vld [vmem:[%s2 + $0xbc] sm:$0xf]
        %v296 = vunpack.c.l.b16 %v232
        %v297 = vunpack.c.l.b16 %v233
        %v298 = vunpack.c.l.b16 %v234
        %v299 = vunpack.c.l.b16 %v235
        %v300 = vunpack.c.l.b16 %v236
        %v301 = vunpack.c.l.b16 %v237
        %v302 = vunpack.c.l.b16 %v238
        %v303 = vunpack.c.l.b16 %v239
        %v304 = vunpack.c.l.b16 %v240
        %v305 = vunpack.c.l.b16 %v241
        %v306 = vunpack.c.l.b16 %v242
        %v307 = vunpack.c.l.b16 %v243
        %v308 = vunpack.c.l.b16 %v244
        %v309 = vunpack.c.l.b16 %v245
        %v310 = vunpack.c.l.b16 %v246
        %v311 = vunpack.c.l.b16 %v247
        %v312 = vpack.c.b16 %v297, %v296
        %v313 = vpack.c.b16 %v299, %v298
        %v314 = vpack.c.b16 %v301, %v300
        %v315 = vpack.c.b16 %v303, %v302
        %v316 = vpack.c.b16 %v305, %v304
        %v317 = vpack.c.b16 %v307, %v306
        %v318 = vpack.c.b16 %v309, %v308
        %v319 = vpack.c.b16 %v311, %v310
        %v360 = vunpack.c.l.b16 %v248
        %v361 = vunpack.c.h.b16 %v248
        %v362 = vunpack.c.l.b16 %v249
        %v363 = vunpack.c.l.b16 %v250
        %v364 = vunpack.c.h.b16 %v250
        %v365 = vunpack.c.l.b16 %v251
        %v366 = vunpack.c.l.b16 %v252
        %v367 = vunpack.c.h.b16 %v252
        %v368 = vunpack.c.l.b16 %v253
        %v369 = vunpack.c.l.b16 %v254
        %v370 = vunpack.c.h.b16 %v254
        %v371 = vunpack.c.l.b16 %v255
        %v372 = vunpack.c.l.b16 %v256
        %v373 = vunpack.c.h.b16 %v256
        %v374 = vunpack.c.l.b16 %v257
        %v375 = vunpack.c.l.b16 %v258
        %v376 = vunpack.c.h.b16 %v258
        %v377 = vunpack.c.l.b16 %v259
        %v378 = vunpack.c.l.b16 %v260
        %v379 = vunpack.c.h.b16 %v260
        %v380 = vunpack.c.l.b16 %v261
        %v381 = vunpack.c.l.b16 %v262
        %v382 = vunpack.c.h.b16 %v262
        %v383 = vunpack.c.l.b16 %v263
        %v384 = vunpack.c.l.b16 %v264
        %v385 = vunpack.c.h.b16 %v264
        %v386 = vunpack.c.l.b16 %v265
        %v387 = vunpack.c.l.b16 %v266
        %v388 = vunpack.c.h.b16 %v266
        %v389 = vunpack.c.l.b16 %v267
        %v390 = vunpack.c.l.b16 %v268
        %v391 = vunpack.c.h.b16 %v268
        %v392 = vunpack.c.l.b16 %v269
        %v393 = vunpack.c.l.b16 %v270
        %v394 = vunpack.c.h.b16 %v270
        %v395 = vunpack.c.l.b16 %v271
        %v396 = vunpack.c.l.b16 %v272
        %v397 = vunpack.c.h.b16 %v272
        %v398 = vunpack.c.l.b16 %v273
        %v399 = vunpack.c.l.b16 %v274
        %v400 = vunpack.c.h.b16 %v274
        %v401 = vunpack.c.l.b16 %v275
        %v402 = vunpack.c.l.b16 %v276
        %v403 = vunpack.c.h.b16 %v276
        %v404 = vunpack.c.l.b16 %v277
        %v405 = vunpack.c.l.b16 %v278
        %v406 = vunpack.c.h.b16 %v278
        %v407 = vunpack.c.l.b16 %v279
        %v408 = vpack.c.b16 %v363, %v360
        %v409 = vpack.c.b16 %v364, %v361
        %v410 = vpack.c.b16 %v365, %v362
        %v411 = vpack.c.b16 %v369, %v366
        %v412 = vpack.c.b16 %v370, %v367
        %v413 = vpack.c.b16 %v371, %v368
        %v414 = vpack.c.b16 %v375, %v372
        %v415 = vpack.c.b16 %v376, %v373
        %v416 = vpack.c.b16 %v377, %v374
        %v417 = vpack.c.b16 %v381, %v378
        %v418 = vpack.c.b16 %v382, %v379
        %v419 = vpack.c.b16 %v383, %v380
        %v420 = vpack.c.b16 %v387, %v384
        %v421 = vpack.c.b16 %v388, %v385
        %v422 = vpack.c.b16 %v389, %v386
        %v423 = vpack.c.b16 %v393, %v390
        %v424 = vpack.c.b16 %v394, %v391
        %v425 = vpack.c.b16 %v395, %v392
        %v426 = vpack.c.b16 %v399, %v396
        %v427 = vpack.c.b16 %v400, %v397
        %v428 = vpack.c.b16 %v401, %v398
        %v429 = vpack.c.b16 %v405, %v402
        %v430 = vpack.c.b16 %v406, %v403
        %v431 = vpack.c.b16 %v407, %v404
        %456 = vmatprep.subr.bf16.mxu0 %v430
        %457 = vmatpush1.bf16.msra.mxu0 %v429
        %458 = vmatprep.subr.bf16.mxu0 %v427
        %459 = vmatpush1.bf16.msra.mxu0 %v426
        %460 = vmatprep.subr.bf16.mxu0 %v424
        %461 = vmatpush1.bf16.msra.mxu0 %v423
        %462 = vmatprep.subr.bf16.mxu0 %v421
        %463 = vmatpush1.bf16.msra.mxu0 %v420
        %464 = vmatprep.subr.bf16.mxu0 %v418
        %465 = vmatpush1.bf16.msra.mxu0 %v417
        %466 = vmatprep.subr.bf16.mxu0 %v415
        %467 = vmatpush1.bf16.msra.mxu0 %v414
        %468 = vmatprep.subr.bf16.mxu0 %v412
        %469 = vmatpush1.bf16.msra.mxu0 %v411
        %470 = vmatprep.subr.bf16.mxu0 %v409
        %471 = vmatpush1.bf16.msra.mxu0 %v408
        %472 = vmatprep.subr.bf16.mxu0 0
        %473 = vmatpush2.bf16.msra.mxu0 0
        %474 = vmatprep.subr.bf16.mxu0 0
        %475 = vmatpush2.bf16.msra.mxu0 0
        %476 = vmatprep.subr.bf16.mxu0 0
        %477 = vmatpush2.bf16.msra.mxu0 0
        %478 = vmatprep.subr.bf16.mxu0 0
        %479 = vmatpush2.bf16.msra.mxu0 0
        %480 = vmatprep.subr.bf16.mxu0 0
        %481 = vmatpush2.bf16.msra.mxu0 0
        %482 = vmatprep.subr.bf16.mxu0 0
        %483 = vmatpush2.bf16.msra.mxu0 0
        %484 = vmatprep.subr.bf16.mxu0 0
        %485 = vmatpush2.bf16.msra.mxu0 0
        %486 = vmatprep.subr.bf16.mxu0 0
        %487 = vmatpush2.bf16.msra.mxu0 0
        %488 = vmatprep.mubr.bf16.mxu0 0
        %489 = vmatmul.mubr.bf16.gmra.mxu0 %v312
        %v490 = vpop.f32.mrf.mxu0
        %v491 = vadd.f32 0.0, %v490
        %v492 = vpop.f32.mrf.mxu0
        %v493 = vadd.f32 0.0, %v492
        %v494 = vpop.f32.mrf.mxu0
        %v495 = vadd.f32 0.0, %v494
        %v496 = vpop.f32.mrf.mxu0
        %v497 = vadd.f32 0.0, %v496
        %498 = vmatprep.mubr.bf16.mxu0 0
        %499 = vmatmul.mubr.bf16.gmra.mxu0 %v313
        %v500 = vpop.f32.mrf.mxu0
        %v501 = vadd.f32 0.0, %v500
        %v502 = vpop.f32.mrf.mxu0
        %v503 = vadd.f32 0.0, %v502
        %v504 = vpop.f32.mrf.mxu0
        %v505 = vadd.f32 0.0, %v504
        %v506 = vpop.f32.mrf.mxu0
        %v507 = vadd.f32 0.0, %v506
        %508 = vmatprep.mubr.bf16.mxu0 0
        %509 = vmatmul.mubr.bf16.gmra.mxu0 %v314
        %v510 = vpop.f32.mrf.mxu0
        %v511 = vadd.f32 0.0, %v510
        %v512 = vpop.f32.mrf.mxu0
        %v513 = vadd.f32 0.0, %v512
        %v514 = vpop.f32.mrf.mxu0
        %v515 = vadd.f32 0.0, %v514
        %v516 = vpop.f32.mrf.mxu0
        %v517 = vadd.f32 0.0, %v516
        %518 = vmatprep.mubr.bf16.mxu0 0
        %519 = vmatmul.mubr.bf16.gmra.mxu0 %v315
        %v520 = vpop.f32.mrf.mxu0
        %v521 = vadd.f32 0.0, %v520
        %v522 = vpop.f32.mrf.mxu0
        %v523 = vadd.f32 0.0, %v522
        %v524 = vpop.f32.mrf.mxu0
        %v525 = vadd.f32 0.0, %v524
        %v526 = vpop.f32.mrf.mxu0
        %v527 = vadd.f32 0.0, %v526
        %528 = vmatprep.mubr.bf16.mxu0 0
        %529 = vmatmul.mubr.bf16.gmra.mxu0 %v316
        %v530 = vpop.f32.mrf.mxu0
        %v531 = vadd.f32 0.0, %v530
        %v532 = vpop.f32.mrf.mxu0
        %v533 = vadd.f32 0.0, %v532
        %v534 = vpop.f32.mrf.mxu0
        %v535 = vadd.f32 0.0, %v534
        %v536 = vpop.f32.mrf.mxu0
        %v537 = vadd.f32 0.0, %v536
        %538 = vmatprep.mubr.bf16.mxu0 0
        %539 = vmatmul.mubr.bf16.gmra.mxu0 %v317
        %v540 = vpop.f32.mrf.mxu0
        %v541 = vadd.f32 0.0, %v540
        %v542 = vpop.f32.mrf.mxu0
        %v543 = vadd.f32 0.0, %v542
        %v544 = vpop.f32.mrf.mxu0
        %v545 = vadd.f32 0.0, %v544
        %v546 = vpop.f32.mrf.mxu0
        %v547 = vadd.f32 0.0, %v546
        %548 = vmatprep.mubr.bf16.mxu0 0
        %549 = vmatmul.mubr.bf16.gmra.mxu0 %v318
        %v550 = vpop.f32.mrf.mxu0
        %v551 = vadd.f32 0.0, %v550
        %v552 = vpop.f32.mrf.mxu0
        %v553 = vadd.f32 0.0, %v552
        %v554 = vpop.f32.mrf.mxu0
        %v555 = vadd.f32 0.0, %v554
        %v556 = vpop.f32.mrf.mxu0
        %v557 = vadd.f32 0.0, %v556
        %558 = vmatprep.mubr.bf16.mxu0 0
        %559 = vmatmul.mubr.bf16.gmra.mxu0 %v319
        %v560 = vpop.f32.mrf.mxu0
        %v561 = vadd.f32 0.0, %v560
        %v562 = vpop.f32.mrf.mxu0
        %v563 = vadd.f32 0.0, %v562
        %v564 = vpop.f32.mrf.mxu0
        %v565 = vadd.f32 0.0, %v564
        %v566 = vpop.f32.mrf.mxu0
        %v567 = vadd.f32 0.0, %v566
        %568 = vdwg.mxu0
        %569 = vmatprep.subr.bf16.mxu0 0
        %570 = vmatpush1.bf16.msra.mxu0 %v431
        %571 = vmatprep.subr.bf16.mxu0 0
        %572 = vmatpush1.bf16.msra.mxu0 %v428
        %573 = vmatprep.subr.bf16.mxu0 0
        %574 = vmatpush1.bf16.msra.mxu0 %v425
        %575 = vmatprep.subr.bf16.mxu0 0
        %576 = vmatpush1.bf16.msra.mxu0 %v422
        %577 = vmatprep.subr.bf16.mxu0 0
        %578 = vmatpush1.bf16.msra.mxu0 %v419
        %579 = vmatprep.subr.bf16.mxu0 0
        %580 = vmatpush1.bf16.msra.mxu0 %v416
        %581 = vmatprep.subr.bf16.mxu0 0
        %582 = vmatpush1.bf16.msra.mxu0 %v413
        %583 = vmatprep.subr.bf16.mxu0 0
        %584 = vmatpush1.bf16.msra.mxu0 %v410
        %585 = vmatprep.subr.bf16.mxu0 0
        %586 = vmatpush2.bf16.msra.mxu0 0
        %587 = vmatprep.subr.bf16.mxu0 0
        %588 = vmatpush2.bf16.msra.mxu0 0
        %589 = vmatprep.subr.bf16.mxu0 0
        %590 = vmatpush2.bf16.msra.mxu0 0
        %591 = vmatprep.subr.bf16.mxu0 0
        %592 = vmatpush2.bf16.msra.mxu0 0
        %593 = vmatprep.subr.bf16.mxu0 0
        %594 = vmatpush2.bf16.msra.mxu0 0
        %595 = vmatprep.subr.bf16.mxu0 0
        %596 = vmatpush2.bf16.msra.mxu0 0
        %597 = vmatprep.subr.bf16.mxu0 0
        %598 = vmatpush2.bf16.msra.mxu0 0
        %599 = vmatprep.subr.bf16.mxu0 0
        %600 = vmatpush2.bf16.msra.mxu0 0
        %601 = vmatprep.mubr.bf16.mxu0 0
        %602 = vmatmul.mubr.bf16.gmra.mxu0 %v312
        %v603 = vpop.f32.mrf.mxu0
        %v604 = vadd.f32 0.0, %v603
        %v605 = vpop.f32.mrf.mxu0
        %v606 = vpop.f32.mrf.mxu0
        %v607 = vadd.f32 0.0, %v606
        %v608 = vpop.f32.mrf.mxu0
        %609 = vmatprep.mubr.bf16.mxu0 0
        %610 = vmatmul.mubr.bf16.gmra.mxu0 %v313
        %v611 = vpop.f32.mrf.mxu0
        %v612 = vadd.f32 0.0, %v611
        %v613 = vpop.f32.mrf.mxu0
        %v614 = vpop.f32.mrf.mxu0
        %v615 = vadd.f32 0.0, %v614
        %v616 = vpop.f32.mrf.mxu0
        %617 = vmatprep.mubr.bf16.mxu0 0
        %618 = vmatmul.mubr.bf16.gmra.mxu0 %v314
        %v619 = vpop.f32.mrf.mxu0
        %v620 = vadd.f32 0.0, %v619
        %v621 = vpop.f32.mrf.mxu0
        %v622 = vpop.f32.mrf.mxu0
        %v623 = vadd.f32 0.0, %v622
        %v624 = vpop.f32.mrf.mxu0
        %625 = vmatprep.mubr.bf16.mxu0 0
        %626 = vmatmul.mubr.bf16.gmra.mxu0 %v315
        %v627 = vpop.f32.mrf.mxu0
        %v628 = vadd.f32 0.0, %v627
        %v629 = vpop.f32.mrf.mxu0
        %v630 = vpop.f32.mrf.mxu0
        %v631 = vadd.f32 0.0, %v630
        %v632 = vpop.f32.mrf.mxu0
        %633 = vmatprep.mubr.bf16.mxu0 0
        %634 = vmatmul.mubr.bf16.gmra.mxu0 %v316
        %v635 = vpop.f32.mrf.mxu0
        %v636 = vadd.f32 0.0, %v635
        %v637 = vpop.f32.mrf.mxu0
        %v638 = vpop.f32.mrf.mxu0
        %v639 = vadd.f32 0.0, %v638
        %v640 = vpop.f32.mrf.mxu0
        %641 = vmatprep.mubr.bf16.mxu0 0
        %642 = vmatmul.mubr.bf16.gmra.mxu0 %v317
        %v643 = vpop.f32.mrf.mxu0
        %v644 = vadd.f32 0.0, %v643
        %v645 = vpop.f32.mrf.mxu0
        %v646 = vpop.f32.mrf.mxu0
        %v647 = vadd.f32 0.0, %v646
        %v648 = vpop.f32.mrf.mxu0
        %649 = vmatprep.mubr.bf16.mxu0 0
        %650 = vmatmul.mubr.bf16.gmra.mxu0 %v318
        %v651 = vpop.f32.mrf.mxu0
        %v652 = vadd.f32 0.0, %v651
        %v653 = vpop.f32.mrf.mxu0
        %v654 = vpop.f32.mrf.mxu0
        %v655 = vadd.f32 0.0, %v654
        %v656 = vpop.f32.mrf.mxu0
        %657 = vmatprep.mubr.bf16.mxu0 0
        %658 = vmatmul.mubr.bf16.gmra.mxu0 %v319
        %v659 = vpop.f32.mrf.mxu0
        %v660 = vadd.f32 0.0, %v659
        %v661 = vpop.f32.mrf.mxu0
        %v662 = vpop.f32.mrf.mxu0
        %v663 = vadd.f32 0.0, %v662
        %v664 = vpop.f32.mrf.mxu0
        %665 = vdwg.mxu0
        %v666 = vstv %s231
        %v667 = vmul.f32 %v491, %v666
        %v668 = vmul.f32 %v495, %v666
        %v669 = vmul.f32 %v501, %v666
        %v670 = vmul.f32 %v505, %v666
        %v671 = vmul.f32 %v511, %v666
        %v672 = vmul.f32 %v515, %v666
        %v673 = vmul.f32 %v521, %v666
        %v674 = vmul.f32 %v525, %v666
        %v675 = vmul.f32 %v531, %v666
        %v676 = vmul.f32 %v535, %v666
        %v677 = vmul.f32 %v541, %v666
        %v678 = vmul.f32 %v545, %v666
        %v679 = vmul.f32 %v551, %v666
        %v680 = vmul.f32 %v555, %v666
        %v681 = vmul.f32 %v561, %v666
        %v682 = vmul.f32 %v565, %v666
        %v683 = vpack.c.bf16 %v668, %v667
        %v684 = vpack.c.bf16 %v670, %v669
        %v685 = vpack.c.bf16 %v672, %v671
        %v686 = vpack.c.bf16 %v674, %v673
        %v687 = vpack.c.bf16 %v676, %v675
        %v688 = vpack.c.bf16 %v678, %v677
        %v689 = vpack.c.bf16 %v680, %v679
        %v690 = vpack.c.bf16 %v682, %v681
        %v691 = vpack.c.bf16 %v497, %v493
        %v692 = vpack.c.bf16 %v507, %v503
        %v693 = vpack.c.bf16 %v517, %v513
        %v694 = vpack.c.bf16 %v527, %v523
        %v695 = vpack.c.bf16 %v537, %v533
        %v696 = vpack.c.bf16 %v547, %v543
        %v697 = vpack.c.bf16 %v557, %v553
        %v698 = vpack.c.bf16 %v567, %v563
        %v699 = vpack.c.bf16 %v607, %v604
        %v700 = vpack.c.bf16 %v615, %v612
        %v701 = vpack.c.bf16 %v623, %v620
        %v702 = vpack.c.bf16 %v631, %v628
        %v703 = vpack.c.bf16 %v639, %v636
        %v704 = vpack.c.bf16 %v647, %v644
        %v705 = vpack.c.bf16 %v655, %v652
        %v706 = vpack.c.bf16 %v663, %v660
        %vm707 = vcmask 261120
        %v709 = vsel %vm707, %v683, 0
        %v712 = vsel %vm707, %v684, 0
        %v715 = vsel %vm707, %v685, 0
        %v718 = vsel %vm707, %v686, 0
        %v721 = vsel %vm707, %v691, 0
        %v724 = vsel %vm707, %v692, 0
        %v727 = vsel %vm707, %v693, 0
        %v730 = vsel %vm707, %v694, 0
        %732 = vmatprep.subr.bf16.mxu0 0
        %733 = vmatpush1.bf16.xpose.msra.mxu0 0
        %734 = vmatprep.subr.bf16.mxu0 0
        %735 = vmatpush1.bf16.xpose.msra.mxu0 0
        %736 = vmatprep.subr.bf16.mxu0 0
        %737 = vmatpush1.bf16.xpose.msra.mxu0 0
        %738 = vmatprep.subr.bf16.mxu0 0
        %739 = vmatpush1.bf16.xpose.msra.mxu0 0
        %740 = vmatprep.subr.bf16.mxu0 0
        %741 = vmatpush1.bf16.xpose.msra.mxu0 %v730
        %742 = vmatprep.subr.bf16.mxu0 0
        %743 = vmatpush1.bf16.xpose.msra.mxu0 %v727
        %744 = vmatprep.subr.bf16.mxu0 0
        %745 = vmatpush1.bf16.xpose.msra.mxu0 %v724
        %746 = vmatprep.subr.bf16.mxu0 0
        %747 = vmatpush1.bf16.xpose.msra.mxu0 %v721
        %748 = vmatprep.subr.bf16.mxu0 0
        %749 = vmatpush2.bf16.xpose.msra.mxu0 0
        %750 = vmatprep.subr.bf16.mxu0 0
        %751 = vmatpush2.bf16.xpose.msra.mxu0 0
        %752 = vmatprep.subr.bf16.mxu0 0
        %753 = vmatpush2.bf16.xpose.msra.mxu0 0
        %754 = vmatprep.subr.bf16.mxu0 0
        %755 = vmatpush2.bf16.xpose.msra.mxu0 0
        %756 = vmatprep.subr.bf16.mxu0 0
        %757 = vmatpush2.bf16.xpose.msra.mxu0 0
        %758 = vmatprep.subr.bf16.mxu0 0
        %759 = vmatpush2.bf16.xpose.msra.mxu0 0
        %760 = vmatprep.subr.bf16.mxu0 0
        %761 = vmatpush2.bf16.xpose.msra.mxu0 0
        %762 = vmatprep.subr.bf16.mxu0 0
        %763 = vmatpush2.bf16.xpose.msra.mxu0 0
        %764 = vmatprep.mubr.bf16.mxu0 0
        %765 = vmatmul.mubr.bf16.gmra.mxu0 %v709
        %v766 = vpop.f32.mrf.mxu0
        %v767 = vadd.f32 0.0, %v766
        %v768 = vpop.f32.mrf.mxu0
        %v769 = vpop.f32.mrf.mxu0
        %v770 = vadd.f32 0.0, %v769
        %v771 = vpop.f32.mrf.mxu0
        %772 = vmatprep.mubr.bf16.mxu0 0
        %773 = vmatmul.mubr.bf16.gmra.mxu0 %v712
        %v774 = vpop.f32.mrf.mxu0
        %v775 = vadd.f32 0.0, %v774
        %v776 = vpop.f32.mrf.mxu0
        %v777 = vpop.f32.mrf.mxu0
        %v778 = vadd.f32 0.0, %v777
        %v779 = vpop.f32.mrf.mxu0
        %780 = vmatprep.mubr.bf16.mxu0 0
        %781 = vmatmul.mubr.bf16.gmra.mxu0 %v715
        %v782 = vpop.f32.mrf.mxu0
        %v783 = vadd.f32 0.0, %v782
        %v784 = vpop.f32.mrf.mxu0
        %v785 = vpop.f32.mrf.mxu0
        %v786 = vadd.f32 0.0, %v785
        %v787 = vpop.f32.mrf.mxu0
        %788 = vmatprep.mubr.bf16.mxu0 0
        %789 = vmatmul.mubr.bf16.gmra.mxu0 %v718
        %v790 = vpop.f32.mrf.mxu0
        %v791 = vadd.f32 0.0, %v790
        %v792 = vpop.f32.mrf.mxu0
        %v793 = vpop.f32.mrf.mxu0
        %v794 = vadd.f32 0.0, %v793
        %v795 = vpop.f32.mrf.mxu0
        %796 = vdwg.mxu0
        %v798 = vsel %vm707, %v687, 0
        %v801 = vsel %vm707, %v688, 0
        %v804 = vsel %vm707, %v689, 0
        %v807 = vsel %vm707, %v690, 0
        %v810 = vsel %vm707, %v695, 0
        %v813 = vsel %vm707, %v696, 0
        %v816 = vsel %vm707, %v697, 0
        %v819 = vsel %vm707, %v698, 0
        %821 = vmatprep.subr.bf16.mxu0 0
        %822 = vmatpush1.bf16.xpose.msra.mxu0 0
        %823 = vmatprep.subr.bf16.mxu0 0
        %824 = vmatpush1.bf16.xpose.msra.mxu0 0
        %825 = vmatprep.subr.bf16.mxu0 0
        %826 = vmatpush1.bf16.xpose.msra.mxu0 0
        %827 = vmatprep.subr.bf16.mxu0 0
        %828 = vmatpush1.bf16.xpose.msra.mxu0 0
        %829 = vmatprep.subr.bf16.mxu0 0
        %830 = vmatpush1.bf16.xpose.msra.mxu0 %v819
        %831 = vmatprep.subr.bf16.mxu0 0
        %832 = vmatpush1.bf16.xpose.msra.mxu0 %v816
        %833 = vmatprep.subr.bf16.mxu0 0
        %834 = vmatpush1.bf16.xpose.msra.mxu0 %v813
        %835 = vmatprep.subr.bf16.mxu0 0
        %836 = vmatpush1.bf16.xpose.msra.mxu0 %v810
        %837 = vmatprep.subr.bf16.mxu0 0
        %838 = vmatpush2.bf16.xpose.msra.mxu0 0
        %839 = vmatprep.subr.bf16.mxu0 0
        %840 = vmatpush2.bf16.xpose.msra.mxu0 0
        %841 = vmatprep.subr.bf16.mxu0 0
        %842 = vmatpush2.bf16.xpose.msra.mxu0 0
        %843 = vmatprep.subr.bf16.mxu0 0
        %844 = vmatpush2.bf16.xpose.msra.mxu0 0
        %845 = vmatprep.subr.bf16.mxu0 0
        %846 = vmatpush2.bf16.xpose.msra.mxu0 0
        %847 = vmatprep.subr.bf16.mxu0 0
        %848 = vmatpush2.bf16.xpose.msra.mxu0 0
        %849 = vmatprep.subr.bf16.mxu0 0
        %850 = vmatpush2.bf16.xpose.msra.mxu0 0
        %851 = vmatprep.subr.bf16.mxu0 0
        %852 = vmatpush2.bf16.xpose.msra.mxu0 0
        %853 = vmatprep.mubr.bf16.mxu0 0
        %854 = vmatmul.mubr.bf16.gmra.mxu0 %v798
        %v855 = vpop.f32.mrf.mxu0
        %v856 = vadd.f32 0.0, %v855
        %v857 = vpop.f32.mrf.mxu0
        %v858 = vpop.f32.mrf.mxu0
        %v859 = vadd.f32 0.0, %v858
        %v860 = vpop.f32.mrf.mxu0
        %861 = vmatprep.mubr.bf16.mxu0 0
        %862 = vmatmul.mubr.bf16.gmra.mxu0 %v801
        %v863 = vpop.f32.mrf.mxu0
        %v864 = vadd.f32 0.0, %v863
        %v865 = vpop.f32.mrf.mxu0
        %v866 = vpop.f32.mrf.mxu0
        %v867 = vadd.f32 0.0, %v866
        %v868 = vpop.f32.mrf.mxu0
        %869 = vmatprep.mubr.bf16.mxu0 0
        %870 = vmatmul.mubr.bf16.gmra.mxu0 %v804
        %v871 = vpop.f32.mrf.mxu0
        %v872 = vadd.f32 0.0, %v871
        %v873 = vpop.f32.mrf.mxu0
        %v874 = vpop.f32.mrf.mxu0
        %v875 = vadd.f32 0.0, %v874
        %v876 = vpop.f32.mrf.mxu0
        %877 = vmatprep.mubr.bf16.mxu0 0
        %878 = vmatmul.mubr.bf16.gmra.mxu0 %v807
        %v879 = vpop.f32.mrf.mxu0
        %v880 = vadd.f32 0.0, %v879
        %v881 = vpop.f32.mrf.mxu0
        %v882 = vpop.f32.mrf.mxu0
        %v883 = vadd.f32 0.0, %v882
        %v884 = vpop.f32.mrf.mxu0
        %885 = vdwg.mxu0
        %vm886 = vcmask 523264
        %v887 = vsel %vm886, %v767, -inf
        %888 = vmax.xlane.f32.xlu0 %v887
        %v889 = vpop.xlane.xlu0 %888
        %v890 = vsel %vm886, %v770, -inf
        %891 = vmax.xlane.f32.xlu0 %v890
        %v892 = vpop.xlane.xlu0 %891
        %v893 = vsel %vm886, %v775, -inf
        %894 = vmax.xlane.f32.xlu0 %v893
        %v895 = vpop.xlane.xlu0 %894
        %v896 = vsel %vm886, %v778, -inf
        %897 = vmax.xlane.f32.xlu0 %v896
        %v898 = vpop.xlane.xlu0 %897
        %v899 = vsel %vm886, %v783, -inf
        %900 = vmax.xlane.f32.xlu0 %v899
        %v901 = vpop.xlane.xlu0 %900
        %v902 = vsel %vm886, %v786, -inf
        %903 = vmax.xlane.f32.xlu0 %v902
        %v904 = vpop.xlane.xlu0 %903
        %v905 = vsel %vm886, %v791, -inf
        %906 = vmax.xlane.f32.xlu0 %v905
        %v907 = vpop.xlane.xlu0 %906
        %v908 = vsel %vm886, %v794, -inf
        %909 = vmax.xlane.f32.xlu0 %v908
        %v910 = vpop.xlane.xlu0 %909
        %v911 = vsel %vm886, %v856, -inf
        %912 = vmax.xlane.f32.xlu0 %v911
        %v913 = vpop.xlane.xlu0 %912
        %v914 = vsel %vm886, %v859, -inf
        %915 = vmax.xlane.f32.xlu0 %v914
        %v916 = vpop.xlane.xlu0 %915
        %v917 = vsel %vm886, %v864, -inf
        %918 = vmax.xlane.f32.xlu0 %v917
        %v919 = vpop.xlane.xlu0 %918
        %v920 = vsel %vm886, %v867, -inf
        %921 = vmax.xlane.f32.xlu0 %v920
        %v922 = vpop.xlane.xlu0 %921
        %v923 = vsel %vm886, %v872, -inf
        %924 = vmax.xlane.f32.xlu0 %v923
        %v925 = vpop.xlane.xlu0 %924
        %v926 = vsel %vm886, %v875, -inf
        %927 = vmax.xlane.f32.xlu0 %v926
        %v928 = vpop.xlane.xlu0 %927
        %v929 = vsel %vm886, %v880, -inf
        %930 = vmax.xlane.f32.xlu0 %v929
        %v931 = vpop.xlane.xlu0 %930
        %v932 = vsel %vm886, %v883, -inf
        %933 = vmax.xlane.f32.xlu0 %v932
        %v934 = vpop.xlane.xlu0 %933
        %v935 = vsub.f32 %v767, %v889
        %v936 = vsub.f32 %v770, %v892
        %v937 = vsub.f32 %v775, %v895
        %v938 = vsub.f32 %v778, %v898
        %v939 = vsub.f32 %v783, %v901
        %v940 = vsub.f32 %v786, %v904
        %v941 = vsub.f32 %v791, %v907
        %v942 = vsub.f32 %v794, %v910
        %v943 = vsub.f32 %v856, %v913
        %v944 = vsub.f32 %v859, %v916
        %v945 = vsub.f32 %v864, %v919
        %v946 = vsub.f32 %v867, %v922
        %v947 = vsub.f32 %v872, %v925
        %v948 = vsub.f32 %v875, %v928
        %v949 = vsub.f32 %v880, %v931
        %v950 = vsub.f32 %v883, %v934
        %v951 = vmul.f32 %v935, 1.442695
        %v952 = vpow.pop %v951
        %v953 = vmul.f32 %v936, 1.442695
        %v954 = vpow.pop %v953
        %v955 = vmul.f32 %v937, 1.442695
        %v956 = vpow.pop %v955
        %v957 = vmul.f32 %v938, 1.442695
        %v958 = vpow.pop %v957
        %v959 = vmul.f32 %v939, 1.442695
        %v960 = vpow.pop %v959
        %v961 = vmul.f32 %v940, 1.442695
        %v962 = vpow.pop %v961
        %v963 = vmul.f32 %v941, 1.442695
        %v964 = vpow.pop %v963
        %v965 = vmul.f32 %v942, 1.442695
        %v966 = vpow.pop %v965
        %v967 = vmul.f32 %v943, 1.442695
        %v968 = vpow.pop %v967
        %v969 = vmul.f32 %v944, 1.442695
        %v970 = vpow.pop %v969
        %v971 = vmul.f32 %v945, 1.442695
        %v972 = vpow.pop %v971
        %v973 = vmul.f32 %v946, 1.442695
        %v974 = vpow.pop %v973
        %v975 = vmul.f32 %v947, 1.442695
        %v976 = vpow.pop %v975
        %v977 = vmul.f32 %v948, 1.442695
        %v978 = vpow.pop %v977
        %v979 = vmul.f32 %v949, 1.442695
        %v980 = vpow.pop %v979
        %v981 = vmul.f32 %v950, 1.442695
        %v982 = vpow.pop %v981
        %v983 = vsel %vm886, %v952, 0.0
        %984 = vadd.xlane.f32.xlu0 %v983
        %v985 = vpop.xlane.xlu0 %984
        %v986 = vsel %vm886, %v954, 0.0
        %987 = vadd.xlane.f32.xlu0 %v986
        %v988 = vpop.xlane.xlu0 %987
        %v989 = vsel %vm886, %v956, 0.0
        %990 = vadd.xlane.f32.xlu0 %v989
        %v991 = vpop.xlane.xlu0 %990
        %v992 = vsel %vm886, %v958, 0.0
        %993 = vadd.xlane.f32.xlu0 %v992
        %v994 = vpop.xlane.xlu0 %993
        %v995 = vsel %vm886, %v960, 0.0
        %996 = vadd.xlane.f32.xlu0 %v995
        %v997 = vpop.xlane.xlu0 %996
        %v998 = vsel %vm886, %v962, 0.0
        %999 = vadd.xlane.f32.xlu0 %v998
        %v1000 = vpop.xlane.xlu0 %999
        %v1001 = vsel %vm886, %v964, 0.0
        %1002 = vadd.xlane.f32.xlu0 %v1001
        %v1003 = vpop.xlane.xlu0 %1002
        %v1004 = vsel %vm886, %v966, 0.0
        %1005 = vadd.xlane.f32.xlu0 %v1004
        %v1006 = vpop.xlane.xlu0 %1005
        %v1007 = vsel %vm886, %v968, 0.0
        %1008 = vadd.xlane.f32.xlu0 %v1007
        %v1009 = vpop.xlane.xlu0 %1008
        %v1010 = vsel %vm886, %v970, 0.0
        %1011 = vadd.xlane.f32.xlu0 %v1010
        %v1012 = vpop.xlane.xlu0 %1011
        %v1013 = vsel %vm886, %v972, 0.0
        %1014 = vadd.xlane.f32.xlu0 %v1013
        %v1015 = vpop.xlane.xlu0 %1014
        %v1016 = vsel %vm886, %v974, 0.0
        %1017 = vadd.xlane.f32.xlu0 %v1016
        %v1018 = vpop.xlane.xlu0 %1017
        %v1019 = vsel %vm886, %v976, 0.0
        %1020 = vadd.xlane.f32.xlu0 %v1019
        %v1021 = vpop.xlane.xlu0 %1020
        %v1022 = vsel %vm886, %v978, 0.0
        %1023 = vadd.xlane.f32.xlu0 %v1022
        %v1024 = vpop.xlane.xlu0 %1023
        %v1025 = vsel %vm886, %v980, 0.0
        %1026 = vadd.xlane.f32.xlu0 %v1025
        %v1027 = vpop.xlane.xlu0 %1026
        %v1028 = vsel %vm886, %v982, 0.0
        %1029 = vadd.xlane.f32.xlu0 %v1028
        %v1030 = vpop.xlane.xlu0 %1029
        %v1031 = vrcp.pop %v985
        %v1032 = vrcp.pop %v988
        %v1033 = vrcp.pop %v991
        %v1034 = vrcp.pop %v994
        %v1035 = vrcp.pop %v997
        %v1036 = vrcp.pop %v1000
        %v1037 = vrcp.pop %v1003
        %v1038 = vrcp.pop %v1006
        %v1039 = vrcp.pop %v1009
        %v1040 = vrcp.pop %v1012
        %v1041 = vrcp.pop %v1015
        %v1042 = vrcp.pop %v1018
        %v1043 = vrcp.pop %v1021
        %v1044 = vrcp.pop %v1024
        %v1045 = vrcp.pop %v1027
        %v1046 = vrcp.pop %v1030
        %v1047 = vmul.f32 %v952, %v1031
        %v1048 = vmul.f32 %v954, %v1032
        %v1049 = vmul.f32 %v956, %v1033
        %v1050 = vmul.f32 %v958, %v1034
        %v1051 = vmul.f32 %v960, %v1035
        %v1052 = vmul.f32 %v962, %v1036
        %v1053 = vmul.f32 %v964, %v1037
        %v1054 = vmul.f32 %v966, %v1038
        %v1055 = vmul.f32 %v968, %v1039
        %v1056 = vmul.f32 %v970, %v1040
        %v1057 = vmul.f32 %v972, %v1041
        %v1058 = vmul.f32 %v974, %v1042
        %v1059 = vmul.f32 %v976, %v1043
        %v1060 = vmul.f32 %v978, %v1044
        %v1061 = vmul.f32 %v980, %v1045
        %v1062 = vmul.f32 %v982, %v1046
        %v1063 = vpack.c.bf16 %v1048, %v1047
        %v1064 = vpack.c.bf16 %v1050, %v1049
        %v1065 = vpack.c.bf16 %v1052, %v1051
        %v1066 = vpack.c.bf16 %v1054, %v1053
        %v1067 = vpack.c.bf16 %v1056, %v1055
        %v1068 = vpack.c.bf16 %v1058, %v1057
        %v1069 = vpack.c.bf16 %v1060, %v1059
        %v1070 = vpack.c.bf16 %v1062, %v1061
        %v1072 = vsel %vm886, %v1063, 0
        %v1075 = vsel %vm886, %v1064, 0
        %v1078 = vsel %vm886, %v1065, 0
        %v1081 = vsel %vm886, %v1066, 0
        %1083 = vmatprep.subr.bf16.mxu0 0
        %1084 = vmatpush1.bf16.msra.mxu0 0
        %1085 = vmatprep.subr.bf16.mxu0 0
        %1086 = vmatpush1.bf16.msra.mxu0 0
        %1087 = vmatprep.subr.bf16.mxu0 0
        %1088 = vmatpush1.bf16.msra.mxu0 0
        %1089 = vmatprep.subr.bf16.mxu0 0
        %1090 = vmatpush1.bf16.msra.mxu0 0
        %1091 = vmatprep.subr.bf16.mxu0 0
        %1092 = vmatpush1.bf16.msra.mxu0 %v702
        %1093 = vmatprep.subr.bf16.mxu0 0
        %1094 = vmatpush1.bf16.msra.mxu0 %v701
        %1095 = vmatprep.subr.bf16.mxu0 0
        %1096 = vmatpush1.bf16.msra.mxu0 %v700
        %1097 = vmatprep.subr.bf16.mxu0 0
        %1098 = vmatpush1.bf16.msra.mxu0 %v699
        %1099 = vmatprep.subr.bf16.mxu0 0
        %1100 = vmatpush2.bf16.msra.mxu0 0
        %1101 = vmatprep.subr.bf16.mxu0 0
        %1102 = vmatpush2.bf16.msra.mxu0 0
        %1103 = vmatprep.subr.bf16.mxu0 0
        %1104 = vmatpush2.bf16.msra.mxu0 0
        %1105 = vmatprep.subr.bf16.mxu0 0
        %1106 = vmatpush2.bf16.msra.mxu0 0
        %1107 = vmatprep.subr.bf16.mxu0 0
        %1108 = vmatpush2.bf16.msra.mxu0 0
        %1109 = vmatprep.subr.bf16.mxu0 0
        %1110 = vmatpush2.bf16.msra.mxu0 0
        %1111 = vmatprep.subr.bf16.mxu0 0
        %1112 = vmatpush2.bf16.msra.mxu0 0
        %1113 = vmatprep.subr.bf16.mxu0 0
        %1114 = vmatpush2.bf16.msra.mxu0 0
        %1115 = vmatprep.mubr.bf16.mxu0 0
        %1116 = vmatmul.mubr.bf16.gmra.mxu0 %v1072
        %v1117 = vpop.f32.mrf.mxu0
        %v1118 = vadd.f32 0.0, %v1117
        %v1119 = vpop.f32.mrf.mxu0
        %v1120 = vpop.f32.mrf.mxu0
        %v1121 = vadd.f32 0.0, %v1120
        %v1122 = vpop.f32.mrf.mxu0
        %1123 = vmatprep.mubr.bf16.mxu0 0
        %1124 = vmatmul.mubr.bf16.gmra.mxu0 %v1075
        %v1125 = vpop.f32.mrf.mxu0
        %v1126 = vadd.f32 0.0, %v1125
        %v1127 = vpop.f32.mrf.mxu0
        %v1128 = vpop.f32.mrf.mxu0
        %v1129 = vadd.f32 0.0, %v1128
        %v1130 = vpop.f32.mrf.mxu0
        %1131 = vmatprep.mubr.bf16.mxu0 0
        %1132 = vmatmul.mubr.bf16.gmra.mxu0 %v1078
        %v1133 = vpop.f32.mrf.mxu0
        %v1134 = vadd.f32 0.0, %v1133
        %v1135 = vpop.f32.mrf.mxu0
        %v1136 = vpop.f32.mrf.mxu0
        %v1137 = vadd.f32 0.0, %v1136
        %v1138 = vpop.f32.mrf.mxu0
        %1139 = vmatprep.mubr.bf16.mxu0 0
        %1140 = vmatmul.mubr.bf16.gmra.mxu0 %v1081
        %v1141 = vpop.f32.mrf.mxu0
        %v1142 = vadd.f32 0.0, %v1141
        %v1143 = vpop.f32.mrf.mxu0
        %v1144 = vpop.f32.mrf.mxu0
        %v1145 = vadd.f32 0.0, %v1144
        %v1146 = vpop.f32.mrf.mxu0
        %1147 = vdwg.mxu0
        %v1149 = vsel %vm886, %v1067, 0
        %v1152 = vsel %vm886, %v1068, 0
        %v1155 = vsel %vm886, %v1069, 0
        %v1158 = vsel %vm886, %v1070, 0
        %1160 = vmatprep.subr.bf16.mxu0 0
        %1161 = vmatpush1.bf16.msra.mxu0 0
        %1162 = vmatprep.subr.bf16.mxu0 0
        %1163 = vmatpush1.bf16.msra.mxu0 0
        %1164 = vmatprep.subr.bf16.mxu0 0
        %1165 = vmatpush1.bf16.msra.mxu0 0
        %1166 = vmatprep.subr.bf16.mxu0 0
        %1167 = vmatpush1.bf16.msra.mxu0 0
        %1168 = vmatprep.subr.bf16.mxu0 0
        %1169 = vmatpush1.bf16.msra.mxu0 %v706
        %1170 = vmatprep.subr.bf16.mxu0 0
        %1171 = vmatpush1.bf16.msra.mxu0 %v705
        %1172 = vmatprep.subr.bf16.mxu0 0
        %1173 = vmatpush1.bf16.msra.mxu0 %v704
        %1174 = vmatprep.subr.bf16.mxu0 0
        %1175 = vmatpush1.bf16.msra.mxu0 %v703
        %1176 = vmatprep.subr.bf16.mxu0 0
        %1177 = vmatpush2.bf16.msra.mxu0 0
        %1178 = vmatprep.subr.bf16.mxu0 0
        %1179 = vmatpush2.bf16.msra.mxu0 0
        %1180 = vmatprep.subr.bf16.mxu0 0
        %1181 = vmatpush2.bf16.msra.mxu0 0
        %1182 = vmatprep.subr.bf16.mxu0 0
        %1183 = vmatpush2.bf16.msra.mxu0 0
        %1184 = vmatprep.subr.bf16.mxu0 0
        %1185 = vmatpush2.bf16.msra.mxu0 0
        %1186 = vmatprep.subr.bf16.mxu0 0
        %1187 = vmatpush2.bf16.msra.mxu0 0
        %1188 = vmatprep.subr.bf16.mxu0 0
        %1189 = vmatpush2.bf16.msra.mxu0 0
        %1190 = vmatprep.subr.bf16.mxu0 0
        %1191 = vmatpush2.bf16.msra.mxu0 0
        %1192 = vmatprep.mubr.bf16.mxu0 0
        %1193 = vmatmul.mubr.bf16.gmra.mxu0 %v1149
        %v1194 = vpop.f32.mrf.mxu0
        %v1195 = vadd.f32 0.0, %v1194
        %v1196 = vpop.f32.mrf.mxu0
        %v1197 = vpop.f32.mrf.mxu0
        %v1198 = vadd.f32 0.0, %v1197
        %v1199 = vpop.f32.mrf.mxu0
        %1200 = vmatprep.mubr.bf16.mxu0 0
        %1201 = vmatmul.mubr.bf16.gmra.mxu0 %v1152
        %v1202 = vpop.f32.mrf.mxu0
        %v1203 = vadd.f32 0.0, %v1202
        %v1204 = vpop.f32.mrf.mxu0
        %v1205 = vpop.f32.mrf.mxu0
        %v1206 = vadd.f32 0.0, %v1205
        %v1207 = vpop.f32.mrf.mxu0
        %1208 = vmatprep.mubr.bf16.mxu0 0
        %1209 = vmatmul.mubr.bf16.gmra.mxu0 %v1155
        %v1210 = vpop.f32.mrf.mxu0
        %v1211 = vadd.f32 0.0, %v1210
        %v1212 = vpop.f32.mrf.mxu0
        %v1213 = vpop.f32.mrf.mxu0
        %v1214 = vadd.f32 0.0, %v1213
        %v1215 = vpop.f32.mrf.mxu0
        %1216 = vmatprep.mubr.bf16.mxu0 0
        %1217 = vmatmul.mubr.bf16.gmra.mxu0 %v1158
        %v1218 = vpop.f32.mrf.mxu0
        %v1219 = vadd.f32 0.0, %v1218
        %v1220 = vpop.f32.mrf.mxu0
        %v1221 = vpop.f32.mrf.mxu0
        %v1222 = vadd.f32 0.0, %v1221
        %v1223 = vpop.f32.mrf.mxu0
        %1224 = vdwg.mxu0
        %v1225 = vpack.c.bf16 %v1121, %v1118
        %v1226 = vpack.c.bf16 %v1129, %v1126
        %v1227 = vpack.c.bf16 %v1137, %v1134
        %v1228 = vpack.c.bf16 %v1145, %v1142
        %v1229 = vpack.c.bf16 %v1198, %v1195
        %v1230 = vpack.c.bf16 %v1206, %v1203
        %v1231 = vpack.c.bf16 %v1214, %v1211
        %v1232 = vpack.c.bf16 %v1222, %v1219
        %v1233 = vld [vmem:[%s3] sm:$0xf]
        %v1234 = vld [vmem:[%s3 + $0x4] sm:$0xf]
        %v1235 = vld [vmem:[%s3 + $0x8] sm:$0xf]
        %v1236 = vld [vmem:[%s3 + $0xc] sm:$0xf]
        %1241 = vrot.lane.b32.xlu0 %v683, 96
        %v1242 = vpop.permute.xlu0 %1241
        %1243 = vrot.lane.b32.xlu0 %v684, 96
        %v1244 = vpop.permute.xlu0 %1243
        %1245 = vrot.lane.b32.xlu0 %v685, 96
        %v1246 = vpop.permute.xlu0 %1245
        %1247 = vrot.lane.b32.xlu0 %v686, 96
        %v1248 = vpop.permute.xlu0 %1247
        %1253 = vrot.lane.b32.xlu0 %v691, 96
        %v1254 = vpop.permute.xlu0 %1253
        %1255 = vrot.lane.b32.xlu0 %v692, 96
        %v1256 = vpop.permute.xlu0 %1255
        %1257 = vrot.lane.b32.xlu0 %v693, 96
        %v1258 = vpop.permute.xlu0 %1257
        %1259 = vrot.lane.b32.xlu0 %v694, 96
        %v1260 = vpop.permute.xlu0 %1259
        %v1262 = vsel %vm707, %v1242, 0
        %v1265 = vsel %vm707, %v1244, 0
        %v1268 = vsel %vm707, %v1246, 0
        %v1271 = vsel %vm707, %v1248, 0
        %v1274 = vsel %vm707, %v1254, 0
        %v1277 = vsel %vm707, %v1256, 0
        %v1280 = vsel %vm707, %v1258, 0
        %v1283 = vsel %vm707, %v1260, 0
        %1285 = vmatprep.subr.bf16.mxu0 0
        %1286 = vmatpush1.bf16.xpose.msra.mxu0 0
        %1287 = vmatprep.subr.bf16.mxu0 0
        %1288 = vmatpush1.bf16.xpose.msra.mxu0 0
        %1289 = vmatprep.subr.bf16.mxu0 0
        %1290 = vmatpush1.bf16.xpose.msra.mxu0 0
        %1291 = vmatprep.subr.bf16.mxu0 0
        %1292 = vmatpush1.bf16.xpose.msra.mxu0 0
        %1293 = vmatprep.subr.bf16.mxu0 0
        %1294 = vmatpush1.bf16.xpose.msra.mxu0 %v1283
        %1295 = vmatprep.subr.bf16.mxu0 0
        %1296 = vmatpush1.bf16.xpose.msra.mxu0 %v1280
        %1297 = vmatprep.subr.bf16.mxu0 0
        %1298 = vmatpush1.bf16.xpose.msra.mxu0 %v1277
        %1299 = vmatprep.subr.bf16.mxu0 0
        %1300 = vmatpush1.bf16.xpose.msra.mxu0 %v1274
        %1301 = vmatprep.subr.bf16.mxu0 0
        %1302 = vmatpush2.bf16.xpose.msra.mxu0 0
        %1303 = vmatprep.subr.bf16.mxu0 0
        %1304 = vmatpush2.bf16.xpose.msra.mxu0 0
        %1305 = vmatprep.subr.bf16.mxu0 0
        %1306 = vmatpush2.bf16.xpose.msra.mxu0 0
        %1307 = vmatprep.subr.bf16.mxu0 0
        %1308 = vmatpush2.bf16.xpose.msra.mxu0 0
        %1309 = vmatprep.subr.bf16.mxu0 0
        %1310 = vmatpush2.bf16.xpose.msra.mxu0 0
        %1311 = vmatprep.subr.bf16.mxu0 0
        %1312 = vmatpush2.bf16.xpose.msra.mxu0 0
        %1313 = vmatprep.subr.bf16.mxu0 0
        %1314 = vmatpush2.bf16.xpose.msra.mxu0 0
        %1315 = vmatprep.subr.bf16.mxu0 0
        %1316 = vmatpush2.bf16.xpose.msra.mxu0 0
        %1317 = vmatprep.mubr.bf16.mxu0 0
        %1318 = vmatmul.mubr.bf16.gmra.mxu0 %v1262
        %v1319 = vpop.f32.mrf.mxu0
        %v1320 = vadd.f32 0.0, %v1319
        %v1321 = vpop.f32.mrf.mxu0
        %v1322 = vpop.f32.mrf.mxu0
        %v1323 = vadd.f32 0.0, %v1322
        %v1324 = vpop.f32.mrf.mxu0
        %1325 = vmatprep.mubr.bf16.mxu0 0
        %1326 = vmatmul.mubr.bf16.gmra.mxu0 %v1265
        %v1327 = vpop.f32.mrf.mxu0
        %v1328 = vadd.f32 0.0, %v1327
        %v1329 = vpop.f32.mrf.mxu0
        %v1330 = vpop.f32.mrf.mxu0
        %v1331 = vadd.f32 0.0, %v1330
        %v1332 = vpop.f32.mrf.mxu0
        %1333 = vmatprep.mubr.bf16.mxu0 0
        %1334 = vmatmul.mubr.bf16.gmra.mxu0 %v1268
        %v1335 = vpop.f32.mrf.mxu0
        %v1336 = vadd.f32 0.0, %v1335
        %v1337 = vpop.f32.mrf.mxu0
        %v1338 = vpop.f32.mrf.mxu0
        %v1339 = vadd.f32 0.0, %v1338
        %v1340 = vpop.f32.mrf.mxu0
        %1341 = vmatprep.mubr.bf16.mxu0 0
        %1342 = vmatmul.mubr.bf16.gmra.mxu0 %v1271
        %v1343 = vpop.f32.mrf.mxu0
        %v1344 = vadd.f32 0.0, %v1343
        %v1345 = vpop.f32.mrf.mxu0
        %v1346 = vpop.f32.mrf.mxu0
        %v1347 = vadd.f32 0.0, %v1346
        %v1348 = vpop.f32.mrf.mxu0
        %1349 = vdwg.mxu0
        %1354 = vrot.lane.b32.xlu0 %v687, 96
        %v1355 = vpop.permute.xlu0 %1354
        %1356 = vrot.lane.b32.xlu0 %v688, 96
        %v1357 = vpop.permute.xlu0 %1356
        %1358 = vrot.lane.b32.xlu0 %v689, 96
        %v1359 = vpop.permute.xlu0 %1358
        %1360 = vrot.lane.b32.xlu0 %v690, 96
        %v1361 = vpop.permute.xlu0 %1360
        %1366 = vrot.lane.b32.xlu0 %v695, 96
        %v1367 = vpop.permute.xlu0 %1366
        %1368 = vrot.lane.b32.xlu0 %v696, 96
        %v1369 = vpop.permute.xlu0 %1368
        %1370 = vrot.lane.b32.xlu0 %v697, 96
        %v1371 = vpop.permute.xlu0 %1370
        %1372 = vrot.lane.b32.xlu0 %v698, 96
        %v1373 = vpop.permute.xlu0 %1372
        %v1375 = vsel %vm707, %v1355, 0
        %v1378 = vsel %vm707, %v1357, 0
        %v1381 = vsel %vm707, %v1359, 0
        %v1384 = vsel %vm707, %v1361, 0
        %v1387 = vsel %vm707, %v1367, 0
        %v1390 = vsel %vm707, %v1369, 0
        %v1393 = vsel %vm707, %v1371, 0
        %v1396 = vsel %vm707, %v1373, 0
        %1398 = vmatprep.subr.bf16.mxu0 0
        %1399 = vmatpush1.bf16.xpose.msra.mxu0 0
        %1400 = vmatprep.subr.bf16.mxu0 0
        %1401 = vmatpush1.bf16.xpose.msra.mxu0 0
        %1402 = vmatprep.subr.bf16.mxu0 0
        %1403 = vmatpush1.bf16.xpose.msra.mxu0 0
        %1404 = vmatprep.subr.bf16.mxu0 0
        %1405 = vmatpush1.bf16.xpose.msra.mxu0 0
        %1406 = vmatprep.subr.bf16.mxu0 0
        %1407 = vmatpush1.bf16.xpose.msra.mxu0 %v1396
        %1408 = vmatprep.subr.bf16.mxu0 0
        %1409 = vmatpush1.bf16.xpose.msra.mxu0 %v1393
        %1410 = vmatprep.subr.bf16.mxu0 0
        %1411 = vmatpush1.bf16.xpose.msra.mxu0 %v1390
        %1412 = vmatprep.subr.bf16.mxu0 0
        %1413 = vmatpush1.bf16.xpose.msra.mxu0 %v1387
        %1414 = vmatprep.subr.bf16.mxu0 0
        %1415 = vmatpush2.bf16.xpose.msra.mxu0 0
        %1416 = vmatprep.subr.bf16.mxu0 0
        %1417 = vmatpush2.bf16.xpose.msra.mxu0 0
        %1418 = vmatprep.subr.bf16.mxu0 0
        %1419 = vmatpush2.bf16.xpose.msra.mxu0 0
        %1420 = vmatprep.subr.bf16.mxu0 0
        %1421 = vmatpush2.bf16.xpose.msra.mxu0 0
        %1422 = vmatprep.subr.bf16.mxu0 0
        %1423 = vmatpush2.bf16.xpose.msra.mxu0 0
        %1424 = vmatprep.subr.bf16.mxu0 0
        %1425 = vmatpush2.bf16.xpose.msra.mxu0 0
        %1426 = vmatprep.subr.bf16.mxu0 0
        %1427 = vmatpush2.bf16.xpose.msra.mxu0 0
        %1428 = vmatprep.subr.bf16.mxu0 0
        %1429 = vmatpush2.bf16.xpose.msra.mxu0 0
        %1430 = vmatprep.mubr.bf16.mxu0 0
        %1431 = vmatmul.mubr.bf16.gmra.mxu0 %v1375
        %v1432 = vpop.f32.mrf.mxu0
        %v1433 = vadd.f32 0.0, %v1432
        %v1434 = vpop.f32.mrf.mxu0
        %v1435 = vpop.f32.mrf.mxu0
        %v1436 = vadd.f32 0.0, %v1435
        %v1437 = vpop.f32.mrf.mxu0
        %1438 = vmatprep.mubr.bf16.mxu0 0
        %1439 = vmatmul.mubr.bf16.gmra.mxu0 %v1378
        %v1440 = vpop.f32.mrf.mxu0
        %v1441 = vadd.f32 0.0, %v1440
        %v1442 = vpop.f32.mrf.mxu0
        %v1443 = vpop.f32.mrf.mxu0
        %v1444 = vadd.f32 0.0, %v1443
        %v1445 = vpop.f32.mrf.mxu0
        %1446 = vmatprep.mubr.bf16.mxu0 0
        %1447 = vmatmul.mubr.bf16.gmra.mxu0 %v1381
        %v1448 = vpop.f32.mrf.mxu0
        %v1449 = vadd.f32 0.0, %v1448
        %v1450 = vpop.f32.mrf.mxu0
        %v1451 = vpop.f32.mrf.mxu0
        %v1452 = vadd.f32 0.0, %v1451
        %v1453 = vpop.f32.mrf.mxu0
        %1454 = vmatprep.mubr.bf16.mxu0 0
        %1455 = vmatmul.mubr.bf16.gmra.mxu0 %v1384
        %v1456 = vpop.f32.mrf.mxu0
        %v1457 = vadd.f32 0.0, %v1456
        %v1458 = vpop.f32.mrf.mxu0
        %v1459 = vpop.f32.mrf.mxu0
        %v1460 = vadd.f32 0.0, %v1459
        %v1461 = vpop.f32.mrf.mxu0
        %1462 = vdwg.mxu0
        %v1463 = vsel %vm886, %v1320, -inf
        %1464 = vmax.xlane.f32.xlu0 %v1463
        %v1465 = vpop.xlane.xlu0 %1464
        %v1466 = vsel %vm886, %v1323, -inf
        %1467 = vmax.xlane.f32.xlu0 %v1466
        %v1468 = vpop.xlane.xlu0 %1467
        %v1469 = vsel %vm886, %v1328, -inf
        %1470 = vmax.xlane.f32.xlu0 %v1469
        %v1471 = vpop.xlane.xlu0 %1470
        %v1472 = vsel %vm886, %v1331, -inf
        %1473 = vmax.xlane.f32.xlu0 %v1472
        %v1474 = vpop.xlane.xlu0 %1473
        %v1475 = vsel %vm886, %v1336, -inf
        %1476 = vmax.xlane.f32.xlu0 %v1475
        %v1477 = vpop.xlane.xlu0 %1476
        %v1478 = vsel %vm886, %v1339, -inf
        %1479 = vmax.xlane.f32.xlu0 %v1478
        %v1480 = vpop.xlane.xlu0 %1479
        %v1481 = vsel %vm886, %v1344, -inf
        %1482 = vmax.xlane.f32.xlu0 %v1481
        %v1483 = vpop.xlane.xlu0 %1482
        %v1484 = vsel %vm886, %v1347, -inf
        %1485 = vmax.xlane.f32.xlu0 %v1484
        %v1486 = vpop.xlane.xlu0 %1485
        %v1487 = vsel %vm886, %v1433, -inf
        %1488 = vmax.xlane.f32.xlu0 %v1487
        %v1489 = vpop.xlane.xlu0 %1488
        %v1490 = vsel %vm886, %v1436, -inf
        %1491 = vmax.xlane.f32.xlu0 %v1490
        %v1492 = vpop.xlane.xlu0 %1491
        %v1493 = vsel %vm886, %v1441, -inf
        %1494 = vmax.xlane.f32.xlu0 %v1493
        %v1495 = vpop.xlane.xlu0 %1494
        %v1496 = vsel %vm886, %v1444, -inf
        %1497 = vmax.xlane.f32.xlu0 %v1496
        %v1498 = vpop.xlane.xlu0 %1497
        %v1499 = vsel %vm886, %v1449, -inf
        %1500 = vmax.xlane.f32.xlu0 %v1499
        %v1501 = vpop.xlane.xlu0 %1500
        %v1502 = vsel %vm886, %v1452, -inf
        %1503 = vmax.xlane.f32.xlu0 %v1502
        %v1504 = vpop.xlane.xlu0 %1503
        %v1505 = vsel %vm886, %v1457, -inf
        %1506 = vmax.xlane.f32.xlu0 %v1505
        %v1507 = vpop.xlane.xlu0 %1506
        %v1508 = vsel %vm886, %v1460, -inf
        %1509 = vmax.xlane.f32.xlu0 %v1508
        %v1510 = vpop.xlane.xlu0 %1509
        %v1511 = vsub.f32 %v1320, %v1465
        %v1512 = vsub.f32 %v1323, %v1468
        %v1513 = vsub.f32 %v1328, %v1471
        %v1514 = vsub.f32 %v1331, %v1474
        %v1515 = vsub.f32 %v1336, %v1477
        %v1516 = vsub.f32 %v1339, %v1480
        %v1517 = vsub.f32 %v1344, %v1483
        %v1518 = vsub.f32 %v1347, %v1486
        %v1519 = vsub.f32 %v1433, %v1489
        %v1520 = vsub.f32 %v1436, %v1492
        %v1521 = vsub.f32 %v1441, %v1495
        %v1522 = vsub.f32 %v1444, %v1498
        %v1523 = vsub.f32 %v1449, %v1501
        %v1524 = vsub.f32 %v1452, %v1504
        %v1525 = vsub.f32 %v1457, %v1507
        %v1526 = vsub.f32 %v1460, %v1510
        %v1527 = vmul.f32 %v1511, 1.442695
        %v1528 = vpow.pop %v1527
        %v1529 = vmul.f32 %v1512, 1.442695
        %v1530 = vpow.pop %v1529
        %v1531 = vmul.f32 %v1513, 1.442695
        %v1532 = vpow.pop %v1531
        %v1533 = vmul.f32 %v1514, 1.442695
        %v1534 = vpow.pop %v1533
        %v1535 = vmul.f32 %v1515, 1.442695
        %v1536 = vpow.pop %v1535
        %v1537 = vmul.f32 %v1516, 1.442695
        %v1538 = vpow.pop %v1537
        %v1539 = vmul.f32 %v1517, 1.442695
        %v1540 = vpow.pop %v1539
        %v1541 = vmul.f32 %v1518, 1.442695
        %v1542 = vpow.pop %v1541
        %v1543 = vmul.f32 %v1519, 1.442695
        %v1544 = vpow.pop %v1543
        %v1545 = vmul.f32 %v1520, 1.442695
        %v1546 = vpow.pop %v1545
        %v1547 = vmul.f32 %v1521, 1.442695
        %v1548 = vpow.pop %v1547
        %v1549 = vmul.f32 %v1522, 1.442695
        %v1550 = vpow.pop %v1549
        %v1551 = vmul.f32 %v1523, 1.442695
        %v1552 = vpow.pop %v1551
        %v1553 = vmul.f32 %v1524, 1.442695
        %v1554 = vpow.pop %v1553
        %v1555 = vmul.f32 %v1525, 1.442695
        %v1556 = vpow.pop %v1555
        %v1557 = vmul.f32 %v1526, 1.442695
        %v1558 = vpow.pop %v1557
        %v1559 = vsel %vm886, %v1528, 0.0
        %1560 = vadd.xlane.f32.xlu0 %v1559
        %v1561 = vpop.xlane.xlu0 %1560
        %v1562 = vsel %vm886, %v1530, 0.0
        %1563 = vadd.xlane.f32.xlu0 %v1562
        %v1564 = vpop.xlane.xlu0 %1563
        %v1565 = vsel %vm886, %v1532, 0.0
        %1566 = vadd.xlane.f32.xlu0 %v1565
        %v1567 = vpop.xlane.xlu0 %1566
        %v1568 = vsel %vm886, %v1534, 0.0
        %1569 = vadd.xlane.f32.xlu0 %v1568
        %v1570 = vpop.xlane.xlu0 %1569
        %v1571 = vsel %vm886, %v1536, 0.0
        %1572 = vadd.xlane.f32.xlu0 %v1571
        %v1573 = vpop.xlane.xlu0 %1572
        %v1574 = vsel %vm886, %v1538, 0.0
        %1575 = vadd.xlane.f32.xlu0 %v1574
        %v1576 = vpop.xlane.xlu0 %1575
        %v1577 = vsel %vm886, %v1540, 0.0
        %1578 = vadd.xlane.f32.xlu0 %v1577
        %v1579 = vpop.xlane.xlu0 %1578
        %v1580 = vsel %vm886, %v1542, 0.0
        %1581 = vadd.xlane.f32.xlu0 %v1580
        %v1582 = vpop.xlane.xlu0 %1581
        %v1583 = vsel %vm886, %v1544, 0.0
        %1584 = vadd.xlane.f32.xlu0 %v1583
        %v1585 = vpop.xlane.xlu0 %1584
        %v1586 = vsel %vm886, %v1546, 0.0
        %1587 = vadd.xlane.f32.xlu0 %v1586
        %v1588 = vpop.xlane.xlu0 %1587
        %v1589 = vsel %vm886, %v1548, 0.0
        %1590 = vadd.xlane.f32.xlu0 %v1589
        %v1591 = vpop.xlane.xlu0 %1590
        %v1592 = vsel %vm886, %v1550, 0.0
        %1593 = vadd.xlane.f32.xlu0 %v1592
        %v1594 = vpop.xlane.xlu0 %1593
        %v1595 = vsel %vm886, %v1552, 0.0
        %1596 = vadd.xlane.f32.xlu0 %v1595
        %v1597 = vpop.xlane.xlu0 %1596
        %v1598 = vsel %vm886, %v1554, 0.0
        %1599 = vadd.xlane.f32.xlu0 %v1598
        %v1600 = vpop.xlane.xlu0 %1599
        %v1601 = vsel %vm886, %v1556, 0.0
        %1602 = vadd.xlane.f32.xlu0 %v1601
        %v1603 = vpop.xlane.xlu0 %1602
        %v1604 = vsel %vm886, %v1558, 0.0
        %1605 = vadd.xlane.f32.xlu0 %v1604
        %v1606 = vpop.xlane.xlu0 %1605
        %v1607 = vrcp.pop %v1561
        %v1608 = vrcp.pop %v1564
        %v1609 = vrcp.pop %v1567
        %v1610 = vrcp.pop %v1570
        %v1611 = vrcp.pop %v1573
        %v1612 = vrcp.pop %v1576
        %v1613 = vrcp.pop %v1579
        %v1614 = vrcp.pop %v1582
        %v1615 = vrcp.pop %v1585
        %v1616 = vrcp.pop %v1588
        %v1617 = vrcp.pop %v1591
        %v1618 = vrcp.pop %v1594
        %v1619 = vrcp.pop %v1597
        %v1620 = vrcp.pop %v1600
        %v1621 = vrcp.pop %v1603
        %v1622 = vrcp.pop %v1606
        %v1623 = vmul.f32 %v1528, %v1607
        %v1624 = vmul.f32 %v1530, %v1608
        %v1625 = vmul.f32 %v1532, %v1609
        %v1626 = vmul.f32 %v1534, %v1610
        %v1627 = vmul.f32 %v1536, %v1611
        %v1628 = vmul.f32 %v1538, %v1612
        %v1629 = vmul.f32 %v1540, %v1613
        %v1630 = vmul.f32 %v1542, %v1614
        %v1631 = vmul.f32 %v1544, %v1615
        %v1632 = vmul.f32 %v1546, %v1616
        %v1633 = vmul.f32 %v1548, %v1617
        %v1634 = vmul.f32 %v1550, %v1618
        %v1635 = vmul.f32 %v1552, %v1619
        %v1636 = vmul.f32 %v1554, %v1620
        %v1637 = vmul.f32 %v1556, %v1621
        %v1638 = vmul.f32 %v1558, %v1622
        %v1639 = vpack.c.bf16 %v1624, %v1623
        %v1640 = vpack.c.bf16 %v1626, %v1625
        %v1641 = vpack.c.bf16 %v1628, %v1627
        %v1642 = vpack.c.bf16 %v1630, %v1629
        %v1643 = vpack.c.bf16 %v1632, %v1631
        %v1644 = vpack.c.bf16 %v1634, %v1633
        %v1645 = vpack.c.bf16 %v1636, %v1635
        %v1646 = vpack.c.bf16 %v1638, %v1637
        %1651 = vrot.lane.b32.xlu0 %v699, 96
        %v1652 = vpop.permute.xlu0 %1651
        %1653 = vrot.lane.b32.xlu0 %v700, 96
        %v1654 = vpop.permute.xlu0 %1653
        %1655 = vrot.lane.b32.xlu0 %v701, 96
        %v1656 = vpop.permute.xlu0 %1655
        %1657 = vrot.lane.b32.xlu0 %v702, 96
        %v1658 = vpop.permute.xlu0 %1657
        %v1664 = vsel %vm886, %v1639, 0
        %v1667 = vsel %vm886, %v1640, 0
        %v1670 = vsel %vm886, %v1641, 0
        %v1673 = vsel %vm886, %v1642, 0
        %1675 = vmatprep.subr.bf16.mxu0 0
        %1676 = vmatpush1.bf16.msra.mxu0 0
        %1677 = vmatprep.subr.bf16.mxu0 0
        %1678 = vmatpush1.bf16.msra.mxu0 0
        %1679 = vmatprep.subr.bf16.mxu0 0
        %1680 = vmatpush1.bf16.msra.mxu0 0
        %1681 = vmatprep.subr.bf16.mxu0 0
        %1682 = vmatpush1.bf16.msra.mxu0 0
        %1683 = vmatprep.subr.bf16.mxu0 0
        %1684 = vmatpush1.bf16.msra.mxu0 %v1658
        %1685 = vmatprep.subr.bf16.mxu0 0
        %1686 = vmatpush1.bf16.msra.mxu0 %v1656
        %1687 = vmatprep.subr.bf16.mxu0 0
        %1688 = vmatpush1.bf16.msra.mxu0 %v1654
        %1689 = vmatprep.subr.bf16.mxu0 0
        %1690 = vmatpush1.bf16.msra.mxu0 %v1652
        %1691 = vmatprep.subr.bf16.mxu0 0
        %1692 = vmatpush2.bf16.msra.mxu0 0
        %1693 = vmatprep.subr.bf16.mxu0 0
        %1694 = vmatpush2.bf16.msra.mxu0 0
        %1695 = vmatprep.subr.bf16.mxu0 0
        %1696 = vmatpush2.bf16.msra.mxu0 0
        %1697 = vmatprep.subr.bf16.mxu0 0
        %1698 = vmatpush2.bf16.msra.mxu0 0
        %1699 = vmatprep.subr.bf16.mxu0 0
        %1700 = vmatpush2.bf16.msra.mxu0 0
        %1701 = vmatprep.subr.bf16.mxu0 0
        %1702 = vmatpush2.bf16.msra.mxu0 0
        %1703 = vmatprep.subr.bf16.mxu0 0
        %1704 = vmatpush2.bf16.msra.mxu0 0
        %1705 = vmatprep.subr.bf16.mxu0 0
        %1706 = vmatpush2.bf16.msra.mxu0 0
        %1707 = vmatprep.mubr.bf16.mxu0 0
        %1708 = vmatmul.mubr.bf16.gmra.mxu0 %v1664
        %v1709 = vpop.f32.mrf.mxu0
        %v1710 = vadd.f32 0.0, %v1709
        %v1711 = vpop.f32.mrf.mxu0
        %v1712 = vpop.f32.mrf.mxu0
        %v1713 = vadd.f32 0.0, %v1712
        %v1714 = vpop.f32.mrf.mxu0
        %1715 = vmatprep.mubr.bf16.mxu0 0
        %1716 = vmatmul.mubr.bf16.gmra.mxu0 %v1667
        %v1717 = vpop.f32.mrf.mxu0
        %v1718 = vadd.f32 0.0, %v1717
        %v1719 = vpop.f32.mrf.mxu0
        %v1720 = vpop.f32.mrf.mxu0
        %v1721 = vadd.f32 0.0, %v1720
        %v1722 = vpop.f32.mrf.mxu0
        %1723 = vmatprep.mubr.bf16.mxu0 0
        %1724 = vmatmul.mubr.bf16.gmra.mxu0 %v1670
        %v1725 = vpop.f32.mrf.mxu0
        %v1726 = vadd.f32 0.0, %v1725
        %v1727 = vpop.f32.mrf.mxu0
        %v1728 = vpop.f32.mrf.mxu0
        %v1729 = vadd.f32 0.0, %v1728
        %v1730 = vpop.f32.mrf.mxu0
        %1731 = vmatprep.mubr.bf16.mxu0 0
        %1732 = vmatmul.mubr.bf16.gmra.mxu0 %v1673
        %v1733 = vpop.f32.mrf.mxu0
        %v1734 = vadd.f32 0.0, %v1733
        %v1735 = vpop.f32.mrf.mxu0
        %v1736 = vpop.f32.mrf.mxu0
        %v1737 = vadd.f32 0.0, %v1736
        %v1738 = vpop.f32.mrf.mxu0
        %1739 = vdwg.mxu0
        %1744 = vrot.lane.b32.xlu0 %v703, 96
        %v1745 = vpop.permute.xlu0 %1744
        %1746 = vrot.lane.b32.xlu0 %v704, 96
        %v1747 = vpop.permute.xlu0 %1746
        %1748 = vrot.lane.b32.xlu0 %v705, 96
        %v1749 = vpop.permute.xlu0 %1748
        %1750 = vrot.lane.b32.xlu0 %v706, 96
        %v1751 = vpop.permute.xlu0 %1750
        %v1757 = vsel %vm886, %v1643, 0
        %v1760 = vsel %vm886, %v1644, 0
        %v1763 = vsel %vm886, %v1645, 0
        %v1766 = vsel %vm886, %v1646, 0
        %1768 = vmatprep.subr.bf16.mxu0 0
        %1769 = vmatpush1.bf16.msra.mxu0 0
        %1770 = vmatprep.subr.bf16.mxu0 0
        %1771 = vmatpush1.bf16.msra.mxu0 0
        %1772 = vmatprep.subr.bf16.mxu0 0
        %1773 = vmatpush1.bf16.msra.mxu0 0
        %1774 = vmatprep.subr.bf16.mxu0 0
        %1775 = vmatpush1.bf16.msra.mxu0 0
        %1776 = vmatprep.subr.bf16.mxu0 0
        %1777 = vmatpush1.bf16.msra.mxu0 %v1751
        %1778 = vmatprep.subr.bf16.mxu0 0
        %1779 = vmatpush1.bf16.msra.mxu0 %v1749
        %1780 = vmatprep.subr.bf16.mxu0 0
        %1781 = vmatpush1.bf16.msra.mxu0 %v1747
        %1782 = vmatprep.subr.bf16.mxu0 0
        %1783 = vmatpush1.bf16.msra.mxu0 %v1745
        %1784 = vmatprep.subr.bf16.mxu0 0
        %1785 = vmatpush2.bf16.msra.mxu0 0
        %1786 = vmatprep.subr.bf16.mxu0 0
        %1787 = vmatpush2.bf16.msra.mxu0 0
        %1788 = vmatprep.subr.bf16.mxu0 0
        %1789 = vmatpush2.bf16.msra.mxu0 0
        %1790 = vmatprep.subr.bf16.mxu0 0
        %1791 = vmatpush2.bf16.msra.mxu0 0
        %1792 = vmatprep.subr.bf16.mxu0 0
        %1793 = vmatpush2.bf16.msra.mxu0 0
        %1794 = vmatprep.subr.bf16.mxu0 0
        %1795 = vmatpush2.bf16.msra.mxu0 0
        %1796 = vmatprep.subr.bf16.mxu0 0
        %1797 = vmatpush2.bf16.msra.mxu0 0
        %1798 = vmatprep.subr.bf16.mxu0 0
        %1799 = vmatpush2.bf16.msra.mxu0 0
        %1800 = vmatprep.mubr.bf16.mxu0 0
        %1801 = vmatmul.mubr.bf16.gmra.mxu0 %v1757
        %v1802 = vpop.f32.mrf.mxu0
        %v1803 = vadd.f32 0.0, %v1802
        %v1804 = vpop.f32.mrf.mxu0
        %v1805 = vpop.f32.mrf.mxu0
        %v1806 = vadd.f32 0.0, %v1805
        %v1807 = vpop.f32.mrf.mxu0
        %1808 = vmatprep.mubr.bf16.mxu0 0
        %1809 = vmatmul.mubr.bf16.gmra.mxu0 %v1760
        %v1810 = vpop.f32.mrf.mxu0
        %v1811 = vadd.f32 0.0, %v1810
        %v1812 = vpop.f32.mrf.mxu0
        %v1813 = vpop.f32.mrf.mxu0
        %v1814 = vadd.f32 0.0, %v1813
        %v1815 = vpop.f32.mrf.mxu0
        %1816 = vmatprep.mubr.bf16.mxu0 0
        %1817 = vmatmul.mubr.bf16.gmra.mxu0 %v1763
        %v1818 = vpop.f32.mrf.mxu0
        %v1819 = vadd.f32 0.0, %v1818
        %v1820 = vpop.f32.mrf.mxu0
        %v1821 = vpop.f32.mrf.mxu0
        %v1822 = vadd.f32 0.0, %v1821
        %v1823 = vpop.f32.mrf.mxu0
        %1824 = vmatprep.mubr.bf16.mxu0 0
        %1825 = vmatmul.mubr.bf16.gmra.mxu0 %v1766
        %v1826 = vpop.f32.mrf.mxu0
        %v1827 = vadd.f32 0.0, %v1826
        %v1828 = vpop.f32.mrf.mxu0
        %v1829 = vpop.f32.mrf.mxu0
        %v1830 = vadd.f32 0.0, %v1829
        %v1831 = vpop.f32.mrf.mxu0
        %1832 = vdwg.mxu0
        %v1833 = vpack.c.bf16 %v1713, %v1710
        %v1834 = vpack.c.bf16 %v1721, %v1718
        %v1835 = vpack.c.bf16 %v1729, %v1726
        %v1836 = vpack.c.bf16 %v1737, %v1734
        %v1837 = vpack.c.bf16 %v1806, %v1803
        %v1838 = vpack.c.bf16 %v1814, %v1811
        %v1839 = vpack.c.bf16 %v1822, %v1819
        %v1840 = vpack.c.bf16 %v1830, %v1827
        %v1841 = vld [vmem:[%s3 + $0x10] sm:$0xf]
        %v1842 = vld [vmem:[%s3 + $0x14] sm:$0xf]
        %v1843 = vld [vmem:[%s3 + $0x18] sm:$0xf]
        %v1844 = vld [vmem:[%s3 + $0x1c] sm:$0xf]
        %v1849 = vunpack.c.l.b16 %v1841
        %v1850 = vunpack.c.l.b16 %v1842
        %v1851 = vunpack.c.l.b16 %v1843
        %v1852 = vunpack.c.l.b16 %v1844
        %v1853 = vpack.c.b16 %v1850, %v1849
        %v1854 = vpack.c.b16 %v1852, %v1851
        %v1858 = vsel %vm707, %v1833, 0
        %v1861 = vsel %vm707, %v1834, 0
        %v1864 = vsel %vm707, %v1835, 0
        %v1867 = vsel %vm707, %v1836, 0
        %v1870 = vsel %vm707, %v1837, 0
        %v1873 = vsel %vm707, %v1838, 0
        %v1876 = vsel %vm707, %v1839, 0
        %v1879 = vsel %vm707, %v1840, 0
        %1881 = vmatprep.subr.bf16.mxu0 0
        %1882 = vmatpush1.bf16.msra.mxu0 0
        %1883 = vmatprep.subr.bf16.mxu0 0
        %1884 = vmatpush1.bf16.msra.mxu0 0
        %1885 = vmatprep.subr.bf16.mxu0 0
        %1886 = vmatpush1.bf16.msra.mxu0 0
        %1887 = vmatprep.subr.bf16.mxu0 0
        %1888 = vmatpush1.bf16.msra.mxu0 0
        %1889 = vmatprep.subr.bf16.mxu0 0
        %1890 = vmatpush1.bf16.msra.mxu0 0
        %1891 = vmatprep.subr.bf16.mxu0 0
        %1892 = vmatpush1.bf16.msra.mxu0 0
        %1893 = vmatprep.subr.bf16.mxu0 0
        %1894 = vmatpush1.bf16.msra.mxu0 %v1854
        %1895 = vmatprep.subr.bf16.mxu0 0
        %1896 = vmatpush1.bf16.msra.mxu0 %v1853
        %1897 = vmatprep.subr.bf16.mxu0 0
        %1898 = vmatpush2.bf16.msra.mxu0 0
        %1899 = vmatprep.subr.bf16.mxu0 0
        %1900 = vmatpush2.bf16.msra.mxu0 0
        %1901 = vmatprep.subr.bf16.mxu0 0
        %1902 = vmatpush2.bf16.msra.mxu0 0
        %1903 = vmatprep.subr.bf16.mxu0 0
        %1904 = vmatpush2.bf16.msra.mxu0 0
        %1905 = vmatprep.subr.bf16.mxu0 0
        %1906 = vmatpush2.bf16.msra.mxu0 0
        %1907 = vmatprep.subr.bf16.mxu0 0
        %1908 = vmatpush2.bf16.msra.mxu0 0
        %1909 = vmatprep.subr.bf16.mxu0 0
        %1910 = vmatpush2.bf16.msra.mxu0 0
        %1911 = vmatprep.subr.bf16.mxu0 0
        %1912 = vmatpush2.bf16.msra.mxu0 0
        %1913 = vmatprep.mubr.bf16.mxu0 0
        %1914 = vmatmul.mubr.bf16.gmra.mxu0 %v1858
        %v1915 = vpop.f32.mrf.mxu0
        %v1916 = vadd.f32 0.0, %v1915
        %v1917 = vpop.f32.mrf.mxu0
        %v1918 = vpop.f32.mrf.mxu0
        %v1919 = vadd.f32 0.0, %v1918
        %v1920 = vpop.f32.mrf.mxu0
        %1921 = vmatprep.mubr.bf16.mxu0 0
        %1922 = vmatmul.mubr.bf16.gmra.mxu0 %v1861
        %v1923 = vpop.f32.mrf.mxu0
        %v1924 = vadd.f32 0.0, %v1923
        %v1925 = vpop.f32.mrf.mxu0
        %v1926 = vpop.f32.mrf.mxu0
        %v1927 = vadd.f32 0.0, %v1926
        %v1928 = vpop.f32.mrf.mxu0
        %1929 = vmatprep.mubr.bf16.mxu0 0
        %1930 = vmatmul.mubr.bf16.gmra.mxu0 %v1864
        %v1931 = vpop.f32.mrf.mxu0
        %v1932 = vadd.f32 0.0, %v1931
        %v1933 = vpop.f32.mrf.mxu0
        %v1934 = vpop.f32.mrf.mxu0
        %v1935 = vadd.f32 0.0, %v1934
        %v1936 = vpop.f32.mrf.mxu0
        %1937 = vmatprep.mubr.bf16.mxu0 0
        %1938 = vmatmul.mubr.bf16.gmra.mxu0 %v1867
        %v1939 = vpop.f32.mrf.mxu0
        %v1940 = vadd.f32 0.0, %v1939
        %v1941 = vpop.f32.mrf.mxu0
        %v1942 = vpop.f32.mrf.mxu0
        %v1943 = vadd.f32 0.0, %v1942
        %v1944 = vpop.f32.mrf.mxu0
        %1945 = vmatprep.mubr.bf16.mxu0 0
        %1946 = vmatmul.mubr.bf16.gmra.mxu0 %v1870
        %v1947 = vpop.f32.mrf.mxu0
        %v1948 = vadd.f32 0.0, %v1947
        %v1949 = vpop.f32.mrf.mxu0
        %v1950 = vpop.f32.mrf.mxu0
        %v1951 = vadd.f32 0.0, %v1950
        %v1952 = vpop.f32.mrf.mxu0
        %1953 = vmatprep.mubr.bf16.mxu0 0
        %1954 = vmatmul.mubr.bf16.gmra.mxu0 %v1873
        %v1955 = vpop.f32.mrf.mxu0
        %v1956 = vadd.f32 0.0, %v1955
        %v1957 = vpop.f32.mrf.mxu0
        %v1958 = vpop.f32.mrf.mxu0
        %v1959 = vadd.f32 0.0, %v1958
        %v1960 = vpop.f32.mrf.mxu0
        %1961 = vmatprep.mubr.bf16.mxu0 0
        %1962 = vmatmul.mubr.bf16.gmra.mxu0 %v1876
        %v1963 = vpop.f32.mrf.mxu0
        %v1964 = vadd.f32 0.0, %v1963
        %v1965 = vpop.f32.mrf.mxu0
        %v1966 = vpop.f32.mrf.mxu0
        %v1967 = vadd.f32 0.0, %v1966
        %v1968 = vpop.f32.mrf.mxu0
        %1969 = vmatprep.mubr.bf16.mxu0 0
        %1970 = vmatmul.mubr.bf16.gmra.mxu0 %v1879
        %v1971 = vpop.f32.mrf.mxu0
        %v1972 = vadd.f32 0.0, %v1971
        %v1973 = vpop.f32.mrf.mxu0
        %v1974 = vpop.f32.mrf.mxu0
        %v1975 = vadd.f32 0.0, %v1974
        %v1976 = vpop.f32.mrf.mxu0
        %1977 = vdwg.mxu0
        %v1982 = vunpack.c.l.b16 %v1233
        %v1983 = vunpack.c.l.b16 %v1234
        %v1984 = vunpack.c.l.b16 %v1235
        %v1985 = vunpack.c.l.b16 %v1236
        %v1986 = vpack.c.b16 %v1983, %v1982
        %v1987 = vpack.c.b16 %v1985, %v1984
        %v1991 = vsel %vm707, %v1225, 0
        %v1994 = vsel %vm707, %v1226, 0
        %v1997 = vsel %vm707, %v1227, 0
        %v2000 = vsel %vm707, %v1228, 0
        %v2003 = vsel %vm707, %v1229, 0
        %v2006 = vsel %vm707, %v1230, 0
        %v2009 = vsel %vm707, %v1231, 0
        %v2012 = vsel %vm707, %v1232, 0
        %2014 = vmatprep.subr.bf16.mxu0 0
        %2015 = vmatpush1.bf16.msra.mxu0 0
        %2016 = vmatprep.subr.bf16.mxu0 0
        %2017 = vmatpush1.bf16.msra.mxu0 0
        %2018 = vmatprep.subr.bf16.mxu0 0
        %2019 = vmatpush1.bf16.msra.mxu0 0
        %2020 = vmatprep.subr.bf16.mxu0 0
        %2021 = vmatpush1.bf16.msra.mxu0 0
        %2022 = vmatprep.subr.bf16.mxu0 0
        %2023 = vmatpush1.bf16.msra.mxu0 0
        %2024 = vmatprep.subr.bf16.mxu0 0
        %2025 = vmatpush1.bf16.msra.mxu0 0
        %2026 = vmatprep.subr.bf16.mxu0 0
        %2027 = vmatpush1.bf16.msra.mxu0 %v1987
        %2028 = vmatprep.subr.bf16.mxu0 0
        %2029 = vmatpush1.bf16.msra.mxu0 %v1986
        %2030 = vmatprep.subr.bf16.mxu0 0
        %2031 = vmatpush2.bf16.msra.mxu0 0
        %2032 = vmatprep.subr.bf16.mxu0 0
        %2033 = vmatpush2.bf16.msra.mxu0 0
        %2034 = vmatprep.subr.bf16.mxu0 0
        %2035 = vmatpush2.bf16.msra.mxu0 0
        %2036 = vmatprep.subr.bf16.mxu0 0
        %2037 = vmatpush2.bf16.msra.mxu0 0
        %2038 = vmatprep.subr.bf16.mxu0 0
        %2039 = vmatpush2.bf16.msra.mxu0 0
        %2040 = vmatprep.subr.bf16.mxu0 0
        %2041 = vmatpush2.bf16.msra.mxu0 0
        %2042 = vmatprep.subr.bf16.mxu0 0
        %2043 = vmatpush2.bf16.msra.mxu0 0
        %2044 = vmatprep.subr.bf16.mxu0 0
        %2045 = vmatpush2.bf16.msra.mxu0 0
        %2046 = vmatprep.mubr.bf16.mxu0 0
        %2047 = vmatmul.mubr.bf16.gmra.mxu0 %v1991
        %v2048 = vpop.f32.mrf.mxu0
        %v2049 = vadd.f32 %v1916, %v2048
        %v2050 = vpop.f32.mrf.mxu0
        %v2051 = vpop.f32.mrf.mxu0
        %v2052 = vadd.f32 %v1919, %v2051
        %v2053 = vpop.f32.mrf.mxu0
        %2054 = vmatprep.mubr.bf16.mxu0 0
        %2055 = vmatmul.mubr.bf16.gmra.mxu0 %v1994
        %v2056 = vpop.f32.mrf.mxu0
        %v2057 = vadd.f32 %v1924, %v2056
        %v2058 = vpop.f32.mrf.mxu0
        %v2059 = vpop.f32.mrf.mxu0
        %v2060 = vadd.f32 %v1927, %v2059
        %v2061 = vpop.f32.mrf.mxu0
        %2062 = vmatprep.mubr.bf16.mxu0 0
        %2063 = vmatmul.mubr.bf16.gmra.mxu0 %v1997
        %v2064 = vpop.f32.mrf.mxu0
        %v2065 = vadd.f32 %v1932, %v2064
        %v2066 = vpop.f32.mrf.mxu0
        %v2067 = vpop.f32.mrf.mxu0
        %v2068 = vadd.f32 %v1935, %v2067
        %v2069 = vpop.f32.mrf.mxu0
        %2070 = vmatprep.mubr.bf16.mxu0 0
        %2071 = vmatmul.mubr.bf16.gmra.mxu0 %v2000
        %v2072 = vpop.f32.mrf.mxu0
        %v2073 = vadd.f32 %v1940, %v2072
        %v2074 = vpop.f32.mrf.mxu0
        %v2075 = vpop.f32.mrf.mxu0
        %v2076 = vadd.f32 %v1943, %v2075
        %v2077 = vpop.f32.mrf.mxu0
        %2078 = vmatprep.mubr.bf16.mxu0 0
        %2079 = vmatmul.mubr.bf16.gmra.mxu0 %v2003
        %v2080 = vpop.f32.mrf.mxu0
        %v2081 = vadd.f32 %v1948, %v2080
        %v2082 = vpop.f32.mrf.mxu0
        %v2083 = vpop.f32.mrf.mxu0
        %v2084 = vadd.f32 %v1951, %v2083
        %v2085 = vpop.f32.mrf.mxu0
        %2086 = vmatprep.mubr.bf16.mxu0 0
        %2087 = vmatmul.mubr.bf16.gmra.mxu0 %v2006
        %v2088 = vpop.f32.mrf.mxu0
        %v2089 = vadd.f32 %v1956, %v2088
        %v2090 = vpop.f32.mrf.mxu0
        %v2091 = vpop.f32.mrf.mxu0
        %v2092 = vadd.f32 %v1959, %v2091
        %v2093 = vpop.f32.mrf.mxu0
        %2094 = vmatprep.mubr.bf16.mxu0 0
        %2095 = vmatmul.mubr.bf16.gmra.mxu0 %v2009
        %v2096 = vpop.f32.mrf.mxu0
        %v2097 = vadd.f32 %v1964, %v2096
        %v2098 = vpop.f32.mrf.mxu0
        %v2099 = vpop.f32.mrf.mxu0
        %v2100 = vadd.f32 %v1967, %v2099
        %v2101 = vpop.f32.mrf.mxu0
        %2102 = vmatprep.mubr.bf16.mxu0 0
        %2103 = vmatmul.mubr.bf16.gmra.mxu0 %v2012
        %v2104 = vpop.f32.mrf.mxu0
        %v2105 = vadd.f32 %v1972, %v2104
        %v2106 = vpop.f32.mrf.mxu0
        %v2107 = vpop.f32.mrf.mxu0
        %v2108 = vadd.f32 %v1975, %v2107
        %v2109 = vpop.f32.mrf.mxu0
        %2110 = vdwg.mxu0
        %2111 = vrot.lane.b32.xlu0 %v683, 64
        %v2112 = vpop.permute.xlu0 %2111
        %2113 = vrot.lane.b32.xlu0 %v684, 64
        %v2114 = vpop.permute.xlu0 %2113
        %2115 = vrot.lane.b32.xlu0 %v685, 64
        %v2116 = vpop.permute.xlu0 %2115
        %2117 = vrot.lane.b32.xlu0 %v686, 64
        %v2118 = vpop.permute.xlu0 %2117
        %2119 = vrot.lane.b32.xlu0 %v691, 64
        %v2120 = vpop.permute.xlu0 %2119
        %2121 = vrot.lane.b32.xlu0 %v692, 64
        %v2122 = vpop.permute.xlu0 %2121
        %2123 = vrot.lane.b32.xlu0 %v693, 64
        %v2124 = vpop.permute.xlu0 %2123
        %2125 = vrot.lane.b32.xlu0 %v694, 64
        %v2126 = vpop.permute.xlu0 %2125
        %v2128 = vsel %vm707, %v2112, 0
        %v2131 = vsel %vm707, %v2114, 0
        %v2134 = vsel %vm707, %v2116, 0
        %v2137 = vsel %vm707, %v2118, 0
        %v2140 = vsel %vm707, %v2120, 0
        %v2143 = vsel %vm707, %v2122, 0
        %v2146 = vsel %vm707, %v2124, 0
        %v2149 = vsel %vm707, %v2126, 0
        %2151 = vmatprep.subr.bf16.mxu0 0
        %2152 = vmatpush1.bf16.xpose.msra.mxu0 0
        %2153 = vmatprep.subr.bf16.mxu0 0
        %2154 = vmatpush1.bf16.xpose.msra.mxu0 0
        %2155 = vmatprep.subr.bf16.mxu0 0
        %2156 = vmatpush1.bf16.xpose.msra.mxu0 0
        %2157 = vmatprep.subr.bf16.mxu0 0
        %2158 = vmatpush1.bf16.xpose.msra.mxu0 0
        %2159 = vmatprep.subr.bf16.mxu0 0
        %2160 = vmatpush1.bf16.xpose.msra.mxu0 %v2149
        %2161 = vmatprep.subr.bf16.mxu0 0
        %2162 = vmatpush1.bf16.xpose.msra.mxu0 %v2146
        %2163 = vmatprep.subr.bf16.mxu0 0
        %2164 = vmatpush1.bf16.xpose.msra.mxu0 %v2143
        %2165 = vmatprep.subr.bf16.mxu0 0
        %2166 = vmatpush1.bf16.xpose.msra.mxu0 %v2140
        %2167 = vmatprep.subr.bf16.mxu0 0
        %2168 = vmatpush2.bf16.xpose.msra.mxu0 0
        %2169 = vmatprep.subr.bf16.mxu0 0
        %2170 = vmatpush2.bf16.xpose.msra.mxu0 0
        %2171 = vmatprep.subr.bf16.mxu0 0
        %2172 = vmatpush2.bf16.xpose.msra.mxu0 0
        %2173 = vmatprep.subr.bf16.mxu0 0
        %2174 = vmatpush2.bf16.xpose.msra.mxu0 0
        %2175 = vmatprep.subr.bf16.mxu0 0
        %2176 = vmatpush2.bf16.xpose.msra.mxu0 0
        %2177 = vmatprep.subr.bf16.mxu0 0
        %2178 = vmatpush2.bf16.xpose.msra.mxu0 0
        %2179 = vmatprep.subr.bf16.mxu0 0
        %2180 = vmatpush2.bf16.xpose.msra.mxu0 0
        %2181 = vmatprep.subr.bf16.mxu0 0
        %2182 = vmatpush2.bf16.xpose.msra.mxu0 0
        %2183 = vmatprep.mubr.bf16.mxu0 0
        %2184 = vmatmul.mubr.bf16.gmra.mxu0 %v2128
        %v2185 = vpop.f32.mrf.mxu0
        %v2186 = vadd.f32 0.0, %v2185
        %v2187 = vpop.f32.mrf.mxu0
        %v2188 = vpop.f32.mrf.mxu0
        %v2189 = vadd.f32 0.0, %v2188
        %v2190 = vpop.f32.mrf.mxu0
        %2191 = vmatprep.mubr.bf16.mxu0 0
        %2192 = vmatmul.mubr.bf16.gmra.mxu0 %v2131
        %v2193 = vpop.f32.mrf.mxu0
        %v2194 = vadd.f32 0.0, %v2193
        %v2195 = vpop.f32.mrf.mxu0
        %v2196 = vpop.f32.mrf.mxu0
        %v2197 = vadd.f32 0.0, %v2196
        %v2198 = vpop.f32.mrf.mxu0
        %2199 = vmatprep.mubr.bf16.mxu0 0
        %2200 = vmatmul.mubr.bf16.gmra.mxu0 %v2134
        %v2201 = vpop.f32.mrf.mxu0
        %v2202 = vadd.f32 0.0, %v2201
        %v2203 = vpop.f32.mrf.mxu0
        %v2204 = vpop.f32.mrf.mxu0
        %v2205 = vadd.f32 0.0, %v2204
        %v2206 = vpop.f32.mrf.mxu0
        %2207 = vmatprep.mubr.bf16.mxu0 0
        %2208 = vmatmul.mubr.bf16.gmra.mxu0 %v2137
        %v2209 = vpop.f32.mrf.mxu0
        %v2210 = vadd.f32 0.0, %v2209
        %v2211 = vpop.f32.mrf.mxu0
        %v2212 = vpop.f32.mrf.mxu0
        %v2213 = vadd.f32 0.0, %v2212
        %v2214 = vpop.f32.mrf.mxu0
        %2215 = vdwg.mxu0
        %2216 = vrot.lane.b32.xlu0 %v687, 64
        %v2217 = vpop.permute.xlu0 %2216
        %2218 = vrot.lane.b32.xlu0 %v688, 64
        %v2219 = vpop.permute.xlu0 %2218
        %2220 = vrot.lane.b32.xlu0 %v689, 64
        %v2221 = vpop.permute.xlu0 %2220
        %2222 = vrot.lane.b32.xlu0 %v690, 64
        %v2223 = vpop.permute.xlu0 %2222
        %2224 = vrot.lane.b32.xlu0 %v695, 64
        %v2225 = vpop.permute.xlu0 %2224
        %2226 = vrot.lane.b32.xlu0 %v696, 64
        %v2227 = vpop.permute.xlu0 %2226
        %2228 = vrot.lane.b32.xlu0 %v697, 64
        %v2229 = vpop.permute.xlu0 %2228
        %2230 = vrot.lane.b32.xlu0 %v698, 64
        %v2231 = vpop.permute.xlu0 %2230
        %v2233 = vsel %vm707, %v2217, 0
        %v2236 = vsel %vm707, %v2219, 0
        %v2239 = vsel %vm707, %v2221, 0
        %v2242 = vsel %vm707, %v2223, 0
        %v2245 = vsel %vm707, %v2225, 0
        %v2248 = vsel %vm707, %v2227, 0
        %v2251 = vsel %vm707, %v2229, 0
        %v2254 = vsel %vm707, %v2231, 0
        %2256 = vmatprep.subr.bf16.mxu0 0
        %2257 = vmatpush1.bf16.xpose.msra.mxu0 0
        %2258 = vmatprep.subr.bf16.mxu0 0
        %2259 = vmatpush1.bf16.xpose.msra.mxu0 0
        %2260 = vmatprep.subr.bf16.mxu0 0
        %2261 = vmatpush1.bf16.xpose.msra.mxu0 0
        %2262 = vmatprep.subr.bf16.mxu0 0
        %2263 = vmatpush1.bf16.xpose.msra.mxu0 0
        %2264 = vmatprep.subr.bf16.mxu0 0
        %2265 = vmatpush1.bf16.xpose.msra.mxu0 %v2254
        %2266 = vmatprep.subr.bf16.mxu0 0
        %2267 = vmatpush1.bf16.xpose.msra.mxu0 %v2251
        %2268 = vmatprep.subr.bf16.mxu0 0
        %2269 = vmatpush1.bf16.xpose.msra.mxu0 %v2248
        %2270 = vmatprep.subr.bf16.mxu0 0
        %2271 = vmatpush1.bf16.xpose.msra.mxu0 %v2245
        %2272 = vmatprep.subr.bf16.mxu0 0
        %2273 = vmatpush2.bf16.xpose.msra.mxu0 0
        %2274 = vmatprep.subr.bf16.mxu0 0
        %2275 = vmatpush2.bf16.xpose.msra.mxu0 0
        %2276 = vmatprep.subr.bf16.mxu0 0
        %2277 = vmatpush2.bf16.xpose.msra.mxu0 0
        %2278 = vmatprep.subr.bf16.mxu0 0
        %2279 = vmatpush2.bf16.xpose.msra.mxu0 0
        %2280 = vmatprep.subr.bf16.mxu0 0
        %2281 = vmatpush2.bf16.xpose.msra.mxu0 0
        %2282 = vmatprep.subr.bf16.mxu0 0
        %2283 = vmatpush2.bf16.xpose.msra.mxu0 0
        %2284 = vmatprep.subr.bf16.mxu0 0
        %2285 = vmatpush2.bf16.xpose.msra.mxu0 0
        %2286 = vmatprep.subr.bf16.mxu0 0
        %2287 = vmatpush2.bf16.xpose.msra.mxu0 0
        %2288 = vmatprep.mubr.bf16.mxu0 0
        %2289 = vmatmul.mubr.bf16.gmra.mxu0 %v2233
        %v2290 = vpop.f32.mrf.mxu0
        %v2291 = vadd.f32 0.0, %v2290
        %v2292 = vpop.f32.mrf.mxu0
        %v2293 = vpop.f32.mrf.mxu0
        %v2294 = vadd.f32 0.0, %v2293
        %v2295 = vpop.f32.mrf.mxu0
        %2296 = vmatprep.mubr.bf16.mxu0 0
        %2297 = vmatmul.mubr.bf16.gmra.mxu0 %v2236
        %v2298 = vpop.f32.mrf.mxu0
        %v2299 = vadd.f32 0.0, %v2298
        %v2300 = vpop.f32.mrf.mxu0
        %v2301 = vpop.f32.mrf.mxu0
        %v2302 = vadd.f32 0.0, %v2301
        %v2303 = vpop.f32.mrf.mxu0
        %2304 = vmatprep.mubr.bf16.mxu0 0
        %2305 = vmatmul.mubr.bf16.gmra.mxu0 %v2239
        %v2306 = vpop.f32.mrf.mxu0
        %v2307 = vadd.f32 0.0, %v2306
        %v2308 = vpop.f32.mrf.mxu0
        %v2309 = vpop.f32.mrf.mxu0
        %v2310 = vadd.f32 0.0, %v2309
        %v2311 = vpop.f32.mrf.mxu0
        %2312 = vmatprep.mubr.bf16.mxu0 0
        %2313 = vmatmul.mubr.bf16.gmra.mxu0 %v2242
        %v2314 = vpop.f32.mrf.mxu0
        %v2315 = vadd.f32 0.0, %v2314
        %v2316 = vpop.f32.mrf.mxu0
        %v2317 = vpop.f32.mrf.mxu0
        %v2318 = vadd.f32 0.0, %v2317
        %v2319 = vpop.f32.mrf.mxu0
        %2320 = vdwg.mxu0
        %v2321 = vsel %vm886, %v2186, -inf
        %2322 = vmax.xlane.f32.xlu0 %v2321
        %v2323 = vpop.xlane.xlu0 %2322
        %v2324 = vsel %vm886, %v2189, -inf
        %2325 = vmax.xlane.f32.xlu0 %v2324
        %v2326 = vpop.xlane.xlu0 %2325
        %v2327 = vsel %vm886, %v2194, -inf
        %2328 = vmax.xlane.f32.xlu0 %v2327
        %v2329 = vpop.xlane.xlu0 %2328
        %v2330 = vsel %vm886, %v2197, -inf
        %2331 = vmax.xlane.f32.xlu0 %v2330
        %v2332 = vpop.xlane.xlu0 %2331
        %v2333 = vsel %vm886, %v2202, -inf
        %2334 = vmax.xlane.f32.xlu0 %v2333
        %v2335 = vpop.xlane.xlu0 %2334
        %v2336 = vsel %vm886, %v2205, -inf
        %2337 = vmax.xlane.f32.xlu0 %v2336
        %v2338 = vpop.xlane.xlu0 %2337
        %v2339 = vsel %vm886, %v2210, -inf
        %2340 = vmax.xlane.f32.xlu0 %v2339
        %v2341 = vpop.xlane.xlu0 %2340
        %v2342 = vsel %vm886, %v2213, -inf
        %2343 = vmax.xlane.f32.xlu0 %v2342
        %v2344 = vpop.xlane.xlu0 %2343
        %v2345 = vsel %vm886, %v2291, -inf
        %2346 = vmax.xlane.f32.xlu0 %v2345
        %v2347 = vpop.xlane.xlu0 %2346
        %v2348 = vsel %vm886, %v2294, -inf
        %2349 = vmax.xlane.f32.xlu0 %v2348
        %v2350 = vpop.xlane.xlu0 %2349
        %v2351 = vsel %vm886, %v2299, -inf
        %2352 = vmax.xlane.f32.xlu0 %v2351
        %v2353 = vpop.xlane.xlu0 %2352
        %v2354 = vsel %vm886, %v2302, -inf
        %2355 = vmax.xlane.f32.xlu0 %v2354
        %v2356 = vpop.xlane.xlu0 %2355
        %v2357 = vsel %vm886, %v2307, -inf
        %2358 = vmax.xlane.f32.xlu0 %v2357
        %v2359 = vpop.xlane.xlu0 %2358
        %v2360 = vsel %vm886, %v2310, -inf
        %2361 = vmax.xlane.f32.xlu0 %v2360
        %v2362 = vpop.xlane.xlu0 %2361
        %v2363 = vsel %vm886, %v2315, -inf
        %2364 = vmax.xlane.f32.xlu0 %v2363
        %v2365 = vpop.xlane.xlu0 %2364
        %v2366 = vsel %vm886, %v2318, -inf
        %2367 = vmax.xlane.f32.xlu0 %v2366
        %v2368 = vpop.xlane.xlu0 %2367
        %v2369 = vsub.f32 %v2186, %v2323
        %v2370 = vsub.f32 %v2189, %v2326
        %v2371 = vsub.f32 %v2194, %v2329
        %v2372 = vsub.f32 %v2197, %v2332
        %v2373 = vsub.f32 %v2202, %v2335
        %v2374 = vsub.f32 %v2205, %v2338
        %v2375 = vsub.f32 %v2210, %v2341
        %v2376 = vsub.f32 %v2213, %v2344
        %v2377 = vsub.f32 %v2291, %v2347
        %v2378 = vsub.f32 %v2294, %v2350
        %v2379 = vsub.f32 %v2299, %v2353
        %v2380 = vsub.f32 %v2302, %v2356
        %v2381 = vsub.f32 %v2307, %v2359
        %v2382 = vsub.f32 %v2310, %v2362
        %v2383 = vsub.f32 %v2315, %v2365
        %v2384 = vsub.f32 %v2318, %v2368
        %v2385 = vmul.f32 %v2369, 1.442695
        %v2386 = vpow.pop %v2385
        %v2387 = vmul.f32 %v2370, 1.442695
        %v2388 = vpow.pop %v2387
        %v2389 = vmul.f32 %v2371, 1.442695
        %v2390 = vpow.pop %v2389
        %v2391 = vmul.f32 %v2372, 1.442695
        %v2392 = vpow.pop %v2391
        %v2393 = vmul.f32 %v2373, 1.442695
        %v2394 = vpow.pop %v2393
        %v2395 = vmul.f32 %v2374, 1.442695
        %v2396 = vpow.pop %v2395
        %v2397 = vmul.f32 %v2375, 1.442695
        %v2398 = vpow.pop %v2397
        %v2399 = vmul.f32 %v2376, 1.442695
        %v2400 = vpow.pop %v2399
        %v2401 = vmul.f32 %v2377, 1.442695
        %v2402 = vpow.pop %v2401
        %v2403 = vmul.f32 %v2378, 1.442695
        %v2404 = vpow.pop %v2403
        %v2405 = vmul.f32 %v2379, 1.442695
        %v2406 = vpow.pop %v2405
        %v2407 = vmul.f32 %v2380, 1.442695
        %v2408 = vpow.pop %v2407
        %v2409 = vmul.f32 %v2381, 1.442695
        %v2410 = vpow.pop %v2409
        %v2411 = vmul.f32 %v2382, 1.442695
        %v2412 = vpow.pop %v2411
        %v2413 = vmul.f32 %v2383, 1.442695
        %v2414 = vpow.pop %v2413
        %v2415 = vmul.f32 %v2384, 1.442695
        %v2416 = vpow.pop %v2415
        %v2417 = vsel %vm886, %v2386, 0.0
        %2418 = vadd.xlane.f32.xlu0 %v2417
        %v2419 = vpop.xlane.xlu0 %2418
        %v2420 = vsel %vm886, %v2388, 0.0
        %2421 = vadd.xlane.f32.xlu0 %v2420
        %v2422 = vpop.xlane.xlu0 %2421
        %v2423 = vsel %vm886, %v2390, 0.0
        %2424 = vadd.xlane.f32.xlu0 %v2423
        %v2425 = vpop.xlane.xlu0 %2424
        %v2426 = vsel %vm886, %v2392, 0.0
        %2427 = vadd.xlane.f32.xlu0 %v2426
        %v2428 = vpop.xlane.xlu0 %2427
        %v2429 = vsel %vm886, %v2394, 0.0
        %2430 = vadd.xlane.f32.xlu0 %v2429
        %v2431 = vpop.xlane.xlu0 %2430
        %v2432 = vsel %vm886, %v2396, 0.0
        %2433 = vadd.xlane.f32.xlu0 %v2432
        %v2434 = vpop.xlane.xlu0 %2433
        %v2435 = vsel %vm886, %v2398, 0.0
        %2436 = vadd.xlane.f32.xlu0 %v2435
        %v2437 = vpop.xlane.xlu0 %2436
        %v2438 = vsel %vm886, %v2400, 0.0
        %2439 = vadd.xlane.f32.xlu0 %v2438
        %v2440 = vpop.xlane.xlu0 %2439
        %v2441 = vsel %vm886, %v2402, 0.0
        %2442 = vadd.xlane.f32.xlu0 %v2441
        %v2443 = vpop.xlane.xlu0 %2442
        %v2444 = vsel %vm886, %v2404, 0.0
        %2445 = vadd.xlane.f32.xlu0 %v2444
        %v2446 = vpop.xlane.xlu0 %2445
        %v2447 = vsel %vm886, %v2406, 0.0
        %2448 = vadd.xlane.f32.xlu0 %v2447
        %v2449 = vpop.xlane.xlu0 %2448
        %v2450 = vsel %vm886, %v2408, 0.0
        %2451 = vadd.xlane.f32.xlu0 %v2450
        %v2452 = vpop.xlane.xlu0 %2451
        %v2453 = vsel %vm886, %v2410, 0.0
        %2454 = vadd.xlane.f32.xlu0 %v2453
        %v2455 = vpop.xlane.xlu0 %2454
        %v2456 = vsel %vm886, %v2412, 0.0
        %2457 = vadd.xlane.f32.xlu0 %v2456
        %v2458 = vpop.xlane.xlu0 %2457
        %v2459 = vsel %vm886, %v2414, 0.0
        %2460 = vadd.xlane.f32.xlu0 %v2459
        %v2461 = vpop.xlane.xlu0 %2460
        %v2462 = vsel %vm886, %v2416, 0.0
        %2463 = vadd.xlane.f32.xlu0 %v2462
        %v2464 = vpop.xlane.xlu0 %2463
        %v2465 = vrcp.pop %v2419
        %v2466 = vrcp.pop %v2422
        %v2467 = vrcp.pop %v2425
        %v2468 = vrcp.pop %v2428
        %v2469 = vrcp.pop %v2431
        %v2470 = vrcp.pop %v2434
        %v2471 = vrcp.pop %v2437
        %v2472 = vrcp.pop %v2440
        %v2473 = vrcp.pop %v2443
        %v2474 = vrcp.pop %v2446
        %v2475 = vrcp.pop %v2449
        %v2476 = vrcp.pop %v2452
        %v2477 = vrcp.pop %v2455
        %v2478 = vrcp.pop %v2458
        %v2479 = vrcp.pop %v2461
        %v2480 = vrcp.pop %v2464
        %v2481 = vmul.f32 %v2386, %v2465
        %v2482 = vmul.f32 %v2388, %v2466
        %v2483 = vmul.f32 %v2390, %v2467
        %v2484 = vmul.f32 %v2392, %v2468
        %v2485 = vmul.f32 %v2394, %v2469
        %v2486 = vmul.f32 %v2396, %v2470
        %v2487 = vmul.f32 %v2398, %v2471
        %v2488 = vmul.f32 %v2400, %v2472
        %v2489 = vmul.f32 %v2402, %v2473
        %v2490 = vmul.f32 %v2404, %v2474
        %v2491 = vmul.f32 %v2406, %v2475
        %v2492 = vmul.f32 %v2408, %v2476
        %v2493 = vmul.f32 %v2410, %v2477
        %v2494 = vmul.f32 %v2412, %v2478
        %v2495 = vmul.f32 %v2414, %v2479
        %v2496 = vmul.f32 %v2416, %v2480
        %v2497 = vpack.c.bf16 %v2482, %v2481
        %v2498 = vpack.c.bf16 %v2484, %v2483
        %v2499 = vpack.c.bf16 %v2486, %v2485
        %v2500 = vpack.c.bf16 %v2488, %v2487
        %v2501 = vpack.c.bf16 %v2490, %v2489
        %v2502 = vpack.c.bf16 %v2492, %v2491
        %v2503 = vpack.c.bf16 %v2494, %v2493
        %v2504 = vpack.c.bf16 %v2496, %v2495
        %2505 = vrot.lane.b32.xlu0 %v699, 64
        %v2506 = vpop.permute.xlu0 %2505
        %2507 = vrot.lane.b32.xlu0 %v700, 64
        %v2508 = vpop.permute.xlu0 %2507
        %2509 = vrot.lane.b32.xlu0 %v701, 64
        %v2510 = vpop.permute.xlu0 %2509
        %2511 = vrot.lane.b32.xlu0 %v702, 64
        %v2512 = vpop.permute.xlu0 %2511
        %v2518 = vsel %vm886, %v2497, 0
        %v2521 = vsel %vm886, %v2498, 0
        %v2524 = vsel %vm886, %v2499, 0
        %v2527 = vsel %vm886, %v2500, 0
        %2529 = vmatprep.subr.bf16.mxu0 0
        %2530 = vmatpush1.bf16.msra.mxu0 0
        %2531 = vmatprep.subr.bf16.mxu0 0
        %2532 = vmatpush1.bf16.msra.mxu0 0
        %2533 = vmatprep.subr.bf16.mxu0 0
        %2534 = vmatpush1.bf16.msra.mxu0 0
        %2535 = vmatprep.subr.bf16.mxu0 0
        %2536 = vmatpush1.bf16.msra.mxu0 0
        %2537 = vmatprep.subr.bf16.mxu0 0
        %2538 = vmatpush1.bf16.msra.mxu0 %v2512
        %2539 = vmatprep.subr.bf16.mxu0 0
        %2540 = vmatpush1.bf16.msra.mxu0 %v2510
        %2541 = vmatprep.subr.bf16.mxu0 0
        %2542 = vmatpush1.bf16.msra.mxu0 %v2508
        %2543 = vmatprep.subr.bf16.mxu0 0
        %2544 = vmatpush1.bf16.msra.mxu0 %v2506
        %2545 = vmatprep.subr.bf16.mxu0 0
        %2546 = vmatpush2.bf16.msra.mxu0 0
        %2547 = vmatprep.subr.bf16.mxu0 0
        %2548 = vmatpush2.bf16.msra.mxu0 0
        %2549 = vmatprep.subr.bf16.mxu0 0
        %2550 = vmatpush2.bf16.msra.mxu0 0
        %2551 = vmatprep.subr.bf16.mxu0 0
        %2552 = vmatpush2.bf16.msra.mxu0 0
        %2553 = vmatprep.subr.bf16.mxu0 0
        %2554 = vmatpush2.bf16.msra.mxu0 0
        %2555 = vmatprep.subr.bf16.mxu0 0
        %2556 = vmatpush2.bf16.msra.mxu0 0
        %2557 = vmatprep.subr.bf16.mxu0 0
        %2558 = vmatpush2.bf16.msra.mxu0 0
        %2559 = vmatprep.subr.bf16.mxu0 0
        %2560 = vmatpush2.bf16.msra.mxu0 0
        %2561 = vmatprep.mubr.bf16.mxu0 0
        %2562 = vmatmul.mubr.bf16.gmra.mxu0 %v2518
        %v2563 = vpop.f32.mrf.mxu0
        %v2564 = vadd.f32 0.0, %v2563
        %v2565 = vpop.f32.mrf.mxu0
        %v2566 = vpop.f32.mrf.mxu0
        %v2567 = vadd.f32 0.0, %v2566
        %v2568 = vpop.f32.mrf.mxu0
        %2569 = vmatprep.mubr.bf16.mxu0 0
        %2570 = vmatmul.mubr.bf16.gmra.mxu0 %v2521
        %v2571 = vpop.f32.mrf.mxu0
        %v2572 = vadd.f32 0.0, %v2571
        %v2573 = vpop.f32.mrf.mxu0
        %v2574 = vpop.f32.mrf.mxu0
        %v2575 = vadd.f32 0.0, %v2574
        %v2576 = vpop.f32.mrf.mxu0
        %2577 = vmatprep.mubr.bf16.mxu0 0
        %2578 = vmatmul.mubr.bf16.gmra.mxu0 %v2524
        %v2579 = vpop.f32.mrf.mxu0
        %v2580 = vadd.f32 0.0, %v2579
        %v2581 = vpop.f32.mrf.mxu0
        %v2582 = vpop.f32.mrf.mxu0
        %v2583 = vadd.f32 0.0, %v2582
        %v2584 = vpop.f32.mrf.mxu0
        %2585 = vmatprep.mubr.bf16.mxu0 0
        %2586 = vmatmul.mubr.bf16.gmra.mxu0 %v2527
        %v2587 = vpop.f32.mrf.mxu0
        %v2588 = vadd.f32 0.0, %v2587
        %v2589 = vpop.f32.mrf.mxu0
        %v2590 = vpop.f32.mrf.mxu0
        %v2591 = vadd.f32 0.0, %v2590
        %v2592 = vpop.f32.mrf.mxu0
        %2593 = vdwg.mxu0
        %2594 = vrot.lane.b32.xlu0 %v703, 64
        %v2595 = vpop.permute.xlu0 %2594
        %2596 = vrot.lane.b32.xlu0 %v704, 64
        %v2597 = vpop.permute.xlu0 %2596
        %2598 = vrot.lane.b32.xlu0 %v705, 64
        %v2599 = vpop.permute.xlu0 %2598
        %2600 = vrot.lane.b32.xlu0 %v706, 64
        %v2601 = vpop.permute.xlu0 %2600
        %v2607 = vsel %vm886, %v2501, 0
        %v2610 = vsel %vm886, %v2502, 0
        %v2613 = vsel %vm886, %v2503, 0
        %v2616 = vsel %vm886, %v2504, 0
        %2618 = vmatprep.subr.bf16.mxu0 0
        %2619 = vmatpush1.bf16.msra.mxu0 0
        %2620 = vmatprep.subr.bf16.mxu0 0
        %2621 = vmatpush1.bf16.msra.mxu0 0
        %2622 = vmatprep.subr.bf16.mxu0 0
        %2623 = vmatpush1.bf16.msra.mxu0 0
        %2624 = vmatprep.subr.bf16.mxu0 0
        %2625 = vmatpush1.bf16.msra.mxu0 0
        %2626 = vmatprep.subr.bf16.mxu0 0
        %2627 = vmatpush1.bf16.msra.mxu0 %v2601
        %2628 = vmatprep.subr.bf16.mxu0 0
        %2629 = vmatpush1.bf16.msra.mxu0 %v2599
        %2630 = vmatprep.subr.bf16.mxu0 0
        %2631 = vmatpush1.bf16.msra.mxu0 %v2597
        %2632 = vmatprep.subr.bf16.mxu0 0
        %2633 = vmatpush1.bf16.msra.mxu0 %v2595
        %2634 = vmatprep.subr.bf16.mxu0 0
        %2635 = vmatpush2.bf16.msra.mxu0 0
        %2636 = vmatprep.subr.bf16.mxu0 0
        %2637 = vmatpush2.bf16.msra.mxu0 0
        %2638 = vmatprep.subr.bf16.mxu0 0
        %2639 = vmatpush2.bf16.msra.mxu0 0
        %2640 = vmatprep.subr.bf16.mxu0 0
        %2641 = vmatpush2.bf16.msra.mxu0 0
        %2642 = vmatprep.subr.bf16.mxu0 0
        %2643 = vmatpush2.bf16.msra.mxu0 0
        %2644 = vmatprep.subr.bf16.mxu0 0
        %2645 = vmatpush2.bf16.msra.mxu0 0
        %2646 = vmatprep.subr.bf16.mxu0 0
        %2647 = vmatpush2.bf16.msra.mxu0 0
        %2648 = vmatprep.subr.bf16.mxu0 0
        %2649 = vmatpush2.bf16.msra.mxu0 0
        %2650 = vmatprep.mubr.bf16.mxu0 0
        %2651 = vmatmul.mubr.bf16.gmra.mxu0 %v2607
        %v2652 = vpop.f32.mrf.mxu0
        %v2653 = vadd.f32 0.0, %v2652
        %v2654 = vpop.f32.mrf.mxu0
        %v2655 = vpop.f32.mrf.mxu0
        %v2656 = vadd.f32 0.0, %v2655
        %v2657 = vpop.f32.mrf.mxu0
        %2658 = vmatprep.mubr.bf16.mxu0 0
        %2659 = vmatmul.mubr.bf16.gmra.mxu0 %v2610
        %v2660 = vpop.f32.mrf.mxu0
        %v2661 = vadd.f32 0.0, %v2660
        %v2662 = vpop.f32.mrf.mxu0
        %v2663 = vpop.f32.mrf.mxu0
        %v2664 = vadd.f32 0.0, %v2663
        %v2665 = vpop.f32.mrf.mxu0
        %2666 = vmatprep.mubr.bf16.mxu0 0
        %2667 = vmatmul.mubr.bf16.gmra.mxu0 %v2613
        %v2668 = vpop.f32.mrf.mxu0
        %v2669 = vadd.f32 0.0, %v2668
        %v2670 = vpop.f32.mrf.mxu0
        %v2671 = vpop.f32.mrf.mxu0
        %v2672 = vadd.f32 0.0, %v2671
        %v2673 = vpop.f32.mrf.mxu0
        %2674 = vmatprep.mubr.bf16.mxu0 0
        %2675 = vmatmul.mubr.bf16.gmra.mxu0 %v2616
        %v2676 = vpop.f32.mrf.mxu0
        %v2677 = vadd.f32 0.0, %v2676
        %v2678 = vpop.f32.mrf.mxu0
        %v2679 = vpop.f32.mrf.mxu0
        %v2680 = vadd.f32 0.0, %v2679
        %v2681 = vpop.f32.mrf.mxu0
        %2682 = vdwg.mxu0
        %v2683 = vpack.c.bf16 %v2567, %v2564
        %v2684 = vpack.c.bf16 %v2575, %v2572
        %v2685 = vpack.c.bf16 %v2583, %v2580
        %v2686 = vpack.c.bf16 %v2591, %v2588
        %v2687 = vpack.c.bf16 %v2656, %v2653
        %v2688 = vpack.c.bf16 %v2664, %v2661
        %v2689 = vpack.c.bf16 %v2672, %v2669
        %v2690 = vpack.c.bf16 %v2680, %v2677
        %v2691 = vld [vmem:[%s3 + $0x20] sm:$0xf]
        %v2692 = vld [vmem:[%s3 + $0x24] sm:$0xf]
        %v2693 = vld [vmem:[%s3 + $0x28] sm:$0xf]
        %v2694 = vld [vmem:[%s3 + $0x2c] sm:$0xf]
        %v2699 = vunpack.c.l.b16 %v2691
        %v2700 = vunpack.c.l.b16 %v2692
        %v2701 = vunpack.c.l.b16 %v2693
        %v2702 = vunpack.c.l.b16 %v2694
        %v2703 = vpack.c.b16 %v2700, %v2699
        %v2704 = vpack.c.b16 %v2702, %v2701
        %v2708 = vsel %vm707, %v2683, 0
        %v2711 = vsel %vm707, %v2684, 0
        %v2714 = vsel %vm707, %v2685, 0
        %v2717 = vsel %vm707, %v2686, 0
        %v2720 = vsel %vm707, %v2687, 0
        %v2723 = vsel %vm707, %v2688, 0
        %v2726 = vsel %vm707, %v2689, 0
        %v2729 = vsel %vm707, %v2690, 0
        %2731 = vmatprep.subr.bf16.mxu0 0
        %2732 = vmatpush1.bf16.msra.mxu0 0
        %2733 = vmatprep.subr.bf16.mxu0 0
        %2734 = vmatpush1.bf16.msra.mxu0 0
        %2735 = vmatprep.subr.bf16.mxu0 0
        %2736 = vmatpush1.bf16.msra.mxu0 0
        %2737 = vmatprep.subr.bf16.mxu0 0
        %2738 = vmatpush1.bf16.msra.mxu0 0
        %2739 = vmatprep.subr.bf16.mxu0 0
        %2740 = vmatpush1.bf16.msra.mxu0 0
        %2741 = vmatprep.subr.bf16.mxu0 0
        %2742 = vmatpush1.bf16.msra.mxu0 0
        %2743 = vmatprep.subr.bf16.mxu0 0
        %2744 = vmatpush1.bf16.msra.mxu0 %v2704
        %2745 = vmatprep.subr.bf16.mxu0 0
        %2746 = vmatpush1.bf16.msra.mxu0 %v2703
        %2747 = vmatprep.subr.bf16.mxu0 0
        %2748 = vmatpush2.bf16.msra.mxu0 0
        %2749 = vmatprep.subr.bf16.mxu0 0
        %2750 = vmatpush2.bf16.msra.mxu0 0
        %2751 = vmatprep.subr.bf16.mxu0 0
        %2752 = vmatpush2.bf16.msra.mxu0 0
        %2753 = vmatprep.subr.bf16.mxu0 0
        %2754 = vmatpush2.bf16.msra.mxu0 0
        %2755 = vmatprep.subr.bf16.mxu0 0
        %2756 = vmatpush2.bf16.msra.mxu0 0
        %2757 = vmatprep.subr.bf16.mxu0 0
        %2758 = vmatpush2.bf16.msra.mxu0 0
        %2759 = vmatprep.subr.bf16.mxu0 0
        %2760 = vmatpush2.bf16.msra.mxu0 0
        %2761 = vmatprep.subr.bf16.mxu0 0
        %2762 = vmatpush2.bf16.msra.mxu0 0
        %2763 = vmatprep.mubr.bf16.mxu0 0
        %2764 = vmatmul.mubr.bf16.gmra.mxu0 %v2708
        %v2765 = vpop.f32.mrf.mxu0
        %v2766 = vadd.f32 0.0, %v2765
        %v2767 = vpop.f32.mrf.mxu0
        %v2768 = vpop.f32.mrf.mxu0
        %v2769 = vadd.f32 0.0, %v2768
        %v2770 = vpop.f32.mrf.mxu0
        %2771 = vmatprep.mubr.bf16.mxu0 0
        %2772 = vmatmul.mubr.bf16.gmra.mxu0 %v2711
        %v2773 = vpop.f32.mrf.mxu0
        %v2774 = vadd.f32 0.0, %v2773
        %v2775 = vpop.f32.mrf.mxu0
        %v2776 = vpop.f32.mrf.mxu0
        %v2777 = vadd.f32 0.0, %v2776
        %v2778 = vpop.f32.mrf.mxu0
        %2779 = vmatprep.mubr.bf16.mxu0 0
        %2780 = vmatmul.mubr.bf16.gmra.mxu0 %v2714
        %v2781 = vpop.f32.mrf.mxu0
        %v2782 = vadd.f32 0.0, %v2781
        %v2783 = vpop.f32.mrf.mxu0
        %v2784 = vpop.f32.mrf.mxu0
        %v2785 = vadd.f32 0.0, %v2784
        %v2786 = vpop.f32.mrf.mxu0
        %2787 = vmatprep.mubr.bf16.mxu0 0
        %2788 = vmatmul.mubr.bf16.gmra.mxu0 %v2717
        %v2789 = vpop.f32.mrf.mxu0
        %v2790 = vadd.f32 0.0, %v2789
        %v2791 = vpop.f32.mrf.mxu0
        %v2792 = vpop.f32.mrf.mxu0
        %v2793 = vadd.f32 0.0, %v2792
        %v2794 = vpop.f32.mrf.mxu0
        %2795 = vmatprep.mubr.bf16.mxu0 0
        %2796 = vmatmul.mubr.bf16.gmra.mxu0 %v2720
        %v2797 = vpop.f32.mrf.mxu0
        %v2798 = vadd.f32 0.0, %v2797
        %v2799 = vpop.f32.mrf.mxu0
        %v2800 = vpop.f32.mrf.mxu0
        %v2801 = vadd.f32 0.0, %v2800
        %v2802 = vpop.f32.mrf.mxu0
        %2803 = vmatprep.mubr.bf16.mxu0 0
        %2804 = vmatmul.mubr.bf16.gmra.mxu0 %v2723
        %v2805 = vpop.f32.mrf.mxu0
        %v2806 = vadd.f32 0.0, %v2805
        %v2807 = vpop.f32.mrf.mxu0
        %v2808 = vpop.f32.mrf.mxu0
        %v2809 = vadd.f32 0.0, %v2808
        %v2810 = vpop.f32.mrf.mxu0
        %2811 = vmatprep.mubr.bf16.mxu0 0
        %2812 = vmatmul.mubr.bf16.gmra.mxu0 %v2726
        %v2813 = vpop.f32.mrf.mxu0
        %v2814 = vadd.f32 0.0, %v2813
        %v2815 = vpop.f32.mrf.mxu0
        %v2816 = vpop.f32.mrf.mxu0
        %v2817 = vadd.f32 0.0, %v2816
        %v2818 = vpop.f32.mrf.mxu0
        %2819 = vmatprep.mubr.bf16.mxu0 0
        %2820 = vmatmul.mubr.bf16.gmra.mxu0 %v2729
        %v2821 = vpop.f32.mrf.mxu0
        %v2822 = vadd.f32 0.0, %v2821
        %v2823 = vpop.f32.mrf.mxu0
        %v2824 = vpop.f32.mrf.mxu0
        %v2825 = vadd.f32 0.0, %v2824
        %v2826 = vpop.f32.mrf.mxu0
        %2827 = vdwg.mxu0
        %v2828 = vadd.f32 %v2049, %v2766
        %v2829 = vadd.f32 %v2052, %v2769
        %v2830 = vadd.f32 %v2057, %v2774
        %v2831 = vadd.f32 %v2060, %v2777
        %v2832 = vadd.f32 %v2065, %v2782
        %v2833 = vadd.f32 %v2068, %v2785
        %v2834 = vadd.f32 %v2073, %v2790
        %v2835 = vadd.f32 %v2076, %v2793
        %v2836 = vadd.f32 %v2081, %v2798
        %v2837 = vadd.f32 %v2084, %v2801
        %v2838 = vadd.f32 %v2089, %v2806
        %v2839 = vadd.f32 %v2092, %v2809
        %v2840 = vadd.f32 %v2097, %v2814
        %v2841 = vadd.f32 %v2100, %v2817
        %v2842 = vadd.f32 %v2105, %v2822
        %v2843 = vadd.f32 %v2108, %v2825
        %2844 = vrot.lane.b32.xlu0 %v683, 32
        %v2845 = vpop.permute.xlu0 %2844
        %2846 = vrot.lane.b32.xlu0 %v684, 32
        %v2847 = vpop.permute.xlu0 %2846
        %2848 = vrot.lane.b32.xlu0 %v685, 32
        %v2849 = vpop.permute.xlu0 %2848
        %2850 = vrot.lane.b32.xlu0 %v686, 32
        %v2851 = vpop.permute.xlu0 %2850
        %2852 = vrot.lane.b32.xlu0 %v691, 32
        %v2853 = vpop.permute.xlu0 %2852
        %2854 = vrot.lane.b32.xlu0 %v692, 32
        %v2855 = vpop.permute.xlu0 %2854
        %2856 = vrot.lane.b32.xlu0 %v693, 32
        %v2857 = vpop.permute.xlu0 %2856
        %2858 = vrot.lane.b32.xlu0 %v694, 32
        %v2859 = vpop.permute.xlu0 %2858
        %v2861 = vsel %vm707, %v2845, 0
        %v2864 = vsel %vm707, %v2847, 0
        %v2867 = vsel %vm707, %v2849, 0
        %v2870 = vsel %vm707, %v2851, 0
        %v2873 = vsel %vm707, %v2853, 0
        %v2876 = vsel %vm707, %v2855, 0
        %v2879 = vsel %vm707, %v2857, 0
        %v2882 = vsel %vm707, %v2859, 0
        %2884 = vmatprep.subr.bf16.mxu0 0
        %2885 = vmatpush1.bf16.xpose.msra.mxu0 0
        %2886 = vmatprep.subr.bf16.mxu0 0
        %2887 = vmatpush1.bf16.xpose.msra.mxu0 0
        %2888 = vmatprep.subr.bf16.mxu0 0
        %2889 = vmatpush1.bf16.xpose.msra.mxu0 0
        %2890 = vmatprep.subr.bf16.mxu0 0
        %2891 = vmatpush1.bf16.xpose.msra.mxu0 0
        %2892 = vmatprep.subr.bf16.mxu0 0
        %2893 = vmatpush1.bf16.xpose.msra.mxu0 %v2882
        %2894 = vmatprep.subr.bf16.mxu0 0
        %2895 = vmatpush1.bf16.xpose.msra.mxu0 %v2879
        %2896 = vmatprep.subr.bf16.mxu0 0
        %2897 = vmatpush1.bf16.xpose.msra.mxu0 %v2876
        %2898 = vmatprep.subr.bf16.mxu0 0
        %2899 = vmatpush1.bf16.xpose.msra.mxu0 %v2873
        %2900 = vmatprep.subr.bf16.mxu0 0
        %2901 = vmatpush2.bf16.xpose.msra.mxu0 0
        %2902 = vmatprep.subr.bf16.mxu0 0
        %2903 = vmatpush2.bf16.xpose.msra.mxu0 0
        %2904 = vmatprep.subr.bf16.mxu0 0
        %2905 = vmatpush2.bf16.xpose.msra.mxu0 0
        %2906 = vmatprep.subr.bf16.mxu0 0
        %2907 = vmatpush2.bf16.xpose.msra.mxu0 0
        %2908 = vmatprep.subr.bf16.mxu0 0
        %2909 = vmatpush2.bf16.xpose.msra.mxu0 0
        %2910 = vmatprep.subr.bf16.mxu0 0
        %2911 = vmatpush2.bf16.xpose.msra.mxu0 0
        %2912 = vmatprep.subr.bf16.mxu0 0
        %2913 = vmatpush2.bf16.xpose.msra.mxu0 0
        %2914 = vmatprep.subr.bf16.mxu0 0
        %2915 = vmatpush2.bf16.xpose.msra.mxu0 0
        %2916 = vmatprep.mubr.bf16.mxu0 0
        %2917 = vmatmul.mubr.bf16.gmra.mxu0 %v2861
        %v2918 = vpop.f32.mrf.mxu0
        %v2919 = vadd.f32 0.0, %v2918
        %v2920 = vpop.f32.mrf.mxu0
        %v2921 = vpop.f32.mrf.mxu0
        %v2922 = vadd.f32 0.0, %v2921
        %v2923 = vpop.f32.mrf.mxu0
        %2924 = vmatprep.mubr.bf16.mxu0 0
        %2925 = vmatmul.mubr.bf16.gmra.mxu0 %v2864
        %v2926 = vpop.f32.mrf.mxu0
        %v2927 = vadd.f32 0.0, %v2926
        %v2928 = vpop.f32.mrf.mxu0
        %v2929 = vpop.f32.mrf.mxu0
        %v2930 = vadd.f32 0.0, %v2929
        %v2931 = vpop.f32.mrf.mxu0
        %2932 = vmatprep.mubr.bf16.mxu0 0
        %2933 = vmatmul.mubr.bf16.gmra.mxu0 %v2867
        %v2934 = vpop.f32.mrf.mxu0
        %v2935 = vadd.f32 0.0, %v2934
        %v2936 = vpop.f32.mrf.mxu0
        %v2937 = vpop.f32.mrf.mxu0
        %v2938 = vadd.f32 0.0, %v2937
        %v2939 = vpop.f32.mrf.mxu0
        %2940 = vmatprep.mubr.bf16.mxu0 0
        %2941 = vmatmul.mubr.bf16.gmra.mxu0 %v2870
        %v2942 = vpop.f32.mrf.mxu0
        %v2943 = vadd.f32 0.0, %v2942
        %v2944 = vpop.f32.mrf.mxu0
        %v2945 = vpop.f32.mrf.mxu0
        %v2946 = vadd.f32 0.0, %v2945
        %v2947 = vpop.f32.mrf.mxu0
        %2948 = vdwg.mxu0
        %2949 = vrot.lane.b32.xlu0 %v687, 32
        %v2950 = vpop.permute.xlu0 %2949
        %2951 = vrot.lane.b32.xlu0 %v688, 32
        %v2952 = vpop.permute.xlu0 %2951
        %2953 = vrot.lane.b32.xlu0 %v689, 32
        %v2954 = vpop.permute.xlu0 %2953
        %2955 = vrot.lane.b32.xlu0 %v690, 32
        %v2956 = vpop.permute.xlu0 %2955
        %2957 = vrot.lane.b32.xlu0 %v695, 32
        %v2958 = vpop.permute.xlu0 %2957
        %2959 = vrot.lane.b32.xlu0 %v696, 32
        %v2960 = vpop.permute.xlu0 %2959
        %2961 = vrot.lane.b32.xlu0 %v697, 32
        %v2962 = vpop.permute.xlu0 %2961
        %2963 = vrot.lane.b32.xlu0 %v698, 32
        %v2964 = vpop.permute.xlu0 %2963
        %v2966 = vsel %vm707, %v2950, 0
        %v2969 = vsel %vm707, %v2952, 0
        %v2972 = vsel %vm707, %v2954, 0
        %v2975 = vsel %vm707, %v2956, 0
        %v2978 = vsel %vm707, %v2958, 0
        %v2981 = vsel %vm707, %v2960, 0
        %v2984 = vsel %vm707, %v2962, 0
        %v2987 = vsel %vm707, %v2964, 0
        %2989 = vmatprep.subr.bf16.mxu0 0
        %2990 = vmatpush1.bf16.xpose.msra.mxu0 0
        %2991 = vmatprep.subr.bf16.mxu0 0
        %2992 = vmatpush1.bf16.xpose.msra.mxu0 0
        %2993 = vmatprep.subr.bf16.mxu0 0
        %2994 = vmatpush1.bf16.xpose.msra.mxu0 0
        %2995 = vmatprep.subr.bf16.mxu0 0
        %2996 = vmatpush1.bf16.xpose.msra.mxu0 0
        %2997 = vmatprep.subr.bf16.mxu0 0
        %2998 = vmatpush1.bf16.xpose.msra.mxu0 %v2987
        %2999 = vmatprep.subr.bf16.mxu0 0
        %3000 = vmatpush1.bf16.xpose.msra.mxu0 %v2984
        %3001 = vmatprep.subr.bf16.mxu0 0
        %3002 = vmatpush1.bf16.xpose.msra.mxu0 %v2981
        %3003 = vmatprep.subr.bf16.mxu0 0
        %3004 = vmatpush1.bf16.xpose.msra.mxu0 %v2978
        %3005 = vmatprep.subr.bf16.mxu0 0
        %3006 = vmatpush2.bf16.xpose.msra.mxu0 0
        %3007 = vmatprep.subr.bf16.mxu0 0
        %3008 = vmatpush2.bf16.xpose.msra.mxu0 0
        %3009 = vmatprep.subr.bf16.mxu0 0
        %3010 = vmatpush2.bf16.xpose.msra.mxu0 0
        %3011 = vmatprep.subr.bf16.mxu0 0
        %3012 = vmatpush2.bf16.xpose.msra.mxu0 0
        %3013 = vmatprep.subr.bf16.mxu0 0
        %3014 = vmatpush2.bf16.xpose.msra.mxu0 0
        %3015 = vmatprep.subr.bf16.mxu0 0
        %3016 = vmatpush2.bf16.xpose.msra.mxu0 0
        %3017 = vmatprep.subr.bf16.mxu0 0
        %3018 = vmatpush2.bf16.xpose.msra.mxu0 0
        %3019 = vmatprep.subr.bf16.mxu0 0
        %3020 = vmatpush2.bf16.xpose.msra.mxu0 0
        %3021 = vmatprep.mubr.bf16.mxu0 0
        %3022 = vmatmul.mubr.bf16.gmra.mxu0 %v2966
        %v3023 = vpop.f32.mrf.mxu0
        %v3024 = vadd.f32 0.0, %v3023
        %v3025 = vpop.f32.mrf.mxu0
        %v3026 = vpop.f32.mrf.mxu0
        %v3027 = vadd.f32 0.0, %v3026
        %v3028 = vpop.f32.mrf.mxu0
        %3029 = vmatprep.mubr.bf16.mxu0 0
        %3030 = vmatmul.mubr.bf16.gmra.mxu0 %v2969
        %v3031 = vpop.f32.mrf.mxu0
        %v3032 = vadd.f32 0.0, %v3031
        %v3033 = vpop.f32.mrf.mxu0
        %v3034 = vpop.f32.mrf.mxu0
        %v3035 = vadd.f32 0.0, %v3034
        %v3036 = vpop.f32.mrf.mxu0
        %3037 = vmatprep.mubr.bf16.mxu0 0
        %3038 = vmatmul.mubr.bf16.gmra.mxu0 %v2972
        %v3039 = vpop.f32.mrf.mxu0
        %v3040 = vadd.f32 0.0, %v3039
        %v3041 = vpop.f32.mrf.mxu0
        %v3042 = vpop.f32.mrf.mxu0
        %v3043 = vadd.f32 0.0, %v3042
        %v3044 = vpop.f32.mrf.mxu0
        %3045 = vmatprep.mubr.bf16.mxu0 0
        %3046 = vmatmul.mubr.bf16.gmra.mxu0 %v2975
        %v3047 = vpop.f32.mrf.mxu0
        %v3048 = vadd.f32 0.0, %v3047
        %v3049 = vpop.f32.mrf.mxu0
        %v3050 = vpop.f32.mrf.mxu0
        %v3051 = vadd.f32 0.0, %v3050
        %v3052 = vpop.f32.mrf.mxu0
        %3053 = vdwg.mxu0
        %v3054 = vsel %vm886, %v2919, -inf
        %3055 = vmax.xlane.f32.xlu0 %v3054
        %v3056 = vpop.xlane.xlu0 %3055
        %v3057 = vsel %vm886, %v2922, -inf
        %3058 = vmax.xlane.f32.xlu0 %v3057
        %v3059 = vpop.xlane.xlu0 %3058
        %v3060 = vsel %vm886, %v2927, -inf
        %3061 = vmax.xlane.f32.xlu0 %v3060
        %v3062 = vpop.xlane.xlu0 %3061
        %v3063 = vsel %vm886, %v2930, -inf
        %3064 = vmax.xlane.f32.xlu0 %v3063
        %v3065 = vpop.xlane.xlu0 %3064
        %v3066 = vsel %vm886, %v2935, -inf
        %3067 = vmax.xlane.f32.xlu0 %v3066
        %v3068 = vpop.xlane.xlu0 %3067
        %v3069 = vsel %vm886, %v2938, -inf
        %3070 = vmax.xlane.f32.xlu0 %v3069
        %v3071 = vpop.xlane.xlu0 %3070
        %v3072 = vsel %vm886, %v2943, -inf
        %3073 = vmax.xlane.f32.xlu0 %v3072
        %v3074 = vpop.xlane.xlu0 %3073
        %v3075 = vsel %vm886, %v2946, -inf
        %3076 = vmax.xlane.f32.xlu0 %v3075
        %v3077 = vpop.xlane.xlu0 %3076
        %v3078 = vsel %vm886, %v3024, -inf
        %3079 = vmax.xlane.f32.xlu0 %v3078
        %v3080 = vpop.xlane.xlu0 %3079
        %v3081 = vsel %vm886, %v3027, -inf
        %3082 = vmax.xlane.f32.xlu0 %v3081
        %v3083 = vpop.xlane.xlu0 %3082
        %v3084 = vsel %vm886, %v3032, -inf
        %3085 = vmax.xlane.f32.xlu0 %v3084
        %v3086 = vpop.xlane.xlu0 %3085
        %v3087 = vsel %vm886, %v3035, -inf
        %3088 = vmax.xlane.f32.xlu0 %v3087
        %v3089 = vpop.xlane.xlu0 %3088
        %v3090 = vsel %vm886, %v3040, -inf
        %3091 = vmax.xlane.f32.xlu0 %v3090
        %v3092 = vpop.xlane.xlu0 %3091
        %v3093 = vsel %vm886, %v3043, -inf
        %3094 = vmax.xlane.f32.xlu0 %v3093
        %v3095 = vpop.xlane.xlu0 %3094
        %v3096 = vsel %vm886, %v3048, -inf
        %3097 = vmax.xlane.f32.xlu0 %v3096
        %v3098 = vpop.xlane.xlu0 %3097
        %v3099 = vsel %vm886, %v3051, -inf
        %3100 = vmax.xlane.f32.xlu0 %v3099
        %v3101 = vpop.xlane.xlu0 %3100
        %v3102 = vsub.f32 %v2919, %v3056
        %v3103 = vsub.f32 %v2922, %v3059
        %v3104 = vsub.f32 %v2927, %v3062
        %v3105 = vsub.f32 %v2930, %v3065
        %v3106 = vsub.f32 %v2935, %v3068
        %v3107 = vsub.f32 %v2938, %v3071
        %v3108 = vsub.f32 %v2943, %v3074
        %v3109 = vsub.f32 %v2946, %v3077
        %v3110 = vsub.f32 %v3024, %v3080
        %v3111 = vsub.f32 %v3027, %v3083
        %v3112 = vsub.f32 %v3032, %v3086
        %v3113 = vsub.f32 %v3035, %v3089
        %v3114 = vsub.f32 %v3040, %v3092
        %v3115 = vsub.f32 %v3043, %v3095
        %v3116 = vsub.f32 %v3048, %v3098
        %v3117 = vsub.f32 %v3051, %v3101
        %v3118 = vmul.f32 %v3102, 1.442695
        %v3119 = vpow.pop %v3118
        %v3120 = vmul.f32 %v3103, 1.442695
        %v3121 = vpow.pop %v3120
        %v3122 = vmul.f32 %v3104, 1.442695
        %v3123 = vpow.pop %v3122
        %v3124 = vmul.f32 %v3105, 1.442695
        %v3125 = vpow.pop %v3124
        %v3126 = vmul.f32 %v3106, 1.442695
        %v3127 = vpow.pop %v3126
        %v3128 = vmul.f32 %v3107, 1.442695
        %v3129 = vpow.pop %v3128
        %v3130 = vmul.f32 %v3108, 1.442695
        %v3131 = vpow.pop %v3130
        %v3132 = vmul.f32 %v3109, 1.442695
        %v3133 = vpow.pop %v3132
        %v3134 = vmul.f32 %v3110, 1.442695
        %v3135 = vpow.pop %v3134
        %v3136 = vmul.f32 %v3111, 1.442695
        %v3137 = vpow.pop %v3136
        %v3138 = vmul.f32 %v3112, 1.442695
        %v3139 = vpow.pop %v3138
        %v3140 = vmul.f32 %v3113, 1.442695
        %v3141 = vpow.pop %v3140
        %v3142 = vmul.f32 %v3114, 1.442695
        %v3143 = vpow.pop %v3142
        %v3144 = vmul.f32 %v3115, 1.442695
        %v3145 = vpow.pop %v3144
        %v3146 = vmul.f32 %v3116, 1.442695
        %v3147 = vpow.pop %v3146
        %v3148 = vmul.f32 %v3117, 1.442695
        %v3149 = vpow.pop %v3148
        %v3150 = vsel %vm886, %v3119, 0.0
        %3151 = vadd.xlane.f32.xlu0 %v3150
        %v3152 = vpop.xlane.xlu0 %3151
        %v3153 = vsel %vm886, %v3121, 0.0
        %3154 = vadd.xlane.f32.xlu0 %v3153
        %v3155 = vpop.xlane.xlu0 %3154
        %v3156 = vsel %vm886, %v3123, 0.0
        %3157 = vadd.xlane.f32.xlu0 %v3156
        %v3158 = vpop.xlane.xlu0 %3157
        %v3159 = vsel %vm886, %v3125, 0.0
        %3160 = vadd.xlane.f32.xlu0 %v3159
        %v3161 = vpop.xlane.xlu0 %3160
        %v3162 = vsel %vm886, %v3127, 0.0
        %3163 = vadd.xlane.f32.xlu0 %v3162
        %v3164 = vpop.xlane.xlu0 %3163
        %v3165 = vsel %vm886, %v3129, 0.0
        %3166 = vadd.xlane.f32.xlu0 %v3165
        %v3167 = vpop.xlane.xlu0 %3166
        %v3168 = vsel %vm886, %v3131, 0.0
        %3169 = vadd.xlane.f32.xlu0 %v3168
        %v3170 = vpop.xlane.xlu0 %3169
        %v3171 = vsel %vm886, %v3133, 0.0
        %3172 = vadd.xlane.f32.xlu0 %v3171
        %v3173 = vpop.xlane.xlu0 %3172
        %v3174 = vsel %vm886, %v3135, 0.0
        %3175 = vadd.xlane.f32.xlu0 %v3174
        %v3176 = vpop.xlane.xlu0 %3175
        %v3177 = vsel %vm886, %v3137, 0.0
        %3178 = vadd.xlane.f32.xlu0 %v3177
        %v3179 = vpop.xlane.xlu0 %3178
        %v3180 = vsel %vm886, %v3139, 0.0
        %3181 = vadd.xlane.f32.xlu0 %v3180
        %v3182 = vpop.xlane.xlu0 %3181
        %v3183 = vsel %vm886, %v3141, 0.0
        %3184 = vadd.xlane.f32.xlu0 %v3183
        %v3185 = vpop.xlane.xlu0 %3184
        %v3186 = vsel %vm886, %v3143, 0.0
        %3187 = vadd.xlane.f32.xlu0 %v3186
        %v3188 = vpop.xlane.xlu0 %3187
        %v3189 = vsel %vm886, %v3145, 0.0
        %3190 = vadd.xlane.f32.xlu0 %v3189
        %v3191 = vpop.xlane.xlu0 %3190
        %v3192 = vsel %vm886, %v3147, 0.0
        %3193 = vadd.xlane.f32.xlu0 %v3192
        %v3194 = vpop.xlane.xlu0 %3193
        %v3195 = vsel %vm886, %v3149, 0.0
        %3196 = vadd.xlane.f32.xlu0 %v3195
        %v3197 = vpop.xlane.xlu0 %3196
        %v3198 = vrcp.pop %v3152
        %v3199 = vrcp.pop %v3155
        %v3200 = vrcp.pop %v3158
        %v3201 = vrcp.pop %v3161
        %v3202 = vrcp.pop %v3164
        %v3203 = vrcp.pop %v3167
        %v3204 = vrcp.pop %v3170
        %v3205 = vrcp.pop %v3173
        %v3206 = vrcp.pop %v3176
        %v3207 = vrcp.pop %v3179
        %v3208 = vrcp.pop %v3182
        %v3209 = vrcp.pop %v3185
        %v3210 = vrcp.pop %v3188
        %v3211 = vrcp.pop %v3191
        %v3212 = vrcp.pop %v3194
        %v3213 = vrcp.pop %v3197
        %v3214 = vmul.f32 %v3119, %v3198
        %v3215 = vmul.f32 %v3121, %v3199
        %v3216 = vmul.f32 %v3123, %v3200
        %v3217 = vmul.f32 %v3125, %v3201
        %v3218 = vmul.f32 %v3127, %v3202
        %v3219 = vmul.f32 %v3129, %v3203
        %v3220 = vmul.f32 %v3131, %v3204
        %v3221 = vmul.f32 %v3133, %v3205
        %v3222 = vmul.f32 %v3135, %v3206
        %v3223 = vmul.f32 %v3137, %v3207
        %v3224 = vmul.f32 %v3139, %v3208
        %v3225 = vmul.f32 %v3141, %v3209
        %v3226 = vmul.f32 %v3143, %v3210
        %v3227 = vmul.f32 %v3145, %v3211
        %v3228 = vmul.f32 %v3147, %v3212
        %v3229 = vmul.f32 %v3149, %v3213
        %v3230 = vpack.c.bf16 %v3215, %v3214
        %v3231 = vpack.c.bf16 %v3217, %v3216
        %v3232 = vpack.c.bf16 %v3219, %v3218
        %v3233 = vpack.c.bf16 %v3221, %v3220
        %v3234 = vpack.c.bf16 %v3223, %v3222
        %v3235 = vpack.c.bf16 %v3225, %v3224
        %v3236 = vpack.c.bf16 %v3227, %v3226
        %v3237 = vpack.c.bf16 %v3229, %v3228
        %3238 = vrot.lane.b32.xlu0 %v699, 32
        %v3239 = vpop.permute.xlu0 %3238
        %3240 = vrot.lane.b32.xlu0 %v700, 32
        %v3241 = vpop.permute.xlu0 %3240
        %3242 = vrot.lane.b32.xlu0 %v701, 32
        %v3243 = vpop.permute.xlu0 %3242
        %3244 = vrot.lane.b32.xlu0 %v702, 32
        %v3245 = vpop.permute.xlu0 %3244
        %v3251 = vsel %vm886, %v3230, 0
        %v3254 = vsel %vm886, %v3231, 0
        %v3257 = vsel %vm886, %v3232, 0
        %v3260 = vsel %vm886, %v3233, 0
        %3262 = vmatprep.subr.bf16.mxu0 0
        %3263 = vmatpush1.bf16.msra.mxu0 0
        %3264 = vmatprep.subr.bf16.mxu0 0
        %3265 = vmatpush1.bf16.msra.mxu0 0
        %3266 = vmatprep.subr.bf16.mxu0 0
        %3267 = vmatpush1.bf16.msra.mxu0 0
        %3268 = vmatprep.subr.bf16.mxu0 0
        %3269 = vmatpush1.bf16.msra.mxu0 0
        %3270 = vmatprep.subr.bf16.mxu0 0
        %3271 = vmatpush1.bf16.msra.mxu0 %v3245
        %3272 = vmatprep.subr.bf16.mxu0 0
        %3273 = vmatpush1.bf16.msra.mxu0 %v3243
        %3274 = vmatprep.subr.bf16.mxu0 0
        %3275 = vmatpush1.bf16.msra.mxu0 %v3241
        %3276 = vmatprep.subr.bf16.mxu0 0
        %3277 = vmatpush1.bf16.msra.mxu0 %v3239
        %3278 = vmatprep.subr.bf16.mxu0 0
        %3279 = vmatpush2.bf16.msra.mxu0 0
        %3280 = vmatprep.subr.bf16.mxu0 0
        %3281 = vmatpush2.bf16.msra.mxu0 0
        %3282 = vmatprep.subr.bf16.mxu0 0
        %3283 = vmatpush2.bf16.msra.mxu0 0
        %3284 = vmatprep.subr.bf16.mxu0 0
        %3285 = vmatpush2.bf16.msra.mxu0 0
        %3286 = vmatprep.subr.bf16.mxu0 0
        %3287 = vmatpush2.bf16.msra.mxu0 0
        %3288 = vmatprep.subr.bf16.mxu0 0
        %3289 = vmatpush2.bf16.msra.mxu0 0
        %3290 = vmatprep.subr.bf16.mxu0 0
        %3291 = vmatpush2.bf16.msra.mxu0 0
        %3292 = vmatprep.subr.bf16.mxu0 0
        %3293 = vmatpush2.bf16.msra.mxu0 0
        %3294 = vmatprep.mubr.bf16.mxu0 0
        %3295 = vmatmul.mubr.bf16.gmra.mxu0 %v3251
        %v3296 = vpop.f32.mrf.mxu0
        %v3297 = vadd.f32 0.0, %v3296
        %v3298 = vpop.f32.mrf.mxu0
        %v3299 = vpop.f32.mrf.mxu0
        %v3300 = vadd.f32 0.0, %v3299
        %v3301 = vpop.f32.mrf.mxu0
        %3302 = vmatprep.mubr.bf16.mxu0 0
        %3303 = vmatmul.mubr.bf16.gmra.mxu0 %v3254
        %v3304 = vpop.f32.mrf.mxu0
        %v3305 = vadd.f32 0.0, %v3304
        %v3306 = vpop.f32.mrf.mxu0
        %v3307 = vpop.f32.mrf.mxu0
        %v3308 = vadd.f32 0.0, %v3307
        %v3309 = vpop.f32.mrf.mxu0
        %3310 = vmatprep.mubr.bf16.mxu0 0
        %3311 = vmatmul.mubr.bf16.gmra.mxu0 %v3257
        %v3312 = vpop.f32.mrf.mxu0
        %v3313 = vadd.f32 0.0, %v3312
        %v3314 = vpop.f32.mrf.mxu0
        %v3315 = vpop.f32.mrf.mxu0
        %v3316 = vadd.f32 0.0, %v3315
        %v3317 = vpop.f32.mrf.mxu0
        %3318 = vmatprep.mubr.bf16.mxu0 0
        %3319 = vmatmul.mubr.bf16.gmra.mxu0 %v3260
        %v3320 = vpop.f32.mrf.mxu0
        %v3321 = vadd.f32 0.0, %v3320
        %v3322 = vpop.f32.mrf.mxu0
        %v3323 = vpop.f32.mrf.mxu0
        %v3324 = vadd.f32 0.0, %v3323
        %v3325 = vpop.f32.mrf.mxu0
        %3326 = vdwg.mxu0
        %3327 = vrot.lane.b32.xlu0 %v703, 32
        %v3328 = vpop.permute.xlu0 %3327
        %3329 = vrot.lane.b32.xlu0 %v704, 32
        %v3330 = vpop.permute.xlu0 %3329
        %3331 = vrot.lane.b32.xlu0 %v705, 32
        %v3332 = vpop.permute.xlu0 %3331
        %3333 = vrot.lane.b32.xlu0 %v706, 32
        %v3334 = vpop.permute.xlu0 %3333
        %v3340 = vsel %vm886, %v3234, 0
        %v3343 = vsel %vm886, %v3235, 0
        %v3346 = vsel %vm886, %v3236, 0
        %v3349 = vsel %vm886, %v3237, 0
        %3351 = vmatprep.subr.bf16.mxu0 0
        %3352 = vmatpush1.bf16.msra.mxu0 0
        %3353 = vmatprep.subr.bf16.mxu0 0
        %3354 = vmatpush1.bf16.msra.mxu0 0
        %3355 = vmatprep.subr.bf16.mxu0 0
        %3356 = vmatpush1.bf16.msra.mxu0 0
        %3357 = vmatprep.subr.bf16.mxu0 0
        %3358 = vmatpush1.bf16.msra.mxu0 0
        %3359 = vmatprep.subr.bf16.mxu0 0
        %3360 = vmatpush1.bf16.msra.mxu0 %v3334
        %3361 = vmatprep.subr.bf16.mxu0 0
        %3362 = vmatpush1.bf16.msra.mxu0 %v3332
        %3363 = vmatprep.subr.bf16.mxu0 0
        %3364 = vmatpush1.bf16.msra.mxu0 %v3330
        %3365 = vmatprep.subr.bf16.mxu0 0
        %3366 = vmatpush1.bf16.msra.mxu0 %v3328
        %3367 = vmatprep.subr.bf16.mxu0 0
        %3368 = vmatpush2.bf16.msra.mxu0 0
        %3369 = vmatprep.subr.bf16.mxu0 0
        %3370 = vmatpush2.bf16.msra.mxu0 0
        %3371 = vmatprep.subr.bf16.mxu0 0
        %3372 = vmatpush2.bf16.msra.mxu0 0
        %3373 = vmatprep.subr.bf16.mxu0 0
        %3374 = vmatpush2.bf16.msra.mxu0 0
        %3375 = vmatprep.subr.bf16.mxu0 0
        %3376 = vmatpush2.bf16.msra.mxu0 0
        %3377 = vmatprep.subr.bf16.mxu0 0
        %3378 = vmatpush2.bf16.msra.mxu0 0
        %3379 = vmatprep.subr.bf16.mxu0 0
        %3380 = vmatpush2.bf16.msra.mxu0 0
        %3381 = vmatprep.subr.bf16.mxu0 0
        %3382 = vmatpush2.bf16.msra.mxu0 0
        %3383 = vmatprep.mubr.bf16.mxu0 0
        %3384 = vmatmul.mubr.bf16.gmra.mxu0 %v3340
        %v3385 = vpop.f32.mrf.mxu0
        %v3386 = vadd.f32 0.0, %v3385
        %v3387 = vpop.f32.mrf.mxu0
        %v3388 = vpop.f32.mrf.mxu0
        %v3389 = vadd.f32 0.0, %v3388
        %v3390 = vpop.f32.mrf.mxu0
        %3391 = vmatprep.mubr.bf16.mxu0 0
        %3392 = vmatmul.mubr.bf16.gmra.mxu0 %v3343
        %v3393 = vpop.f32.mrf.mxu0
        %v3394 = vadd.f32 0.0, %v3393
        %v3395 = vpop.f32.mrf.mxu0
        %v3396 = vpop.f32.mrf.mxu0
        %v3397 = vadd.f32 0.0, %v3396
        %v3398 = vpop.f32.mrf.mxu0
        %3399 = vmatprep.mubr.bf16.mxu0 0
        %3400 = vmatmul.mubr.bf16.gmra.mxu0 %v3346
        %v3401 = vpop.f32.mrf.mxu0
        %v3402 = vadd.f32 0.0, %v3401
        %v3403 = vpop.f32.mrf.mxu0
        %v3404 = vpop.f32.mrf.mxu0
        %v3405 = vadd.f32 0.0, %v3404
        %v3406 = vpop.f32.mrf.mxu0
        %3407 = vmatprep.mubr.bf16.mxu0 0
        %3408 = vmatmul.mubr.bf16.gmra.mxu0 %v3349
        %v3409 = vpop.f32.mrf.mxu0
        %v3410 = vadd.f32 0.0, %v3409
        %v3411 = vpop.f32.mrf.mxu0
        %v3412 = vpop.f32.mrf.mxu0
        %v3413 = vadd.f32 0.0, %v3412
        %v3414 = vpop.f32.mrf.mxu0
        %3415 = vdwg.mxu0
        %v3416 = vpack.c.bf16 %v3300, %v3297
        %v3417 = vpack.c.bf16 %v3308, %v3305
        %v3418 = vpack.c.bf16 %v3316, %v3313
        %v3419 = vpack.c.bf16 %v3324, %v3321
        %v3420 = vpack.c.bf16 %v3389, %v3386
        %v3421 = vpack.c.bf16 %v3397, %v3394
        %v3422 = vpack.c.bf16 %v3405, %v3402
        %v3423 = vpack.c.bf16 %v3413, %v3410
        %v3424 = vld [vmem:[%s3 + $0x30] sm:$0xf]
        %v3425 = vld [vmem:[%s3 + $0x34] sm:$0xf]
        %v3426 = vld [vmem:[%s3 + $0x38] sm:$0xf]
        %v3427 = vld [vmem:[%s3 + $0x3c] sm:$0xf]
        %v3432 = vunpack.c.l.b16 %v3424
        %v3433 = vunpack.c.l.b16 %v3425
        %v3434 = vunpack.c.l.b16 %v3426
        %v3435 = vunpack.c.l.b16 %v3427
        %v3436 = vpack.c.b16 %v3433, %v3432
        %v3437 = vpack.c.b16 %v3435, %v3434
        %v3441 = vsel %vm707, %v3416, 0
        %v3444 = vsel %vm707, %v3417, 0
        %v3447 = vsel %vm707, %v3418, 0
        %v3450 = vsel %vm707, %v3419, 0
        %v3453 = vsel %vm707, %v3420, 0
        %v3456 = vsel %vm707, %v3421, 0
        %v3459 = vsel %vm707, %v3422, 0
        %v3462 = vsel %vm707, %v3423, 0
        %3464 = vmatprep.subr.bf16.mxu0 0
        %3465 = vmatpush1.bf16.msra.mxu0 0
        %3466 = vmatprep.subr.bf16.mxu0 0
        %3467 = vmatpush1.bf16.msra.mxu0 0
        %3468 = vmatprep.subr.bf16.mxu0 0
        %3469 = vmatpush1.bf16.msra.mxu0 0
        %3470 = vmatprep.subr.bf16.mxu0 0
        %3471 = vmatpush1.bf16.msra.mxu0 0
        %3472 = vmatprep.subr.bf16.mxu0 0
        %3473 = vmatpush1.bf16.msra.mxu0 0
        %3474 = vmatprep.subr.bf16.mxu0 0
        %3475 = vmatpush1.bf16.msra.mxu0 0
        %3476 = vmatprep.subr.bf16.mxu0 0
        %3477 = vmatpush1.bf16.msra.mxu0 %v3437
        %3478 = vmatprep.subr.bf16.mxu0 0
        %3479 = vmatpush1.bf16.msra.mxu0 %v3436
        %3480 = vmatprep.subr.bf16.mxu0 0
        %3481 = vmatpush2.bf16.msra.mxu0 0
        %3482 = vmatprep.subr.bf16.mxu0 0
        %3483 = vmatpush2.bf16.msra.mxu0 0
        %3484 = vmatprep.subr.bf16.mxu0 0
        %3485 = vmatpush2.bf16.msra.mxu0 0
        %3486 = vmatprep.subr.bf16.mxu0 0
        %3487 = vmatpush2.bf16.msra.mxu0 0
        %3488 = vmatprep.subr.bf16.mxu0 0
        %3489 = vmatpush2.bf16.msra.mxu0 0
        %3490 = vmatprep.subr.bf16.mxu0 0
        %3491 = vmatpush2.bf16.msra.mxu0 0
        %3492 = vmatprep.subr.bf16.mxu0 0
        %3493 = vmatpush2.bf16.msra.mxu0 0
        %3494 = vmatprep.subr.bf16.mxu0 0
        %3495 = vmatpush2.bf16.msra.mxu0 0
        %3496 = vmatprep.mubr.bf16.mxu0 0
        %3497 = vmatmul.mubr.bf16.gmra.mxu0 %v3441
        %v3498 = vpop.f32.mrf.mxu0
        %v3499 = vadd.f32 0.0, %v3498
        %v3500 = vpop.f32.mrf.mxu0
        %v3501 = vpop.f32.mrf.mxu0
        %v3502 = vadd.f32 0.0, %v3501
        %v3503 = vpop.f32.mrf.mxu0
        %3504 = vmatprep.mubr.bf16.mxu0 0
        %3505 = vmatmul.mubr.bf16.gmra.mxu0 %v3444
        %v3506 = vpop.f32.mrf.mxu0
        %v3507 = vadd.f32 0.0, %v3506
        %v3508 = vpop.f32.mrf.mxu0
        %v3509 = vpop.f32.mrf.mxu0
        %v3510 = vadd.f32 0.0, %v3509
        %v3511 = vpop.f32.mrf.mxu0
        %3512 = vmatprep.mubr.bf16.mxu0 0
        %3513 = vmatmul.mubr.bf16.gmra.mxu0 %v3447
        %v3514 = vpop.f32.mrf.mxu0
        %v3515 = vadd.f32 0.0, %v3514
        %v3516 = vpop.f32.mrf.mxu0
        %v3517 = vpop.f32.mrf.mxu0
        %v3518 = vadd.f32 0.0, %v3517
        %v3519 = vpop.f32.mrf.mxu0
        %3520 = vmatprep.mubr.bf16.mxu0 0
        %3521 = vmatmul.mubr.bf16.gmra.mxu0 %v3450
        %v3522 = vpop.f32.mrf.mxu0
        %v3523 = vadd.f32 0.0, %v3522
        %v3524 = vpop.f32.mrf.mxu0
        %v3525 = vpop.f32.mrf.mxu0
        %v3526 = vadd.f32 0.0, %v3525
        %v3527 = vpop.f32.mrf.mxu0
        %3528 = vmatprep.mubr.bf16.mxu0 0
        %3529 = vmatmul.mubr.bf16.gmra.mxu0 %v3453
        %v3530 = vpop.f32.mrf.mxu0
        %v3531 = vadd.f32 0.0, %v3530
        %v3532 = vpop.f32.mrf.mxu0
        %v3533 = vpop.f32.mrf.mxu0
        %v3534 = vadd.f32 0.0, %v3533
        %v3535 = vpop.f32.mrf.mxu0
        %3536 = vmatprep.mubr.bf16.mxu0 0
        %3537 = vmatmul.mubr.bf16.gmra.mxu0 %v3456
        %v3538 = vpop.f32.mrf.mxu0
        %v3539 = vadd.f32 0.0, %v3538
        %v3540 = vpop.f32.mrf.mxu0
        %v3541 = vpop.f32.mrf.mxu0
        %v3542 = vadd.f32 0.0, %v3541
        %v3543 = vpop.f32.mrf.mxu0
        %3544 = vmatprep.mubr.bf16.mxu0 0
        %3545 = vmatmul.mubr.bf16.gmra.mxu0 %v3459
        %v3546 = vpop.f32.mrf.mxu0
        %v3547 = vadd.f32 0.0, %v3546
        %v3548 = vpop.f32.mrf.mxu0
        %v3549 = vpop.f32.mrf.mxu0
        %v3550 = vadd.f32 0.0, %v3549
        %v3551 = vpop.f32.mrf.mxu0
        %3552 = vmatprep.mubr.bf16.mxu0 0
        %3553 = vmatmul.mubr.bf16.gmra.mxu0 %v3462
        %v3554 = vpop.f32.mrf.mxu0
        %v3555 = vadd.f32 0.0, %v3554
        %v3556 = vpop.f32.mrf.mxu0
        %v3557 = vpop.f32.mrf.mxu0
        %v3558 = vadd.f32 0.0, %v3557
        %v3559 = vpop.f32.mrf.mxu0
        %3560 = vdwg.mxu0
        %v3561 = vadd.f32 %v2828, %v3499
        %v3562 = vadd.f32 %v2829, %v3502
        %v3563 = vadd.f32 %v2830, %v3507
        %v3564 = vadd.f32 %v2831, %v3510
        %v3565 = vadd.f32 %v2832, %v3515
        %v3566 = vadd.f32 %v2833, %v3518
        %v3567 = vadd.f32 %v2834, %v3523
        %v3568 = vadd.f32 %v2835, %v3526
        %v3569 = vadd.f32 %v2836, %v3531
        %v3570 = vadd.f32 %v2837, %v3534
        %v3571 = vadd.f32 %v2838, %v3539
        %v3572 = vadd.f32 %v2839, %v3542
        %v3573 = vadd.f32 %v2840, %v3547
        %v3574 = vadd.f32 %v2841, %v3550
        %v3575 = vadd.f32 %v2842, %v3555
        %v3576 = vadd.f32 %v2843, %v3558
        %v3577 = vld [vmem:[%s4] sm:$0x1]
        %v3579 = vlaneseq
        %v3580 = vshrl.u32 %v3579, 7
        %v3581 = vsub.s32 0, %v3580
        %v3582 = vrot.slane %v3577, %v3581
        %v3584 = vadd.f32 %v3561, %v3582
        %v3585 = vadd.f32 %v3562, %v3582
        %v3586 = vadd.f32 %v3563, %v3582
        %v3587 = vadd.f32 %v3564, %v3582
        %v3588 = vadd.f32 %v3565, %v3582
        %v3589 = vadd.f32 %v3566, %v3582
        %v3590 = vadd.f32 %v3567, %v3582
        %v3591 = vadd.f32 %v3568, %v3582
        %v3592 = vadd.f32 %v3569, %v3582
        %v3593 = vadd.f32 %v3570, %v3582
        %v3594 = vadd.f32 %v3571, %v3582
        %v3595 = vadd.f32 %v3572, %v3582
        %v3596 = vadd.f32 %v3573, %v3582
        %v3597 = vadd.f32 %v3574, %v3582
        %v3598 = vadd.f32 %v3575, %v3582
        %v3599 = vadd.f32 %v3576, %v3582
        %3600 = vst [vmem:[%s221] sm:$0xff] %v3584
        %3601 = vst [vmem:[%s221 + $0x8] sm:$0xff] %v3585
        %3602 = vst [vmem:[%s221 + $0x10] sm:$0xff] %v3586
        %3603 = vst [vmem:[%s221 + $0x18] sm:$0xff] %v3587
        %3604 = vst [vmem:[%s221 + $0x20] sm:$0xff] %v3588
        %3605 = vst [vmem:[%s221 + $0x28] sm:$0xff] %v3589
        %3606 = vst [vmem:[%s221 + $0x30] sm:$0xff] %v3590
        %3607 = vst [vmem:[%s221 + $0x38] sm:$0xff] %v3591
        %3608 = vst [vmem:[%s221 + $0x40] sm:$0xff] %v3592
        %3609 = vst [vmem:[%s221 + $0x48] sm:$0xff] %v3593
        %3610 = vst [vmem:[%s221 + $0x50] sm:$0xff] %v3594
        %3611 = vst [vmem:[%s221 + $0x58] sm:$0xff] %v3595
        %3612 = vst [vmem:[%s221 + $0x60] sm:$0xff] %v3596
        %3613 = vst [vmem:[%s221 + $0x68] sm:$0xff] %v3597
        %3614 = vst [vmem:[%s221 + $0x70] sm:$0xff] %v3598
        %3615 = vst [vmem:[%s221 + $0x78] sm:$0xff] %v3599
        %s3616 = sand.u32 %s138, 1
        %s3617 = scalar_lea.sflag [#allocation4], %s3616
        %s3618 = sand.u32 %s138, 1
        %s3619 = smul.addr %s3618, 128
        %s3620 = scalar_lea.vmem [#allocation3], %s3619
        // Predicated region
        $region41: #{window_attention.1} parent=39 // pred_check
          %p3621 = pneg %p148
        $region42: #{window_attention.1} parent=39 // pred_check_branch
          %3623 = sbr.rel (%p3621) target = $region44
        $region43: #{window_attention.1} parent=39 // pred_region
          %s3624 = smul.u32 2, %s20
          %s3626 = ssub.s32 2048, 2048
          %3627 = vsyncadd %s3617, %s3626
          %s3628 = smul.addr %s3624, 8
          %s3629 = smul.addr %s3628, 128
          %s3630 = scalar_lea.hbm %s5, %s3629
          %s3631 = sshll.u32 %s3620, 4
          %s3632 = int_to_ptr.vmem [resolvable:$true] %s3631
          %3637 = dma.vmem_to_hbm [thread:$0]  %s3632, 2048, %s3630, %s3617, 128, 128, 8
        $region44: #{window_attention.1} parent=39 // pred_fallthru
          _
      $region40: #{window_attention.1} parent=5 // pred_fallthru
        _
      %p3638 = scmp.le.s32.totalorder 2, %s15
      // Predicated region
      $region45: #{window_attention.1} parent=5 // pred_check
        %p3639 = pneg %p3638
      $region46: #{window_attention.1} parent=5 // pred_check_branch
        %3641 = sbr.rel (%p3639) target = $region48
      $region47: #{window_attention.1} parent=5 // pred_region
        %s3642 = ssub.s32 %s15, 2
        // Predicated region
        $region49: #{window_attention.1} parent=47 // pred_check
          %p3643 = pneg %p154
        $region50: #{window_attention.1} parent=47 // pred_check_branch
          %3645 = sbr.rel (%p3643) target = $region52
        $region51: #{window_attention.1} parent=47 // pred_region
          %s3646 = sand.u32 %s139, 1
          %s3647 = scalar_lea.sflag [#allocation4], %s3646
          %s3648 = sand.u32 %s139, 1
          %s3649 = smul.addr %s3648, 128
          %s3650 = scalar_lea.vmem [#allocation3], %s3649
          %3651 = dma.done %s3647, 2048
        $region52: #{window_attention.1} parent=47 // pred_fallthru
          _
      $region48: #{window_attention.1} parent=5 // pred_fallthru
        _
    $region6: #{window_attention.1} parent=1 // loop_footer
      %s19 = sadd.s32 1, %s15
    $region7: #{window_attention.1} parent=1 // loop_footer_branch
      %14 = sbr.rel target = $region3
    $region8: #{window_attention.1} parent=1 // loop_exit
      _
    %3652 = vsyncpa [#allocation4], 1
    %s3653 = scalar_lea.sflag [#allocation4], 1
    %3654 = vsyncpa %s3653, 1

</llo_original>
